<compile_context>
chip_gen: v7x
topology: tpu7x:2x2x1
jax: 0.10.0
libtpu: 0.0.40
codegen_flags: <defaults>
</compile_context>

<pallas_src>
import functools

import jax
import jax.numpy as jnp
from jax.experimental import pallas as pl
from jax.experimental.pallas import tpu as pltpu


# ----------------------------------------------------------------------------
# Pallas kernel: fused (conv + bias [+ instance-norm + lrelu]) * sigmoid(mask)
# ----------------------------------------------------------------------------
def _gated_conv2d_kernel(x_ref, wc_ref, wm_ref, bc_ref, bm_ref, o_ref,
                         *, ksize, eps, neg_slope, gated):
    # x_ref : (1, Ho+K-1, Wo+K-1, Cin)   padded input, one batch element
    # wc_ref: (K, K*Cin, TC)             conv weights   (ky, kx*Cin, Cout-tile)
    # wm_ref: (K, K*Cin, TC)             mask weights
    # bc_ref: (1, TC)                    conv bias      (f32)
    # bm_ref: (1, TC)                    mask bias      (f32)
    # o_ref : (1, Ho, Wo, TC)
    Ho, Wo, TC = o_ref.shape[1], o_ref.shape[2], o_ref.shape[3]
    Cin = x_ref.shape[3]
    KC = ksize * Cin

    x = x_ref[0]                                   # (Hp, Wp, Cin)

    # dx-hoist: do the K sublane-misaligned W shifts once, fold them into the
    # contraction axis (K = ksize * Cin) so the MXU sees fewer, fatter matmuls.
    slabs = [x[:, dx:dx + Wo, :] for dx in range(ksize)]
    big = slabs[0] if ksize == 1 else jnp.concatenate(slabs, axis=-1)  # (Hp, Wo, KC)

    conv_acc = jnp.zeros((Ho * Wo, TC), jnp.float32)
    mask_acc = jnp.zeros((Ho * Wo, TC), jnp.float32) if gated else None

    for dy in range(ksize):
        # Slice along the major H axis (free) and merge (Ho, Wo) -> Ho*Wo.
        # The merge is layout-free when Wo % 8 == 0 (true for the shapes here).
        patch = big[dy:dy + Ho].reshape(Ho * Wo, KC)
        conv_acc += jnp.dot(patch, wc_ref[dy],
                            preferred_element_type=jnp.float32)
        if gated:
            mask_acc += jnp.dot(patch, wm_ref[dy],
                                preferred_element_type=jnp.float32)

    conv_acc = conv_acc + bc_ref[...]              # (1, TC) broadcast over rows

    if gated:
        mask_acc = mask_acc + bm_ref[...]
        # InstanceNorm2d (affine=False): per-(n, c) stats over all H*W pixels.
        mean = jnp.mean(conv_acc, axis=0, keepdims=True)
        cen = conv_acc - mean
        var = jnp.mean(cen * cen, axis=0, keepdims=True)
        conv_n = cen * jax.lax.rsqrt(var + eps)
        # LeakyReLU(0.2)
        conv_n = jnp.maximum(conv_n, neg_slope * conv_n)
        # Sigmoid gate (EUP) and fused multiply.
        out = conv_n * jax.nn.sigmoid(mask_acc)
    else:
        out = conv_acc                             # out_channels == 3 bypass

    o_ref[0] = out.reshape(Ho, Wo, TC).astype(o_ref.dtype)


# ----------------------------------------------------------------------------
# Wrapper: NCHW in / NCHW out, matching the PyTorch module
# ----------------------------------------------------------------------------
def gated_conv2d(x_nchw, wc, bc, wm, bm, *, padding=1, pad_type='reflect',
                 eps=1e-5, neg_slope=0.2, compute_dtype=jnp.float32,
                 cout_tile=128):
    """x_nchw: (N, Cin, H, W); wc/wm: (K, K, Cin, Cout) HWIO; bc/bm: (Cout,)."""
    K, _, Cin, Cout = wc.shape
    N, C, H, W = x_nchw.shape
    assert C == Cin
    gated = (Cout != 3)          # module returns the raw conv when Cout == 3

    # NCHW -> NHWC and padding (reflect by default, like ReflectionPad2d).
    mode = {'reflect': 'reflect', 'replicate': 'edge', 'zero': 'constant'}[pad_type]
    x = jnp.transpose(x_nchw, (0, 2, 3, 1))
    xp = jnp.pad(x, ((0, 0), (padding, padding), (padding, padding), (0, 0)),
                 mode=mode)
    Hp, Wp = H + 2 * padding, W + 2 * padding
    Ho, Wo = Hp - (K - 1), Wp - (K - 1)

    # bf16 MXU fast path (optional): cast activations + weights, keep f32 acc.
    xp = xp.astype(compute_dtype)
    wc2 = wc.reshape(K, K * Cin, Cout).astype(compute_dtype)   # (ky, kx*Cin, Cout)
    wm2 = wm.reshape(K, K * Cin, Cout).astype(compute_dtype)
    bc2 = bc.reshape(1, Cout).astype(jnp.float32)
    bm2 = bm.reshape(1, Cout).astype(jnp.float32)

    # Tile Cout to 128 lanes when it divides evenly (bounds vreg/VMEM pressure
    # and adds a second parallel grid axis); otherwise take the full Cout.
    TC = cout_tile if (Cout % cout_tile == 0) else Cout
    grid = (N, Cout // TC)

    kernel = functools.partial(_gated_conv2d_kernel, ksize=K, eps=eps,
                               neg_slope=neg_slope, gated=gated)

    out_nhwc = pl.pallas_call(
        kernel,
        out_shape=jax.ShapeDtypeStruct((N, Ho, Wo, Cout), x_nchw.dtype),
        grid=grid,
        in_specs=[
            pl.BlockSpec((1, Hp, Wp, Cin), lambda n, j: (n, 0, 0, 0)),
            pl.BlockSpec((K, K * Cin, TC), lambda n, j: (0, 0, j)),
            pl.BlockSpec((K, K * Cin, TC), lambda n, j: (0, 0, j)),
            pl.BlockSpec((1, TC), lambda n, j: (0, j)),
            pl.BlockSpec((1, TC), lambda n, j: (0, j)),
        ],
        out_specs=pl.BlockSpec((1, Ho, Wo, TC), lambda n, j: (n, 0, 0, j)),
        compiler_params=pltpu.CompilerParams(
            dimension_semantics=("parallel", "parallel")),
    )(xp, wc2, wm2, bc2, bm2)

    return jnp.transpose(out_nhwc, (0, 3, 1, 2))    # NHWC -> NCHW


# ----------------------------------------------------------------------------
# Pure-JAX references (for correctness checks only)
# ----------------------------------------------------------------------------
def _ref_conv_nhwc(x_nchw, w, b, padding, mode='reflect'):
    x = jnp.transpose(x_nchw, (0, 2, 3, 1))
    xp = jnp.pad(x, ((0, 0), (padding, padding), (padding, padding), (0, 0)),
                 mode=mode)
    y = jax.lax.conv_general_dilated(
        xp, w, (1, 1), "VALID",
        dimension_numbers=("NHWC", "HWIO", "NHWC"),
        precision=jax.lax.Precision.HIGHEST)
    return y + b


def ref_gated_conv2d(x, wc, bc, wm, bm, *, padding, eps=1e-5, slope=0.2):
    conv = _ref_conv_nhwc(x, wc, bc, padding)
    mask = _ref_conv_nhwc(x, wm, bm, padding)
    mean = jnp.mean(conv, axis=(1, 2), keepdims=True)
    var = jnp.mean((conv - mean) ** 2, axis=(1, 2), keepdims=True)
    conv = (conv - mean) * jax.lax.rsqrt(var + eps)
    conv = jnp.maximum(conv, slope * conv)
    out = conv * jax.nn.sigmoid(mask)
    return jnp.transpose(out, (0, 3, 1, 2))


def ref_conv_only(x, w, b, *, padding):
    return jnp.transpose(_ref_conv_nhwc(x, w, b, padding), (0, 3, 1, 2))


# ----------------------------------------------------------------------------
if __name__ == "__main__":
    key = jax.random.PRNGKey(0)
    kx, kwc, kbc, kwm, kbm, kw3, kb3 = jax.random.split(key, 7)

    N, Cin, H, W = 2, 4, 16, 16
    Cout, K, P = 32, 3, 1

    x = jax.random.normal(kx, (N, Cin, H, W), jnp.float32)
    std = (2.0 / (K * K * Cin)) ** 0.5
    wc = std * jax.random.normal(kwc, (K, K, Cin, Cout), jnp.float32)
    bc = 0.1 * jax.random.normal(kbc, (Cout,), jnp.float32)
    wm = std * jax.random.normal(kwm, (K, K, Cin, Cout), jnp.float32)
    bm = 0.1 * jax.random.normal(kbm, (Cout,), jnp.float32)

    # --- default config: reflect pad + conv + instance-norm + lrelu, gated ---
    fwd = jax.jit(functools.partial(gated_conv2d, padding=P))
    out = jax.block_until_ready(fwd(x, wc, bc, wm, bm))
    assert out.shape == (N, Cout, H, W) and out.dtype == jnp.float32

    ref = ref_gated_conv2d(x, wc, bc, wm, bm, padding=P)
    err = float(jnp.max(jnp.abs(out - ref)))
    assert err < 5e-3, f"f32 gated conv mismatch vs reference: {err}"

    # --- bf16 MXU fast path (f32 accumulator, f32 output) ---
    fwd_bf = jax.jit(functools.partial(gated_conv2d, padding=P,
                                       compute_dtype=jnp.bfloat16))
    out_bf = jax.block_until_ready(fwd_bf(x, wc, bc, wm, bm))
    rnd = lambda a: a.astype(jnp.bfloat16).astype(jnp.float32)
    ref_bf = ref_gated_conv2d(rnd(x), rnd(wc), bc, rnd(wm), bm, padding=P)
    err_bf = float(jnp.max(jnp.abs(out_bf - ref_bf)))
    assert err_bf < 5e-3, f"bf16 gated conv mismatch vs reference: {err_bf}"

    # --- out_channels == 3 path: module returns the raw conv + bias ---
    w3 = std * jax.random.normal(kw3, (K, K, Cin, 3), jnp.float32)
    b3 = 0.1 * jax.random.normal(kb3, (3,), jnp.float32)
    out3 = jax.block_until_ready(
        jax.jit(functools.partial(gated_conv2d, padding=P))(x, w3, b3, w3, b3))
    ref3 = ref_conv_only(x, w3, b3, padding=P)
    err3 = float(jnp.max(jnp.abs(out3 - ref3)))
    assert out3.shape == (N, 3, H, W)
    assert err3 < 5e-3, f"out_channels==3 bypass mismatch vs reference: {err3}"

    print("KERNEL_OK")
</pallas_src>

<mosaic_0001>
module attributes {stable_mosaic.version = 11 : i64} {
  func.func @_gated_conv2d_kernel(%arg0: i32, %arg1: i32, %arg2: memref<1x18x18x4xf32, #tpu.memory_space<vmem>>, %arg3: memref<3x12x32xf32, #tpu.memory_space<vmem>>, %arg4: memref<3x12x32xf32, #tpu.memory_space<vmem>>, %arg5: memref<1x32xf32, #tpu.memory_space<vmem>>, %arg6: memref<1x32xf32, #tpu.memory_space<vmem>>, %arg7: memref<1x16x16x32xf32, #tpu.memory_space<vmem>>) attributes {dimension_semantics = [#tpu.dimension_semantics<parallel>, #tpu.dimension_semantics<parallel>], iteration_bounds = array<i64: 2, 1>, scalar_prefetch = 0 : i64, scratch_operands = 0 : i64, tpu.core_type = #tpu.core_type<tc>, window_params = [{transform_indices = @transform_0, window_bounds = array<i64: 1, 18, 18, 4>}, {transform_indices = @transform_1, window_bounds = array<i64: 3, 12, 32>}, {transform_indices = @transform_2, window_bounds = array<i64: 3, 12, 32>}, {transform_indices = @transform_3, window_bounds = array<i64: 1, 32>}, {transform_indices = @transform_4, window_bounds = array<i64: 1, 32>}, {transform_indices = @transform_5, window_bounds = array<i64: 1, 16, 16, 32>}]} {
    %c0 = arith.constant 0 : index
    %c0_0 = arith.constant 0 : index
    %c0_1 = arith.constant 0 : index
    %c0_2 = arith.constant 0 : index
    %0 = vector.load %arg2[%c0, %c0_0, %c0_1, %c0_2] : memref<1x18x18x4xf32, #tpu.memory_space<vmem>>, vector<1x18x18x4xf32>
    %1 = vector.shape_cast %0 : vector<1x18x18x4xf32> to vector<18x18x4xf32>
    %2 = vector.extract_strided_slice %1 {offsets = [0, 0, 0], sizes = [18, 16, 4], strides = [1, 1, 1]} : vector<18x18x4xf32> to vector<18x16x4xf32>
    %3 = vector.extract_strided_slice %1 {offsets = [0, 1, 0], sizes = [18, 16, 4], strides = [1, 1, 1]} : vector<18x18x4xf32> to vector<18x16x4xf32>
    %4 = vector.extract_strided_slice %1 {offsets = [0, 2, 0], sizes = [18, 16, 4], strides = [1, 1, 1]} : vector<18x18x4xf32> to vector<18x16x4xf32>
    %5 = tpu.concatenate %2, %3, %4 in 2 : vector<18x16x4xf32>, vector<18x16x4xf32>, vector<18x16x4xf32> -> vector<18x16x12xf32>
    %cst = arith.constant 0.000000e+00 : f32
    %6 = vector.broadcast %cst : f32 to vector<256x32xf32>
    %cst_3 = arith.constant 0.000000e+00 : f32
    %7 = vector.broadcast %cst_3 : f32 to vector<256x32xf32>
    %8 = vector.extract_strided_slice %5 {offsets = [0, 0, 0], sizes = [16, 16, 12], strides = [1, 1, 1]} : vector<18x16x12xf32> to vector<16x16x12xf32>
    %9 = vector.shape_cast %8 : vector<16x16x12xf32> to vector<256x12xf32>
    %c0_4 = arith.constant 0 : index
    %c0_5 = arith.constant 0 : index
    %c0_6 = arith.constant 0 : index
    %10 = vector.load %arg3[%c0_4, %c0_5, %c0_6] : memref<3x12x32xf32, #tpu.memory_space<vmem>>, vector<1x12x32xf32>
    %11 = vector.shape_cast %10 : vector<1x12x32xf32> to vector<12x32xf32>
    %cst_7 = arith.constant dense<0.000000e+00> : vector<256x32xf32>
    %12 = tpu.matmul %9, %11, %cst_7 {dimension_numbers = #tpu.dot_dimension_numbers<[1], [0], [0], [1], [0, 0, 1, 1], [], []>} : vector<256x12xf32>, vector<12x32xf32>, vector<256x32xf32> -> vector<256x32xf32>
    %13 = arith.addf %6, %12 : vector<256x32xf32>
    %c0_8 = arith.constant 0 : index
    %c0_9 = arith.constant 0 : index
    %c0_10 = arith.constant 0 : index
    %14 = vector.load %arg4[%c0_8, %c0_9, %c0_10] : memref<3x12x32xf32, #tpu.memory_space<vmem>>, vector<1x12x32xf32>
    %15 = vector.shape_cast %14 : vector<1x12x32xf32> to vector<12x32xf32>
    %cst_11 = arith.constant dense<0.000000e+00> : vector<256x32xf32>
    %16 = tpu.matmul %9, %15, %cst_11 {dimension_numbers = #tpu.dot_dimension_numbers<[1], [0], [0], [1], [0, 0, 1, 1], [], []>} : vector<256x12xf32>, vector<12x32xf32>, vector<256x32xf32> -> vector<256x32xf32>
    %17 = arith.addf %7, %16 : vector<256x32xf32>
    %18 = vector.extract_strided_slice %5 {offsets = [1, 0, 0], sizes = [16, 16, 12], strides = [1, 1, 1]} : vector<18x16x12xf32> to vector<16x16x12xf32>
    %19 = vector.shape_cast %18 : vector<16x16x12xf32> to vector<256x12xf32>
    %c1 = arith.constant 1 : index
    %c0_12 = arith.constant 0 : index
    %c0_13 = arith.constant 0 : index
    %20 = vector.load %arg3[%c1, %c0_12, %c0_13] : memref<3x12x32xf32, #tpu.memory_space<vmem>>, vector<1x12x32xf32>
    %21 = vector.shape_cast %20 : vector<1x12x32xf32> to vector<12x32xf32>
    %cst_14 = arith.constant dense<0.000000e+00> : vector<256x32xf32>
    %22 = tpu.matmul %19, %21, %cst_14 {dimension_numbers = #tpu.dot_dimension_numbers<[1], [0], [0], [1], [0, 0, 1, 1], [], []>} : vector<256x12xf32>, vector<12x32xf32>, vector<256x32xf32> -> vector<256x32xf32>
    %23 = arith.addf %13, %22 : vector<256x32xf32>
    %c1_15 = arith.constant 1 : index
    %c0_16 = arith.constant 0 : index
    %c0_17 = arith.constant 0 : index
    %24 = vector.load %arg4[%c1_15, %c0_16, %c0_17] : memref<3x12x32xf32, #tpu.memory_space<vmem>>, vector<1x12x32xf32>
    %25 = vector.shape_cast %24 : vector<1x12x32xf32> to vector<12x32xf32>
    %cst_18 = arith.constant dense<0.000000e+00> : vector<256x32xf32>
    %26 = tpu.matmul %19, %25, %cst_18 {dimension_numbers = #tpu.dot_dimension_numbers<[1], [0], [0], [1], [0, 0, 1, 1], [], []>} : vector<256x12xf32>, vector<12x32xf32>, vector<256x32xf32> -> vector<256x32xf32>
    %27 = arith.addf %17, %26 : vector<256x32xf32>
    %28 = vector.extract_strided_slice %5 {offsets = [2, 0, 0], sizes = [16, 16, 12], strides = [1, 1, 1]} : vector<18x16x12xf32> to vector<16x16x12xf32>
    %29 = vector.shape_cast %28 : vector<16x16x12xf32> to vector<256x12xf32>
    %c2 = arith.constant 2 : index
    %c0_19 = arith.constant 0 : index
    %c0_20 = arith.constant 0 : index
    %30 = vector.load %arg3[%c2, %c0_19, %c0_20] : memref<3x12x32xf32, #tpu.memory_space<vmem>>, vector<1x12x32xf32>
    %31 = vector.shape_cast %30 : vector<1x12x32xf32> to vector<12x32xf32>
    %cst_21 = arith.constant dense<0.000000e+00> : vector<256x32xf32>
    %32 = tpu.matmul %29, %31, %cst_21 {dimension_numbers = #tpu.dot_dimension_numbers<[1], [0], [0], [1], [0, 0, 1, 1], [], []>} : vector<256x12xf32>, vector<12x32xf32>, vector<256x32xf32> -> vector<256x32xf32>
    %33 = arith.addf %23, %32 : vector<256x32xf32>
    %c2_22 = arith.constant 2 : index
    %c0_23 = arith.constant 0 : index
    %c0_24 = arith.constant 0 : index
    %34 = vector.load %arg4[%c2_22, %c0_23, %c0_24] : memref<3x12x32xf32, #tpu.memory_space<vmem>>, vector<1x12x32xf32>
    %35 = vector.shape_cast %34 : vector<1x12x32xf32> to vector<12x32xf32>
    %cst_25 = arith.constant dense<0.000000e+00> : vector<256x32xf32>
    %36 = tpu.matmul %29, %35, %cst_25 {dimension_numbers = #tpu.dot_dimension_numbers<[1], [0], [0], [1], [0, 0, 1, 1], [], []>} : vector<256x12xf32>, vector<12x32xf32>, vector<256x32xf32> -> vector<256x32xf32>
    %37 = arith.addf %27, %36 : vector<256x32xf32>
    %c0_26 = arith.constant 0 : index
    %c0_27 = arith.constant 0 : index
    %38 = vector.load %arg5[%c0_26, %c0_27] : memref<1x32xf32, #tpu.memory_space<vmem>>, vector<1x32xf32>
    %39 = vector.broadcast %38 : vector<1x32xf32> to vector<256x32xf32>
    %40 = arith.addf %33, %39 : vector<256x32xf32>
    %c0_28 = arith.constant 0 : index
    %c0_29 = arith.constant 0 : index
    %41 = vector.load %arg6[%c0_28, %c0_29] : memref<1x32xf32, #tpu.memory_space<vmem>>, vector<1x32xf32>
    %42 = vector.broadcast %41 : vector<1x32xf32> to vector<256x32xf32>
    %43 = arith.addf %37, %42 : vector<256x32xf32>
    %cst_30 = arith.constant dense<0.000000e+00> : vector<32xf32>
    %44 = vector.multi_reduction <add>, %40, %cst_30 [0] : vector<256x32xf32> to vector<32xf32>
    %45 = vector.shape_cast %44 : vector<32xf32> to vector<1x32xf32>
    %cst_31 = arith.constant 2.560000e+02 : f32
    %46 = vector.broadcast %cst_31 : f32 to vector<1x32xf32>
    %47 = arith.divf %45, %46 : vector<1x32xf32>
    %48 = vector.broadcast %47 : vector<1x32xf32> to vector<256x32xf32>
    %49 = arith.subf %40, %48 : vector<256x32xf32>
    %50 = arith.mulf %49, %49 : vector<256x32xf32>
    %cst_32 = arith.constant dense<0.000000e+00> : vector<32xf32>
    %51 = vector.multi_reduction <add>, %50, %cst_32 [0] : vector<256x32xf32> to vector<32xf32>
    %52 = vector.shape_cast %51 : vector<32xf32> to vector<1x32xf32>
    %cst_33 = arith.constant 2.560000e+02 : f32
    %53 = vector.broadcast %cst_33 : f32 to vector<1x32xf32>
    %54 = arith.divf %52, %53 : vector<1x32xf32>
    %cst_34 = arith.constant 9.99999974E-6 : f32
    %55 = vector.broadcast %cst_34 : f32 to vector<1x32xf32>
    %56 = arith.addf %54, %55 : vector<1x32xf32>
    %57 = math.rsqrt %56 : vector<1x32xf32>
    %58 = vector.broadcast %57 : vector<1x32xf32> to vector<256x32xf32>
    %59 = arith.mulf %49, %58 : vector<256x32xf32>
    %cst_35 = arith.constant 2.000000e-01 : f32
    %60 = vector.broadcast %cst_35 : f32 to vector<256x32xf32>
    %61 = arith.mulf %60, %59 : vector<256x32xf32>
    %62 = arith.maximumf %59, %61 : vector<256x32xf32>
    %63 = arith.negf %43 : vector<256x32xf32>
    %64 = math.exp %63 : vector<256x32xf32>
    %cst_36 = arith.constant 1.000000e+00 : f32
    %65 = vector.broadcast %cst_36 : f32 to vector<256x32xf32>
    %66 = arith.addf %65, %64 : vector<256x32xf32>
    %67 = arith.divf %65, %66 : vector<256x32xf32>
    %68 = arith.mulf %62, %67 : vector<256x32xf32>
    %69 = vector.shape_cast %68 : vector<256x32xf32> to vector<16x16x32xf32>
    %c0_37 = arith.constant 0 : index
    %c0_38 = arith.constant 0 : index
    %c0_39 = arith.constant 0 : index
    %c0_40 = arith.constant 0 : index
    %70 = vector.load %arg7[%c0_37, %c0_38, %c0_39, %c0_40] : memref<1x16x16x32xf32, #tpu.memory_space<vmem>>, vector<1x16x16x32xf32>
    %71 = vector.shape_cast %70 : vector<1x16x16x32xf32> to vector<16x16x32xf32>
    %72 = vector.shape_cast %69 : vector<16x16x32xf32> to vector<1x16x16x32xf32>
    tpu.vector_store %arg7[%c0_37, %c0_38, %c0_39, %c0_40], %72 {strides = array<i32>} : memref<1x16x16x32xf32, #tpu.memory_space<vmem>>, vector<1x16x16x32xf32>,
    return
  }
  func.func @transform_0(%arg0: i32, %arg1: i32) -> (i32, i32, i32, i32) {
    %c0_i32 = arith.constant 0 : i32
    %c0_i32_0 = arith.constant 0 : i32
    %c0_i32_1 = arith.constant 0 : i32
    %c0_i32_2 = arith.constant 0 : i32
    return %arg0, %c0_i32, %c0_i32_0, %c0_i32_1 : i32, i32, i32, i32
  }
  func.func @transform_1(%arg0: i32, %arg1: i32) -> (i32, i32, i32) {
    %c0_i32 = arith.constant 0 : i32
    %c0_i32_0 = arith.constant 0 : i32
    %c0_i32_1 = arith.constant 0 : i32
    return %c0_i32, %c0_i32_0, %arg1 : i32, i32, i32
  }
  func.func @transform_2(%arg0: i32, %arg1: i32) -> (i32, i32, i32) {
    %c0_i32 = arith.constant 0 : i32
    %c0_i32_0 = arith.constant 0 : i32
    %c0_i32_1 = arith.constant 0 : i32
    return %c0_i32, %c0_i32_0, %arg1 : i32, i32, i32
  }
  func.func @transform_3(%arg0: i32, %arg1: i32) -> (i32, i32) {
    %c0_i32 = arith.constant 0 : i32
    %c0_i32_0 = arith.constant 0 : i32
    return %c0_i32, %arg1 : i32, i32
  }
  func.func @transform_4(%arg0: i32, %arg1: i32) -> (i32, i32) {
    %c0_i32 = arith.constant 0 : i32
    %c0_i32_0 = arith.constant 0 : i32
    return %c0_i32, %arg1 : i32, i32
  }
  func.func @transform_5(%arg0: i32, %arg1: i32) -> (i32, i32, i32, i32) {
    %c0_i32 = arith.constant 0 : i32
    %c0_i32_0 = arith.constant 0 : i32
    %c0_i32_1 = arith.constant 0 : i32
    return %arg0, %c0_i32, %c0_i32_0, %arg1 : i32, i32, i32, i32
  }
}

</mosaic_0001>

<llo_original>
// kernel: gated_conv2d.1
$region0: #{gated_conv2d.1}
  #allocation0 [shape = 'u32[]', space=smem, size = 0x4, offset = 0x4, fixed_abs, tag = 'smem constant byte address 0x4 - core index']
  #allocation1 [shape = 'u32[144,128]{1,0:T(1,128)}', space=vmem, size = 0x12000, scoped, tag = 'internal scratch']
  %s0 = inlined_call_operand.vmem [shape: f32[2,18,18,4], index: 0, kind: input, shape index: {}]
  %s1 = inlined_call_operand.vmem [shape: f32[3,12,32], index: 1, kind: input, shape index: {}]
  %s2 = inlined_call_operand.vmem [shape: f32[3,12,32], index: 2, kind: input, shape index: {}]
  %s3 = inlined_call_operand.vmem [shape: f32[1,32], index: 3, kind: input, shape index: {}]
  %s4 = inlined_call_operand.vmem [shape: f32[1,32], index: 4, kind: input, shape index: {}]
  %s5 = inlined_call_operand.hbm [shape: f32[2,16,16,32], index: 5, kind: output, shape index: {}]
  %s6 = sld [smem:[#allocation0]]
  $region53: #{gated_conv2d.1} parent=0
    _
  %s8 = ssub.s32 1, %s6
  %s9 = scalar_select 0, %s8, %s6
  $region1: #{gated_conv2d.1} parent=0
    #allocation2 [shape = 'u8[262144]{0}', space=vmem, size = 0x40000, scoped, tag = 'output window, operand 0']
    #allocation3 [shape = 's32[2]{0}', space=sflag, size = 0x8, scoped, tag = 'scoped memory for gated_conv2d.1']
    %10 = vsyncpa [#allocation3], 0
    %s11 = scalar_lea.sflag [#allocation3], 1
    %12 = vsyncpa %s11, 0
    loop: start=0, step=1, limit=4
    $region2: #{gated_conv2d.1} parent=1 // loop_pre_header
      _
    $region3: #{gated_conv2d.1} parent=1 // loop_header
      %s14 = sphi 0, %s18
      %p15 = scmp.ge.s32.totalorder %s14, 4
      %s21 = sphi 0, %s33
      %s22 = sphi 0, %s29
      %s23 = sphi 0, %s21
      %s24 = sphi 0, %s22
      %s25 = sphi 0, %s23
      %s26 = sphi 0, %s24
      %s36 = sphi 0, %s38
      %s39 = sphi 0, %s36
      %s40 = sphi 0, %s39
      %s56 = sphi 0, %s40
      %s62 = sphi 0, %s64
      %s65 = sphi 0, %s62
      %s66 = sphi 0, %s65
      %s82 = sphi 0, %s66
      %s88 = sphi 0, %s90
      %s91 = sphi 0, %s88
      %s92 = sphi 0, %s91
      %s108 = sphi 0, %s92
      %s114 = sphi 0, %s116
      %s117 = sphi 0, %s114
      %s118 = sphi 0, %s117
      %s134 = sphi 0, %s118
      %s140 = sphi 0, %s142
      %s143 = sphi 0, %s140
      %s144 = sphi 0, %s143
      %s160 = sphi 0, %s144
      %s168 = sphi 0, %s170
      %s171 = sphi 0, %s168
      %s172 = sphi 0, %s171
      %s188 = sphi 0, %s172
    $region4: #{gated_conv2d.1} parent=1 // loop_header_branch
      %17 = sbr.rel (%p15) target = $region8
    $region5: #{gated_conv2d.1} parent=1 // loop_body
      %s19 = ssub.s32 %s14, 1
      %s20 = ssub.s32 %s14, 2
      %s27 = sadd.s32 1, %s22
      %p28 = scmp.ge.s32.totalorder %s27, 1
      %s29 = scalar_select %p28, 0, %s27
      %s30 = sadd.s32 1, %s21
      %s31 = scalar_select %p28, %s30, %s21
      %p32 = scmp.ge.s32.totalorder %s31, 2
      %s33 = scalar_select %p32, 0, %s31
      %s34 = ssub.s32 %s21, %s33
      %p35 = scmp.eq.s32.totalorder %s34, 0
      %s37 = sadd.s32 %s36, 1
      %s38 = scalar_select %p35, %s36, %s37
      %p41 = pneg %p35
      %p42 = scmp.eq.s32.totalorder %s14, 1
      %p43 = por %p41, %p42
      %p44 = scmp.ne.s32.totalorder %s36, %s39
      %p45 = scmp.eq.s32.totalorder %s14, 0
      %p46 = por %p44, %p45
      %p47 = scmp.ne.s32.totalorder %s36, %s39
      %p48 = scmp.eq.s32.totalorder %s19, 1
      %p49 = por %p47, %p48
      %p50 = scmp.ne.s32.totalorder %s39, %s40
      %p51 = scmp.eq.s32.totalorder %s19, 0
      %p52 = por %p50, %p51
      %p53 = scmp.ne.s32.totalorder %s39, %s40
      %p54 = scmp.eq.s32.totalorder %s20, 1
      %p55 = por %p53, %p54
      %p57 = scmp.ne.s32.totalorder %s40, %s56
      %p58 = scmp.eq.s32.totalorder %s20, 0
      %p59 = por %p57, %p58
      %s60 = ssub.s32 %s22, %s29
      %p61 = scmp.eq.s32.totalorder %s60, 0
      %s63 = sadd.s32 %s62, 1
      %s64 = scalar_select %p61, %s62, %s63
      %p67 = pneg %p61
      %p68 = scmp.eq.s32.totalorder %s14, 1
      %p69 = por %p67, %p68
      %p70 = scmp.ne.s32.totalorder %s62, %s65
      %p71 = scmp.eq.s32.totalorder %s14, 0
      %p72 = por %p70, %p71
      %p73 = scmp.ne.s32.totalorder %s62, %s65
      %p74 = scmp.eq.s32.totalorder %s19, 1
      %p75 = por %p73, %p74
      %p76 = scmp.ne.s32.totalorder %s65, %s66
      %p77 = scmp.eq.s32.totalorder %s19, 0
      %p78 = por %p76, %p77
      %p79 = scmp.ne.s32.totalorder %s65, %s66
      %p80 = scmp.eq.s32.totalorder %s20, 1
      %p81 = por %p79, %p80
      %p83 = scmp.ne.s32.totalorder %s66, %s82
      %p84 = scmp.eq.s32.totalorder %s20, 0
      %p85 = por %p83, %p84
      %s86 = ssub.s32 %s22, %s29
      %p87 = scmp.eq.s32.totalorder %s86, 0
      %s89 = sadd.s32 %s88, 1
      %s90 = scalar_select %p87, %s88, %s89
      %p93 = pneg %p87
      %p94 = scmp.eq.s32.totalorder %s14, 1
      %p95 = por %p93, %p94
      %p96 = scmp.ne.s32.totalorder %s88, %s91
      %p97 = scmp.eq.s32.totalorder %s14, 0
      %p98 = por %p96, %p97
      %p99 = scmp.ne.s32.totalorder %s88, %s91
      %p100 = scmp.eq.s32.totalorder %s19, 1
      %p101 = por %p99, %p100
      %p102 = scmp.ne.s32.totalorder %s91, %s92
      %p103 = scmp.eq.s32.totalorder %s19, 0
      %p104 = por %p102, %p103
      %p105 = scmp.ne.s32.totalorder %s91, %s92
      %p106 = scmp.eq.s32.totalorder %s20, 1
      %p107 = por %p105, %p106
      %p109 = scmp.ne.s32.totalorder %s92, %s108
      %p110 = scmp.eq.s32.totalorder %s20, 0
      %p111 = por %p109, %p110
      %s112 = ssub.s32 %s22, %s29
      %p113 = scmp.eq.s32.totalorder %s112, 0
      %s115 = sadd.s32 %s114, 1
      %s116 = scalar_select %p113, %s114, %s115
      %p119 = pneg %p113
      %p120 = scmp.eq.s32.totalorder %s14, 1
      %p121 = por %p119, %p120
      %p122 = scmp.ne.s32.totalorder %s114, %s117
      %p123 = scmp.eq.s32.totalorder %s14, 0
      %p124 = por %p122, %p123
      %p125 = scmp.ne.s32.totalorder %s114, %s117
      %p126 = scmp.eq.s32.totalorder %s19, 1
      %p127 = por %p125, %p126
      %p128 = scmp.ne.s32.totalorder %s117, %s118
      %p129 = scmp.eq.s32.totalorder %s19, 0
      %p130 = por %p128, %p129
      %p131 = scmp.ne.s32.totalorder %s117, %s118
      %p132 = scmp.eq.s32.totalorder %s20, 1
      %p133 = por %p131, %p132
      %p135 = scmp.ne.s32.totalorder %s118, %s134
      %p136 = scmp.eq.s32.totalorder %s20, 0
      %p137 = por %p135, %p136
      %s138 = ssub.s32 %s22, %s29
      %p139 = scmp.eq.s32.totalorder %s138, 0
      %s141 = sadd.s32 %s140, 1
      %s142 = scalar_select %p139, %s140, %s141
      %p145 = pneg %p139
      %p146 = scmp.eq.s32.totalorder %s14, 1
      %p147 = por %p145, %p146
      %p148 = scmp.ne.s32.totalorder %s140, %s143
      %p149 = scmp.eq.s32.totalorder %s14, 0
      %p150 = por %p148, %p149
      %p151 = scmp.ne.s32.totalorder %s140, %s143
      %p152 = scmp.eq.s32.totalorder %s19, 1
      %p153 = por %p151, %p152
      %p154 = scmp.ne.s32.totalorder %s143, %s144
      %p155 = scmp.eq.s32.totalorder %s19, 0
      %p156 = por %p154, %p155
      %p157 = scmp.ne.s32.totalorder %s143, %s144
      %p158 = scmp.eq.s32.totalorder %s20, 1
      %p159 = por %p157, %p158
      %p161 = scmp.ne.s32.totalorder %s144, %s160
      %p162 = scmp.eq.s32.totalorder %s20, 0
      %p163 = por %p161, %p162
      %s164 = ssub.s32 %s21, %s33
      %s165 = ssub.s32 %s22, %s29
      %s166 = sor.u32 %s164, %s165
      %p167 = scmp.eq.s32.totalorder %s166, 0
      %s169 = sadd.s32 %s168, 1
      %s170 = scalar_select %p167, %s168, %s169
      %p173 = pneg %p167
      %p174 = scmp.eq.s32.totalorder %s14, 1
      %p175 = por %p173, %p174
      %p176 = scmp.ne.s32.totalorder %s168, %s171
      %p177 = scmp.eq.s32.totalorder %s14, 0
      %p178 = por %p176, %p177
      %p179 = scmp.ne.s32.totalorder %s168, %s171
      %p180 = scmp.eq.s32.totalorder %s19, 1
      %p181 = por %p179, %p180
      %p182 = scmp.ne.s32.totalorder %s171, %s172
      %p183 = scmp.eq.s32.totalorder %s19, 0
      %p184 = por %p182, %p183
      %p185 = scmp.ne.s32.totalorder %s171, %s172
      %p186 = scmp.eq.s32.totalorder %s20, 1
      %p187 = por %p185, %p186
      %p189 = scmp.ne.s32.totalorder %s172, %s188
      %p190 = scmp.eq.s32.totalorder %s20, 0
      %p191 = por %p189, %p190
      %p192 = scmp.le.s32.totalorder 1, %s14
      %p193 = scmp.lt.s32.totalorder %s14, 3
      %p194 = pnand %p192, %p193
      %p195 = pneg %p194
      // Predicated region
      $region9: #{gated_conv2d.1} parent=5 // pred_check
        _
      $region10: #{gated_conv2d.1} parent=5 // pred_check_branch
        %197 = sbr.rel (%p194) target = $region12
      $region11: #{gated_conv2d.1} parent=5 // pred_region
        %s198 = ssub.s32 %s14, 1
        // Predicated region
        $region13: #{gated_conv2d.1} parent=11 // pred_check
          %p199 = pneg %p78
        $region14: #{gated_conv2d.1} parent=11 // pred_check_branch
          %201 = sbr.rel (%p199) target = $region16
        $region15: #{gated_conv2d.1} parent=11 // pred_region
          %p202 = scmp.lt.s32.totalorder %s24, 0
          %s203 = scalar_select %p202, %s24, 0
          %s204 = smul.addr %s203, 8
          %s205 = scalar_lea.vmem %s1, %s204
        $region16: #{gated_conv2d.1} parent=11 // pred_fallthru
          _
        // Predicated region
        $region17: #{gated_conv2d.1} parent=11 // pred_check
          %p206 = pneg %p104
        $region18: #{gated_conv2d.1} parent=11 // pred_check_branch
          %208 = sbr.rel (%p206) target = $region20
        $region19: #{gated_conv2d.1} parent=11 // pred_region
          %p209 = scmp.lt.s32.totalorder %s24, 0
          %s210 = scalar_select %p209, %s24, 0
          %s211 = smul.addr %s210, 8
          %s212 = scalar_lea.vmem %s2, %s211
        $region20: #{gated_conv2d.1} parent=11 // pred_fallthru
          _
        // Predicated region
        $region21: #{gated_conv2d.1} parent=11 // pred_check
          %p213 = pneg %p130
        $region22: #{gated_conv2d.1} parent=11 // pred_check_branch
          %215 = sbr.rel (%p213) target = $region24
        $region23: #{gated_conv2d.1} parent=11 // pred_region
          %p216 = scmp.lt.s32.totalorder %s24, 0
          %s217 = scalar_select %p216, %s24, 0
          %s218 = scalar_lea.vmem %s3, %s217
        $region24: #{gated_conv2d.1} parent=11 // pred_fallthru
          _
        // Predicated region
        $region25: #{gated_conv2d.1} parent=11 // pred_check
          %p219 = pneg %p156
        $region26: #{gated_conv2d.1} parent=11 // pred_check_branch
          %221 = sbr.rel (%p219) target = $region28
        $region27: #{gated_conv2d.1} parent=11 // pred_region
          %p222 = scmp.lt.s32.totalorder %s24, 0
          %s223 = scalar_select %p222, %s24, 0
          %s224 = scalar_lea.vmem %s4, %s223
        $region28: #{gated_conv2d.1} parent=11 // pred_fallthru
          _
      $region12: #{gated_conv2d.1} parent=5 // pred_fallthru
        _
      %p225 = scmp.lt.s32.totalorder %s14, 2
      // Predicated region
      $region29: #{gated_conv2d.1} parent=5 // pred_check
        %p226 = pneg %p225
      $region30: #{gated_conv2d.1} parent=5 // pred_check_branch
        %228 = sbr.rel (%p226) target = $region32
      $region31: #{gated_conv2d.1} parent=5 // pred_region
        // Predicated region
        $region33: #{gated_conv2d.1} parent=31 // pred_check
          %p229 = pneg %p46
        $region34: #{gated_conv2d.1} parent=31 // pred_check_branch
          %231 = sbr.rel (%p229) target = $region36
        $region35: #{gated_conv2d.1} parent=31 // pred_region
          %p232 = scmp.lt.s32.totalorder %s21, 1
          %s233 = scalar_select %p232, %s21, 1
          %s234 = smul.addr %s233, 54
          %s235 = smul.addr %s234, 8
          %s236 = scalar_lea.vmem %s0, %s235
        $region36: #{gated_conv2d.1} parent=31 // pred_fallthru
          _
      $region32: #{gated_conv2d.1} parent=5 // pred_fallthru
        _
      %p237 = scmp.le.s32.totalorder 1, %s14
      %p238 = scmp.lt.s32.totalorder %s14, 3
      %p239 = pnand %p237, %p238
      %p240 = pneg %p239
      // Predicated region
      $region37: #{gated_conv2d.1} parent=5 // pred_check
        _
      $region38: #{gated_conv2d.1} parent=5 // pred_check_branch
        %242 = sbr.rel (%p239) target = $region40
      $region39: #{gated_conv2d.1} parent=5 // pred_region
        %s243 = ssub.s32 %s14, 1
        %p244 = scmp.lt.s32.totalorder %s23, 1
        %s245 = scalar_select %p244, %s23, 1
        %s246 = smul.addr %s245, 54
        %s247 = smul.addr %s246, 8
        %s248 = scalar_lea.vmem %s0, %s247
        %p249 = pneg %p52
        %p250 = pneg %p49
        %p251 = scmp.lt.s32.totalorder %s24, 0
        %s252 = scalar_select %p251, %s24, 0
        %s253 = smul.addr %s252, 8
        %s254 = scalar_lea.vmem %s1, %s253
        %p255 = pneg %p78
        %p256 = pneg %p75
        %p257 = scmp.lt.s32.totalorder %s24, 0
        %s258 = scalar_select %p257, %s24, 0
        %s259 = smul.addr %s258, 8
        %s260 = scalar_lea.vmem %s2, %s259
        %p261 = pneg %p104
        %p262 = pneg %p101
        %p263 = scmp.lt.s32.totalorder %s24, 0
        %s264 = scalar_select %p263, %s24, 0
        %s265 = scalar_lea.vmem %s3, %s264
        %p266 = pneg %p130
        %p267 = pneg %p127
        %p268 = scmp.lt.s32.totalorder %s24, 0
        %s269 = scalar_select %p268, %s24, 0
        %s270 = scalar_lea.vmem %s4, %s269
        %p271 = pneg %p156
        %p272 = pneg %p153
        %p273 = pneg %p184
        %p274 = pneg %p181
        %s275 = sand.u32 %s171, 1
        %s276 = scalar_lea.sflag [#allocation3], %s275
        %s277 = sand.u32 %s171, 1
        %s278 = smul.addr %s277, 256
        %s279 = scalar_lea.vmem [#allocation2], %s278
        %p280 = scmp.lt.s32.totalorder %s23, 1
        %s281 = scalar_select %p280, %s23, 1
        %s282 = smul.addr %s281, 54
        %s283 = smul.addr %s282, 8
        %s284 = scalar_lea.vmem %s0, %s283
        %p285 = scmp.lt.s32.totalorder %s24, 0
        %s286 = scalar_select %p285, %s24, 0
        %s287 = smul.addr %s286, 8
        %s288 = scalar_lea.vmem %s1, %s287
        %p289 = scmp.lt.s32.totalorder %s24, 0
        %s290 = scalar_select %p289, %s24, 0
        %s291 = smul.addr %s290, 8
        %s292 = scalar_lea.vmem %s2, %s291
        %p293 = scmp.lt.s32.totalorder %s24, 0
        %s294 = scalar_select %p293, %s24, 0
        %s295 = scalar_lea.vmem %s3, %s294
        %p296 = scmp.lt.s32.totalorder %s24, 0
        %s297 = scalar_select %p296, %s24, 0
        %s298 = scalar_lea.vmem %s4, %s297
        %v299 = vld [vmem:[%s284] sm:$0xff]
        %v300 = vld [vmem:[%s284 + $0x8] sm:$0xff]
        %v301 = vld [vmem:[%s284 + $0x10] sm:$0x3]
        %v302 = vld [vmem:[%s284 + $0x18] sm:$0xff]
        %v303 = vld [vmem:[%s284 + $0x20] sm:$0xff]
        %v304 = vld [vmem:[%s284 + $0x28] sm:$0x3]
        %v305 = vld [vmem:[%s284 + $0x30] sm:$0xff]
        %v306 = vld [vmem:[%s284 + $0x38] sm:$0xff]
        %v307 = vld [vmem:[%s284 + $0x40] sm:$0x3]
        %v308 = vld [vmem:[%s284 + $0x48] sm:$0xff]
        %v309 = vld [vmem:[%s284 + $0x50] sm:$0xff]
        %v310 = vld [vmem:[%s284 + $0x58] sm:$0x3]
        %v311 = vld [vmem:[%s284 + $0x60] sm:$0xff]
        %v312 = vld [vmem:[%s284 + $0x68] sm:$0xff]
        %v313 = vld [vmem:[%s284 + $0x70] sm:$0x3]
        %v314 = vld [vmem:[%s284 + $0x78] sm:$0xff]
        %v315 = vld [vmem:[%s284 + $0x80] sm:$0xff]
        %v316 = vld [vmem:[%s284 + $0x88] sm:$0x3]
        %v317 = vld [vmem:[%s284 + $0x90] sm:$0xff]
        %v318 = vld [vmem:[%s284 + $0x98] sm:$0xff]
        %v319 = vld [vmem:[%s284 + $0xa0] sm:$0x3]
        %v320 = vld [vmem:[%s284 + $0xa8] sm:$0xff]
        %v321 = vld [vmem:[%s284 + $0xb0] sm:$0xff]
        %v322 = vld [vmem:[%s284 + $0xb8] sm:$0x3]
        %v323 = vld [vmem:[%s284 + $0xc0] sm:$0xff]
        %v324 = vld [vmem:[%s284 + $0xc8] sm:$0xff]
        %v325 = vld [vmem:[%s284 + $0xd0] sm:$0x3]
        %v326 = vld [vmem:[%s284 + $0xd8] sm:$0xff]
        %v327 = vld [vmem:[%s284 + $0xe0] sm:$0xff]
        %v328 = vld [vmem:[%s284 + $0xe8] sm:$0x3]
        %v329 = vld [vmem:[%s284 + $0xf0] sm:$0xff]
        %v330 = vld [vmem:[%s284 + $0xf8] sm:$0xff]
        %v331 = vld [vmem:[%s284 + $0x100] sm:$0x3]
        %v332 = vld [vmem:[%s284 + $0x108] sm:$0xff]
        %v333 = vld [vmem:[%s284 + $0x110] sm:$0xff]
        %v334 = vld [vmem:[%s284 + $0x118] sm:$0x3]
        %v335 = vld [vmem:[%s284 + $0x120] sm:$0xff]
        %v336 = vld [vmem:[%s284 + $0x128] sm:$0xff]
        %v337 = vld [vmem:[%s284 + $0x130] sm:$0x3]
        %v338 = vld [vmem:[%s284 + $0x138] sm:$0xff]
        %v339 = vld [vmem:[%s284 + $0x140] sm:$0xff]
        %v340 = vld [vmem:[%s284 + $0x148] sm:$0x3]
        %v341 = vld [vmem:[%s284 + $0x150] sm:$0xff]
        %v342 = vld [vmem:[%s284 + $0x158] sm:$0xff]
        %v343 = vld [vmem:[%s284 + $0x160] sm:$0x3]
        %v344 = vld [vmem:[%s284 + $0x168] sm:$0xff]
        %v345 = vld [vmem:[%s284 + $0x170] sm:$0xff]
        %v346 = vld [vmem:[%s284 + $0x178] sm:$0x3]
        %v347 = vld [vmem:[%s284 + $0x180] sm:$0xff]
        %v348 = vld [vmem:[%s284 + $0x188] sm:$0xff]
        %v349 = vld [vmem:[%s284 + $0x190] sm:$0x3]
        %v350 = vld [vmem:[%s284 + $0x198] sm:$0xff]
        %v351 = vld [vmem:[%s284 + $0x1a0] sm:$0xff]
        %v352 = vld [vmem:[%s284 + $0x1a8] sm:$0x3]
        %vm407 = vcmask 1046528
        %v408 = vrot.slane %v299, 1
        %v409 = vrot.slane %v300, 1
        %v410 = vsel %vm407, %v408, %v409
        %v411 = vrot.slane %v301, 1
        %v412 = vsel %vm407, %v409, %v411
        %v413 = vrot.slane %v302, 1
        %v414 = vrot.slane %v303, 1
        %v415 = vsel %vm407, %v413, %v414
        %v416 = vrot.slane %v304, 1
        %v417 = vsel %vm407, %v414, %v416
        %v418 = vrot.slane %v305, 1
        %v419 = vrot.slane %v306, 1
        %v420 = vsel %vm407, %v418, %v419
        %v421 = vrot.slane %v307, 1
        %v422 = vsel %vm407, %v419, %v421
        %v423 = vrot.slane %v308, 1
        %v424 = vrot.slane %v309, 1
        %v425 = vsel %vm407, %v423, %v424
        %v426 = vrot.slane %v310, 1
        %v427 = vsel %vm407, %v424, %v426
        %v428 = vrot.slane %v311, 1
        %v429 = vrot.slane %v312, 1
        %v430 = vsel %vm407, %v428, %v429
        %v431 = vrot.slane %v313, 1
        %v432 = vsel %vm407, %v429, %v431
        %v433 = vrot.slane %v314, 1
        %v434 = vrot.slane %v315, 1
        %v435 = vsel %vm407, %v433, %v434
        %v436 = vrot.slane %v316, 1
        %v437 = vsel %vm407, %v434, %v436
        %v438 = vrot.slane %v317, 1
        %v439 = vrot.slane %v318, 1
        %v440 = vsel %vm407, %v438, %v439
        %v441 = vrot.slane %v319, 1
        %v442 = vsel %vm407, %v439, %v441
        %v443 = vrot.slane %v320, 1
        %v444 = vrot.slane %v321, 1
        %v445 = vsel %vm407, %v443, %v444
        %v446 = vrot.slane %v322, 1
        %v447 = vsel %vm407, %v444, %v446
        %v448 = vrot.slane %v323, 1
        %v449 = vrot.slane %v324, 1
        %v450 = vsel %vm407, %v448, %v449
        %v451 = vrot.slane %v325, 1
        %v452 = vsel %vm407, %v449, %v451
        %v453 = vrot.slane %v326, 1
        %v454 = vrot.slane %v327, 1
        %v455 = vsel %vm407, %v453, %v454
        %v456 = vrot.slane %v328, 1
        %v457 = vsel %vm407, %v454, %v456
        %v458 = vrot.slane %v329, 1
        %v459 = vrot.slane %v330, 1
        %v460 = vsel %vm407, %v458, %v459
        %v461 = vrot.slane %v331, 1
        %v462 = vsel %vm407, %v459, %v461
        %v463 = vrot.slane %v332, 1
        %v464 = vrot.slane %v333, 1
        %v465 = vsel %vm407, %v463, %v464
        %v466 = vrot.slane %v334, 1
        %v467 = vsel %vm407, %v464, %v466
        %v468 = vrot.slane %v335, 1
        %v469 = vrot.slane %v336, 1
        %v470 = vsel %vm407, %v468, %v469
        %v471 = vrot.slane %v337, 1
        %v472 = vsel %vm407, %v469, %v471
        %v473 = vrot.slane %v338, 1
        %v474 = vrot.slane %v339, 1
        %v475 = vsel %vm407, %v473, %v474
        %v476 = vrot.slane %v340, 1
        %v477 = vsel %vm407, %v474, %v476
        %v478 = vrot.slane %v341, 1
        %v479 = vrot.slane %v342, 1
        %v480 = vsel %vm407, %v478, %v479
        %v481 = vrot.slane %v343, 1
        %v482 = vsel %vm407, %v479, %v481
        %v483 = vrot.slane %v344, 1
        %v484 = vrot.slane %v345, 1
        %v485 = vsel %vm407, %v483, %v484
        %v486 = vrot.slane %v346, 1
        %v487 = vsel %vm407, %v484, %v486
        %v488 = vrot.slane %v347, 1
        %v489 = vrot.slane %v348, 1
        %v490 = vsel %vm407, %v488, %v489
        %v491 = vrot.slane %v349, 1
        %v492 = vsel %vm407, %v489, %v491
        %v493 = vrot.slane %v350, 1
        %v494 = vrot.slane %v351, 1
        %v495 = vsel %vm407, %v493, %v494
        %v496 = vrot.slane %v352, 1
        %v497 = vsel %vm407, %v494, %v496
        %498 = vrot.lane.b32.xlu0 %v410, 4
        %v499 = vpop.permute.xlu0 %498
        %500 = vrot.lane.b32.xlu0 %v412, 4
        %v501 = vpop.permute.xlu0 %500
        %502 = vrot.lane.b32.xlu0 %v415, 4
        %v503 = vpop.permute.xlu0 %502
        %504 = vrot.lane.b32.xlu0 %v417, 4
        %v505 = vpop.permute.xlu0 %504
        %506 = vrot.lane.b32.xlu0 %v420, 4
        %v507 = vpop.permute.xlu0 %506
        %508 = vrot.lane.b32.xlu0 %v422, 4
        %v509 = vpop.permute.xlu0 %508
        %510 = vrot.lane.b32.xlu0 %v425, 4
        %v511 = vpop.permute.xlu0 %510
        %512 = vrot.lane.b32.xlu0 %v427, 4
        %v513 = vpop.permute.xlu0 %512
        %514 = vrot.lane.b32.xlu0 %v430, 4
        %v515 = vpop.permute.xlu0 %514
        %516 = vrot.lane.b32.xlu0 %v432, 4
        %v517 = vpop.permute.xlu0 %516
        %518 = vrot.lane.b32.xlu0 %v435, 4
        %v519 = vpop.permute.xlu0 %518
        %520 = vrot.lane.b32.xlu0 %v437, 4
        %v521 = vpop.permute.xlu0 %520
        %522 = vrot.lane.b32.xlu0 %v440, 4
        %v523 = vpop.permute.xlu0 %522
        %524 = vrot.lane.b32.xlu0 %v442, 4
        %v525 = vpop.permute.xlu0 %524
        %526 = vrot.lane.b32.xlu0 %v445, 4
        %v527 = vpop.permute.xlu0 %526
        %528 = vrot.lane.b32.xlu0 %v447, 4
        %v529 = vpop.permute.xlu0 %528
        %530 = vrot.lane.b32.xlu0 %v450, 4
        %v531 = vpop.permute.xlu0 %530
        %532 = vrot.lane.b32.xlu0 %v452, 4
        %v533 = vpop.permute.xlu0 %532
        %534 = vrot.lane.b32.xlu0 %v455, 4
        %v535 = vpop.permute.xlu0 %534
        %536 = vrot.lane.b32.xlu0 %v457, 4
        %v537 = vpop.permute.xlu0 %536
        %538 = vrot.lane.b32.xlu0 %v460, 4
        %v539 = vpop.permute.xlu0 %538
        %540 = vrot.lane.b32.xlu0 %v462, 4
        %v541 = vpop.permute.xlu0 %540
        %542 = vrot.lane.b32.xlu0 %v465, 4
        %v543 = vpop.permute.xlu0 %542
        %544 = vrot.lane.b32.xlu0 %v467, 4
        %v545 = vpop.permute.xlu0 %544
        %546 = vrot.lane.b32.xlu0 %v470, 4
        %v547 = vpop.permute.xlu0 %546
        %548 = vrot.lane.b32.xlu0 %v472, 4
        %v549 = vpop.permute.xlu0 %548
        %550 = vrot.lane.b32.xlu0 %v475, 4
        %v551 = vpop.permute.xlu0 %550
        %552 = vrot.lane.b32.xlu0 %v477, 4
        %v553 = vpop.permute.xlu0 %552
        %554 = vrot.lane.b32.xlu0 %v480, 4
        %v555 = vpop.permute.xlu0 %554
        %556 = vrot.lane.b32.xlu0 %v482, 4
        %v557 = vpop.permute.xlu0 %556
        %558 = vrot.lane.b32.xlu0 %v485, 4
        %v559 = vpop.permute.xlu0 %558
        %560 = vrot.lane.b32.xlu0 %v487, 4
        %v561 = vpop.permute.xlu0 %560
        %562 = vrot.lane.b32.xlu0 %v490, 4
        %v563 = vpop.permute.xlu0 %562
        %564 = vrot.lane.b32.xlu0 %v492, 4
        %v565 = vpop.permute.xlu0 %564
        %566 = vrot.lane.b32.xlu0 %v495, 4
        %v567 = vpop.permute.xlu0 %566
        %568 = vrot.lane.b32.xlu0 %v497, 4
        %v569 = vpop.permute.xlu0 %568
        %vm606 = vcmask 1045504
        %v607 = vrot.slane %v299, 2
        %v608 = vrot.slane %v300, 2
        %v609 = vsel %vm606, %v607, %v608
        %v610 = vrot.slane %v301, 2
        %v611 = vsel %vm606, %v608, %v610
        %v612 = vrot.slane %v302, 2
        %v613 = vrot.slane %v303, 2
        %v614 = vsel %vm606, %v612, %v613
        %v615 = vrot.slane %v304, 2
        %v616 = vsel %vm606, %v613, %v615
        %v617 = vrot.slane %v305, 2
        %v618 = vrot.slane %v306, 2
        %v619 = vsel %vm606, %v617, %v618
        %v620 = vrot.slane %v307, 2
        %v621 = vsel %vm606, %v618, %v620
        %v622 = vrot.slane %v308, 2
        %v623 = vrot.slane %v309, 2
        %v624 = vsel %vm606, %v622, %v623
        %v625 = vrot.slane %v310, 2
        %v626 = vsel %vm606, %v623, %v625
        %v627 = vrot.slane %v311, 2
        %v628 = vrot.slane %v312, 2
        %v629 = vsel %vm606, %v627, %v628
        %v630 = vrot.slane %v313, 2
        %v631 = vsel %vm606, %v628, %v630
        %v632 = vrot.slane %v314, 2
        %v633 = vrot.slane %v315, 2
        %v634 = vsel %vm606, %v632, %v633
        %v635 = vrot.slane %v316, 2
        %v636 = vsel %vm606, %v633, %v635
        %v637 = vrot.slane %v317, 2
        %v638 = vrot.slane %v318, 2
        %v639 = vsel %vm606, %v637, %v638
        %v640 = vrot.slane %v319, 2
        %v641 = vsel %vm606, %v638, %v640
        %v642 = vrot.slane %v320, 2
        %v643 = vrot.slane %v321, 2
        %v644 = vsel %vm606, %v642, %v643
        %v645 = vrot.slane %v322, 2
        %v646 = vsel %vm606, %v643, %v645
        %v647 = vrot.slane %v323, 2
        %v648 = vrot.slane %v324, 2
        %v649 = vsel %vm606, %v647, %v648
        %v650 = vrot.slane %v325, 2
        %v651 = vsel %vm606, %v648, %v650
        %v652 = vrot.slane %v326, 2
        %v653 = vrot.slane %v327, 2
        %v654 = vsel %vm606, %v652, %v653
        %v655 = vrot.slane %v328, 2
        %v656 = vsel %vm606, %v653, %v655
        %v657 = vrot.slane %v329, 2
        %v658 = vrot.slane %v330, 2
        %v659 = vsel %vm606, %v657, %v658
        %v660 = vrot.slane %v331, 2
        %v661 = vsel %vm606, %v658, %v660
        %v662 = vrot.slane %v332, 2
        %v663 = vrot.slane %v333, 2
        %v664 = vsel %vm606, %v662, %v663
        %v665 = vrot.slane %v334, 2
        %v666 = vsel %vm606, %v663, %v665
        %v667 = vrot.slane %v335, 2
        %v668 = vrot.slane %v336, 2
        %v669 = vsel %vm606, %v667, %v668
        %v670 = vrot.slane %v337, 2
        %v671 = vsel %vm606, %v668, %v670
        %v672 = vrot.slane %v338, 2
        %v673 = vrot.slane %v339, 2
        %v674 = vsel %vm606, %v672, %v673
        %v675 = vrot.slane %v340, 2
        %v676 = vsel %vm606, %v673, %v675
        %v677 = vrot.slane %v341, 2
        %v678 = vrot.slane %v342, 2
        %v679 = vsel %vm606, %v677, %v678
        %v680 = vrot.slane %v343, 2
        %v681 = vsel %vm606, %v678, %v680
        %v682 = vrot.slane %v344, 2
        %v683 = vrot.slane %v345, 2
        %v684 = vsel %vm606, %v682, %v683
        %v685 = vrot.slane %v346, 2
        %v686 = vsel %vm606, %v683, %v685
        %v687 = vrot.slane %v347, 2
        %v688 = vrot.slane %v348, 2
        %v689 = vsel %vm606, %v687, %v688
        %v690 = vrot.slane %v349, 2
        %v691 = vsel %vm606, %v688, %v690
        %v692 = vrot.slane %v350, 2
        %v693 = vrot.slane %v351, 2
        %v694 = vsel %vm606, %v692, %v693
        %v695 = vrot.slane %v352, 2
        %v696 = vsel %vm606, %v693, %v695
        %697 = vrot.lane.b32.xlu0 %v609, 8
        %v698 = vpop.permute.xlu0 %697
        %699 = vrot.lane.b32.xlu0 %v611, 8
        %v700 = vpop.permute.xlu0 %699
        %701 = vrot.lane.b32.xlu0 %v614, 8
        %v702 = vpop.permute.xlu0 %701
        %703 = vrot.lane.b32.xlu0 %v616, 8
        %v704 = vpop.permute.xlu0 %703
        %705 = vrot.lane.b32.xlu0 %v619, 8
        %v706 = vpop.permute.xlu0 %705
        %707 = vrot.lane.b32.xlu0 %v621, 8
        %v708 = vpop.permute.xlu0 %707
        %709 = vrot.lane.b32.xlu0 %v624, 8
        %v710 = vpop.permute.xlu0 %709
        %711 = vrot.lane.b32.xlu0 %v626, 8
        %v712 = vpop.permute.xlu0 %711
        %713 = vrot.lane.b32.xlu0 %v629, 8
        %v714 = vpop.permute.xlu0 %713
        %715 = vrot.lane.b32.xlu0 %v631, 8
        %v716 = vpop.permute.xlu0 %715
        %717 = vrot.lane.b32.xlu0 %v634, 8
        %v718 = vpop.permute.xlu0 %717
        %719 = vrot.lane.b32.xlu0 %v636, 8
        %v720 = vpop.permute.xlu0 %719
        %721 = vrot.lane.b32.xlu0 %v639, 8
        %v722 = vpop.permute.xlu0 %721
        %723 = vrot.lane.b32.xlu0 %v641, 8
        %v724 = vpop.permute.xlu0 %723
        %725 = vrot.lane.b32.xlu0 %v644, 8
        %v726 = vpop.permute.xlu0 %725
        %727 = vrot.lane.b32.xlu0 %v646, 8
        %v728 = vpop.permute.xlu0 %727
        %729 = vrot.lane.b32.xlu0 %v649, 8
        %v730 = vpop.permute.xlu0 %729
        %731 = vrot.lane.b32.xlu0 %v651, 8
        %v732 = vpop.permute.xlu0 %731
        %733 = vrot.lane.b32.xlu0 %v654, 8
        %v734 = vpop.permute.xlu0 %733
        %735 = vrot.lane.b32.xlu0 %v656, 8
        %v736 = vpop.permute.xlu0 %735
        %737 = vrot.lane.b32.xlu0 %v659, 8
        %v738 = vpop.permute.xlu0 %737
        %739 = vrot.lane.b32.xlu0 %v661, 8
        %v740 = vpop.permute.xlu0 %739
        %741 = vrot.lane.b32.xlu0 %v664, 8
        %v742 = vpop.permute.xlu0 %741
        %743 = vrot.lane.b32.xlu0 %v666, 8
        %v744 = vpop.permute.xlu0 %743
        %745 = vrot.lane.b32.xlu0 %v669, 8
        %v746 = vpop.permute.xlu0 %745
        %747 = vrot.lane.b32.xlu0 %v671, 8
        %v748 = vpop.permute.xlu0 %747
        %749 = vrot.lane.b32.xlu0 %v674, 8
        %v750 = vpop.permute.xlu0 %749
        %751 = vrot.lane.b32.xlu0 %v676, 8
        %v752 = vpop.permute.xlu0 %751
        %753 = vrot.lane.b32.xlu0 %v679, 8
        %v754 = vpop.permute.xlu0 %753
        %755 = vrot.lane.b32.xlu0 %v681, 8
        %v756 = vpop.permute.xlu0 %755
        %757 = vrot.lane.b32.xlu0 %v684, 8
        %v758 = vpop.permute.xlu0 %757
        %759 = vrot.lane.b32.xlu0 %v686, 8
        %v760 = vpop.permute.xlu0 %759
        %761 = vrot.lane.b32.xlu0 %v689, 8
        %v762 = vpop.permute.xlu0 %761
        %763 = vrot.lane.b32.xlu0 %v691, 8
        %v764 = vpop.permute.xlu0 %763
        %765 = vrot.lane.b32.xlu0 %v694, 8
        %v766 = vpop.permute.xlu0 %765
        %767 = vrot.lane.b32.xlu0 %v696, 8
        %v768 = vpop.permute.xlu0 %767
        %vm805 = vcmask 31744
        %v806 = vsel %vm805, %v299, %v499
        %v807 = vsel %vm805, %v300, %v501
        %v808 = vsel %vm805, %v302, %v503
        %v809 = vsel %vm805, %v303, %v505
        %v810 = vsel %vm805, %v305, %v507
        %v811 = vsel %vm805, %v306, %v509
        %v812 = vsel %vm805, %v308, %v511
        %v813 = vsel %vm805, %v309, %v513
        %v814 = vsel %vm805, %v311, %v515
        %v815 = vsel %vm805, %v312, %v517
        %v816 = vsel %vm805, %v314, %v519
        %v817 = vsel %vm805, %v315, %v521
        %v818 = vsel %vm805, %v317, %v523
        %v819 = vsel %vm805, %v318, %v525
        %v820 = vsel %vm805, %v320, %v527
        %v821 = vsel %vm805, %v321, %v529
        %v822 = vsel %vm805, %v323, %v531
        %v823 = vsel %vm805, %v324, %v533
        %v824 = vsel %vm805, %v326, %v535
        %v825 = vsel %vm805, %v327, %v537
        %v826 = vsel %vm805, %v329, %v539
        %v827 = vsel %vm805, %v330, %v541
        %v828 = vsel %vm805, %v332, %v543
        %v829 = vsel %vm805, %v333, %v545
        %v830 = vsel %vm805, %v335, %v547
        %v831 = vsel %vm805, %v336, %v549
        %v832 = vsel %vm805, %v338, %v551
        %v833 = vsel %vm805, %v339, %v553
        %v834 = vsel %vm805, %v341, %v555
        %v835 = vsel %vm805, %v342, %v557
        %v836 = vsel %vm805, %v344, %v559
        %v837 = vsel %vm805, %v345, %v561
        %v838 = vsel %vm805, %v347, %v563
        %v839 = vsel %vm805, %v348, %v565
        %v840 = vsel %vm805, %v350, %v567
        %v841 = vsel %vm805, %v351, %v569
        %vm842 = vcmask 64512
        %v843 = vsel %vm842, %v806, %v698
        %v844 = vsel %vm842, %v807, %v700
        %v845 = vsel %vm842, %v808, %v702
        %v846 = vsel %vm842, %v809, %v704
        %v847 = vsel %vm842, %v810, %v706
        %v848 = vsel %vm842, %v811, %v708
        %v849 = vsel %vm842, %v812, %v710
        %v850 = vsel %vm842, %v813, %v712
        %v851 = vsel %vm842, %v814, %v714
        %v852 = vsel %vm842, %v815, %v716
        %v853 = vsel %vm842, %v816, %v718
        %v854 = vsel %vm842, %v817, %v720
        %v855 = vsel %vm842, %v818, %v722
        %v856 = vsel %vm842, %v819, %v724
        %v857 = vsel %vm842, %v820, %v726
        %v858 = vsel %vm842, %v821, %v728
        %v859 = vsel %vm842, %v822, %v730
        %v860 = vsel %vm842, %v823, %v732
        %v861 = vsel %vm842, %v824, %v734
        %v862 = vsel %vm842, %v825, %v736
        %v863 = vsel %vm842, %v826, %v738
        %v864 = vsel %vm842, %v827, %v740
        %v865 = vsel %vm842, %v828, %v742
        %v866 = vsel %vm842, %v829, %v744
        %v867 = vsel %vm842, %v830, %v746
        %v868 = vsel %vm842, %v831, %v748
        %v869 = vsel %vm842, %v832, %v750
        %v870 = vsel %vm842, %v833, %v752
        %v871 = vsel %vm842, %v834, %v754
        %v872 = vsel %vm842, %v835, %v756
        %v873 = vsel %vm842, %v836, %v758
        %v874 = vsel %vm842, %v837, %v760
        %v875 = vsel %vm842, %v838, %v762
        %v876 = vsel %vm842, %v839, %v764
        %v877 = vsel %vm842, %v840, %v766
        %v878 = vsel %vm842, %v841, %v768
        %v879 = vld [vmem:[%s288] sm:$0xff]
        %v880 = vld [vmem:[%s288 + $0x8] sm:$0xf]
        %v881 = vld [vmem:[%s292] sm:$0xff]
        %v882 = vld [vmem:[%s292 + $0x8] sm:$0xf]
        %s883 = scalar_lea.vmem %s288, 16
        %v884 = vld [vmem:[%s883] sm:$0xff]
        %v885 = vld [vmem:[%s883 + $0x8] sm:$0xf]
        %vm886 = vcmask 97280
        %v888 = vsel %vm886, %v845, 0
        %v891 = vsel %vm886, %v846, 0
        %v894 = vsel %vm886, %v847, 0
        %v897 = vsel %vm886, %v848, 0
        %v900 = vsel %vm886, %v849, 0
        %v903 = vsel %vm886, %v850, 0
        %v906 = vsel %vm886, %v851, 0
        %v909 = vsel %vm886, %v852, 0
        %v912 = vsel %vm886, %v853, 0
        %v915 = vsel %vm886, %v854, 0
        %v918 = vsel %vm886, %v855, 0
        %v921 = vsel %vm886, %v856, 0
        %v924 = vsel %vm886, %v857, 0
        %v927 = vsel %vm886, %v858, 0
        %v930 = vsel %vm886, %v859, 0
        %v933 = vsel %vm886, %v860, 0
        %v936 = vsel %vm886, %v861, 0
        %v939 = vsel %vm886, %v862, 0
        %v942 = vsel %vm886, %v863, 0
        %v945 = vsel %vm886, %v864, 0
        %v948 = vsel %vm886, %v865, 0
        %v951 = vsel %vm886, %v866, 0
        %v954 = vsel %vm886, %v867, 0
        %v957 = vsel %vm886, %v868, 0
        %v960 = vsel %vm886, %v869, 0
        %v963 = vsel %vm886, %v870, 0
        %v966 = vsel %vm886, %v871, 0
        %v969 = vsel %vm886, %v872, 0
        %v972 = vsel %vm886, %v873, 0
        %v975 = vsel %vm886, %v874, 0
        %v978 = vsel %vm886, %v875, 0
        %v981 = vsel %vm886, %v876, 0
        %vm983 = vcmask 1043456
        %v985 = vsel %vm983, %v885, 0
        %987 = vmatprep.subr.mxu0 0.0
        %988 = vmatpush1.msra.mxu0 %v884
        %989 = vmatprep.subr.mxu0 0.0
        %990 = vmatpush1.msra.mxu0 %v985
        %991 = vmatprep.subr.mxu0 0.0
        %992 = vmatpush1.msra.mxu0 0.0
        %993 = vmatprep.subr.mxu0 0.0
        %994 = vmatpush1.msra.mxu0 0.0
        %995 = vmatprep.subr.mxu0 0.0
        %996 = vmatpush1.msra.mxu0 0.0
        %997 = vmatprep.subr.mxu0 0.0
        %998 = vmatpush1.msra.mxu0 0.0
        %999 = vmatprep.subr.mxu0 0.0
        %1000 = vmatpush1.msra.mxu0 0.0
        %1001 = vmatprep.subr.mxu0 0.0
        %1002 = vmatpush1.msra.mxu0 0.0
        %1003 = vmatprep.subr.mxu0 0.0
        %1004 = vmatpush1.msra.mxu0 0.0
        %1005 = vmatprep.subr.mxu0 0.0
        %1006 = vmatpush1.msra.mxu0 0.0
        %1007 = vmatprep.subr.mxu0 0.0
        %1008 = vmatpush1.msra.mxu0 0.0
        %1009 = vmatprep.subr.mxu0 0.0
        %1010 = vmatpush1.msra.mxu0 0.0
        %1011 = vmatprep.subr.mxu0 0.0
        %1012 = vmatpush1.msra.mxu0 0.0
        %1013 = vmatprep.subr.mxu0 0.0
        %1014 = vmatpush1.msra.mxu0 0.0
        %1015 = vmatprep.subr.mxu0 0.0
        %1016 = vmatpush1.msra.mxu0 0.0
        %1017 = vmatprep.subr.mxu0 0.0
        %1018 = vmatpush1.msra.mxu0 0.0
        %1019 = vmatprep.subr.mxu0 0.0
        %1020 = vmatpush1.msra.mxu0 0.0
        %1021 = vmatprep.subr.mxu0 0.0
        %1022 = vmatpush1.msra.mxu0 0.0
        %1023 = vmatprep.subr.mxu0 0.0
        %1024 = vmatpush1.msra.mxu0 0.0
        %1025 = vmatprep.subr.mxu0 0.0
        %1026 = vmatpush1.msra.mxu0 0.0
        %1027 = vmatprep.subr.mxu0 0.0
        %1028 = vmatpush1.msra.mxu0 0.0
        %1029 = vmatprep.subr.mxu0 0.0
        %1030 = vmatpush1.msra.mxu0 0.0
        %1031 = vmatprep.subr.mxu0 0.0
        %1032 = vmatpush1.msra.mxu0 0.0
        %1033 = vmatprep.subr.mxu0 0.0
        %1034 = vmatpush1.msra.mxu0 0.0
        %1035 = vmatprep.subr.mxu0 0.0
        %1036 = vmatpush1.msra.mxu0 0.0
        %1037 = vmatprep.subr.mxu0 0.0
        %1038 = vmatpush1.msra.mxu0 0.0
        %1039 = vmatprep.subr.mxu0 0.0
        %1040 = vmatpush1.msra.mxu0 0.0
        %1041 = vmatprep.subr.mxu0 0.0
        %1042 = vmatpush1.msra.mxu0 0.0
        %1043 = vmatprep.subr.mxu0 0.0
        %1044 = vmatpush1.msra.mxu0 0.0
        %1045 = vmatprep.subr.mxu0 0.0
        %1046 = vmatpush1.msra.mxu0 0.0
        %1047 = vmatprep.subr.mxu0 0.0
        %1048 = vmatpush1.msra.mxu0 0.0
        %1049 = vmatprep.subr.mxu0 0.0
        %1050 = vmatpush1.msra.mxu0 0.0
        %1051 = vmatprep.mubr.f32.mxu0 0.0
        %1052 = vmatmul.mubr.f32.gmra.mrb[0].mxu0 %v888
        %v1053 = vpop.f32.mrb[0].mxu0
        %v1054 = vadd.f32 0.0, %v1053
        %v1055 = vpop.f32.mrb[0].mxu0
        %1056 = vmatprep.mubr.f32.mxu0 0.0
        %1057 = vmatmul.mubr.f32.gmra.mrb[0].mxu0 %v891
        %v1058 = vpop.f32.mrb[0].mxu0
        %v1059 = vadd.f32 0.0, %v1058
        %v1060 = vpop.f32.mrb[0].mxu0
        %1061 = vmatprep.mubr.f32.mxu0 0.0
        %1062 = vmatmul.mubr.f32.gmra.mrb[0].mxu0 %v894
        %v1063 = vpop.f32.mrb[0].mxu0
        %v1064 = vadd.f32 0.0, %v1063
        %v1065 = vpop.f32.mrb[0].mxu0
        %1066 = vmatprep.mubr.f32.mxu0 0.0
        %1067 = vmatmul.mubr.f32.gmra.mrb[0].mxu0 %v897
        %v1068 = vpop.f32.mrb[0].mxu0
        %v1069 = vadd.f32 0.0, %v1068
        %v1070 = vpop.f32.mrb[0].mxu0
        %1071 = vmatprep.mubr.f32.mxu0 0.0
        %1072 = vmatmul.mubr.f32.gmra.mrb[0].mxu0 %v900
        %v1073 = vpop.f32.mrb[0].mxu0
        %v1074 = vadd.f32 0.0, %v1073
        %v1075 = vpop.f32.mrb[0].mxu0
        %1076 = vmatprep.mubr.f32.mxu0 0.0
        %1077 = vmatmul.mubr.f32.gmra.mrb[0].mxu0 %v903
        %v1078 = vpop.f32.mrb[0].mxu0
        %v1079 = vadd.f32 0.0, %v1078
        %v1080 = vpop.f32.mrb[0].mxu0
        %1081 = vmatprep.mubr.f32.mxu0 0.0
        %1082 = vmatmul.mubr.f32.gmra.mrb[0].mxu0 %v906
        %v1083 = vpop.f32.mrb[0].mxu0
        %v1084 = vadd.f32 0.0, %v1083
        %v1085 = vpop.f32.mrb[0].mxu0
        %1086 = vmatprep.mubr.f32.mxu0 0.0
        %1087 = vmatmul.mubr.f32.gmra.mrb[0].mxu0 %v909
        %v1088 = vpop.f32.mrb[0].mxu0
        %v1089 = vadd.f32 0.0, %v1088
        %v1090 = vpop.f32.mrb[0].mxu0
        %1091 = vmatprep.mubr.f32.mxu0 0.0
        %1092 = vmatmul.mubr.f32.gmra.mrb[0].mxu0 %v912
        %v1093 = vpop.f32.mrb[0].mxu0
        %v1094 = vadd.f32 0.0, %v1093
        %v1095 = vpop.f32.mrb[0].mxu0
        %1096 = vmatprep.mubr.f32.mxu0 0.0
        %1097 = vmatmul.mubr.f32.gmra.mrb[0].mxu0 %v915
        %v1098 = vpop.f32.mrb[0].mxu0
        %v1099 = vadd.f32 0.0, %v1098
        %v1100 = vpop.f32.mrb[0].mxu0
        %1101 = vmatprep.mubr.f32.mxu0 0.0
        %1102 = vmatmul.mubr.f32.gmra.mrb[0].mxu0 %v918
        %v1103 = vpop.f32.mrb[0].mxu0
        %v1104 = vadd.f32 0.0, %v1103
        %v1105 = vpop.f32.mrb[0].mxu0
        %1106 = vmatprep.mubr.f32.mxu0 0.0
        %1107 = vmatmul.mubr.f32.gmra.mrb[0].mxu0 %v921
        %v1108 = vpop.f32.mrb[0].mxu0
        %v1109 = vadd.f32 0.0, %v1108
        %v1110 = vpop.f32.mrb[0].mxu0
        %1111 = vmatprep.mubr.f32.mxu0 0.0
        %1112 = vmatmul.mubr.f32.gmra.mrb[0].mxu0 %v924
        %v1113 = vpop.f32.mrb[0].mxu0
        %v1114 = vadd.f32 0.0, %v1113
        %v1115 = vpop.f32.mrb[0].mxu0
        %1116 = vmatprep.mubr.f32.mxu0 0.0
        %1117 = vmatmul.mubr.f32.gmra.mrb[0].mxu0 %v927
        %v1118 = vpop.f32.mrb[0].mxu0
        %v1119 = vadd.f32 0.0, %v1118
        %v1120 = vpop.f32.mrb[0].mxu0
        %1121 = vmatprep.mubr.f32.mxu0 0.0
        %1122 = vmatmul.mubr.f32.gmra.mrb[0].mxu0 %v930
        %v1123 = vpop.f32.mrb[0].mxu0
        %v1124 = vadd.f32 0.0, %v1123
        %v1125 = vpop.f32.mrb[0].mxu0
        %1126 = vmatprep.mubr.f32.mxu0 0.0
        %1127 = vmatmul.mubr.f32.gmra.mrb[0].mxu0 %v933
        %v1128 = vpop.f32.mrb[0].mxu0
        %v1129 = vadd.f32 0.0, %v1128
        %v1130 = vpop.f32.mrb[0].mxu0
        %1131 = vmatprep.mubr.f32.mxu0 0.0
        %1132 = vmatmul.mubr.f32.gmra.mrb[0].mxu0 %v936
        %v1133 = vpop.f32.mrb[0].mxu0
        %v1134 = vadd.f32 0.0, %v1133
        %v1135 = vpop.f32.mrb[0].mxu0
        %1136 = vmatprep.mubr.f32.mxu0 0.0
        %1137 = vmatmul.mubr.f32.gmra.mrb[0].mxu0 %v939
        %v1138 = vpop.f32.mrb[0].mxu0
        %v1139 = vadd.f32 0.0, %v1138
        %v1140 = vpop.f32.mrb[0].mxu0
        %1141 = vmatprep.mubr.f32.mxu0 0.0
        %1142 = vmatmul.mubr.f32.gmra.mrb[0].mxu0 %v942
        %v1143 = vpop.f32.mrb[0].mxu0
        %v1144 = vadd.f32 0.0, %v1143
        %v1145 = vpop.f32.mrb[0].mxu0
        %1146 = vmatprep.mubr.f32.mxu0 0.0
        %1147 = vmatmul.mubr.f32.gmra.mrb[0].mxu0 %v945
        %v1148 = vpop.f32.mrb[0].mxu0
        %v1149 = vadd.f32 0.0, %v1148
        %v1150 = vpop.f32.mrb[0].mxu0
        %1151 = vmatprep.mubr.f32.mxu0 0.0
        %1152 = vmatmul.mubr.f32.gmra.mrb[0].mxu0 %v948
        %v1153 = vpop.f32.mrb[0].mxu0
        %v1154 = vadd.f32 0.0, %v1153
        %v1155 = vpop.f32.mrb[0].mxu0
        %1156 = vmatprep.mubr.f32.mxu0 0.0
        %1157 = vmatmul.mubr.f32.gmra.mrb[0].mxu0 %v951
        %v1158 = vpop.f32.mrb[0].mxu0
        %v1159 = vadd.f32 0.0, %v1158
        %v1160 = vpop.f32.mrb[0].mxu0
        %1161 = vmatprep.mubr.f32.mxu0 0.0
        %1162 = vmatmul.mubr.f32.gmra.mrb[0].mxu0 %v954
        %v1163 = vpop.f32.mrb[0].mxu0
        %v1164 = vadd.f32 0.0, %v1163
        %v1165 = vpop.f32.mrb[0].mxu0
        %1166 = vmatprep.mubr.f32.mxu0 0.0
        %1167 = vmatmul.mubr.f32.gmra.mrb[0].mxu0 %v957
        %v1168 = vpop.f32.mrb[0].mxu0
        %v1169 = vadd.f32 0.0, %v1168
        %v1170 = vpop.f32.mrb[0].mxu0
        %1171 = vmatprep.mubr.f32.mxu0 0.0
        %1172 = vmatmul.mubr.f32.gmra.mrb[0].mxu0 %v960
        %v1173 = vpop.f32.mrb[0].mxu0
        %v1174 = vadd.f32 0.0, %v1173
        %v1175 = vpop.f32.mrb[0].mxu0
        %1176 = vmatprep.mubr.f32.mxu0 0.0
        %1177 = vmatmul.mubr.f32.gmra.mrb[0].mxu0 %v963
        %v1178 = vpop.f32.mrb[0].mxu0
        %v1179 = vadd.f32 0.0, %v1178
        %v1180 = vpop.f32.mrb[0].mxu0
        %1181 = vmatprep.mubr.f32.mxu0 0.0
        %1182 = vmatmul.mubr.f32.gmra.mrb[0].mxu0 %v966
        %v1183 = vpop.f32.mrb[0].mxu0
        %v1184 = vadd.f32 0.0, %v1183
        %v1185 = vpop.f32.mrb[0].mxu0
        %1186 = vmatprep.mubr.f32.mxu0 0.0
        %1187 = vmatmul.mubr.f32.gmra.mrb[0].mxu0 %v969
        %v1188 = vpop.f32.mrb[0].mxu0
        %v1189 = vadd.f32 0.0, %v1188
        %v1190 = vpop.f32.mrb[0].mxu0
        %1191 = vmatprep.mubr.f32.mxu0 0.0
        %1192 = vmatmul.mubr.f32.gmra.mrb[0].mxu0 %v972
        %v1193 = vpop.f32.mrb[0].mxu0
        %v1194 = vadd.f32 0.0, %v1193
        %v1195 = vpop.f32.mrb[0].mxu0
        %1196 = vmatprep.mubr.f32.mxu0 0.0
        %1197 = vmatmul.mubr.f32.gmra.mrb[0].mxu0 %v975
        %v1198 = vpop.f32.mrb[0].mxu0
        %v1199 = vadd.f32 0.0, %v1198
        %v1200 = vpop.f32.mrb[0].mxu0
        %1201 = vmatprep.mubr.f32.mxu0 0.0
        %1202 = vmatmul.mubr.f32.gmra.mrb[0].mxu0 %v978
        %v1203 = vpop.f32.mrb[0].mxu0
        %v1204 = vadd.f32 0.0, %v1203
        %v1205 = vpop.f32.mrb[0].mxu0
        %1206 = vmatprep.mubr.f32.mxu0 0.0
        %1207 = vmatmul.mubr.f32.gmra.mrb[0].mxu0 %v981
        %v1208 = vpop.f32.mrb[0].mxu0
        %v1209 = vadd.f32 0.0, %v1208
        %v1210 = vpop.f32.mrb[0].mxu0
        %1211 = vdwg.mxu0
        %v1213 = vsel %vm886, %v843, 0
        %v1216 = vsel %vm886, %v844, 0
        %v1219 = vsel %vm983, %v880, 0
        %1221 = vmatprep.subr.mxu0 0.0
        %1222 = vmatpush1.msra.mxu0 %v879
        %1223 = vmatprep.subr.mxu0 0.0
        %1224 = vmatpush1.msra.mxu0 %v1219
        %1225 = vmatprep.subr.mxu0 0.0
        %1226 = vmatpush1.msra.mxu0 0.0
        %1227 = vmatprep.subr.mxu0 0.0
        %1228 = vmatpush1.msra.mxu0 0.0
        %1229 = vmatprep.subr.mxu0 0.0
        %1230 = vmatpush1.msra.mxu0 0.0
        %1231 = vmatprep.subr.mxu0 0.0
        %1232 = vmatpush1.msra.mxu0 0.0
        %1233 = vmatprep.subr.mxu0 0.0
        %1234 = vmatpush1.msra.mxu0 0.0
        %1235 = vmatprep.subr.mxu0 0.0
        %1236 = vmatpush1.msra.mxu0 0.0
        %1237 = vmatprep.subr.mxu0 0.0
        %1238 = vmatpush1.msra.mxu0 0.0
        %1239 = vmatprep.subr.mxu0 0.0
        %1240 = vmatpush1.msra.mxu0 0.0
        %1241 = vmatprep.subr.mxu0 0.0
        %1242 = vmatpush1.msra.mxu0 0.0
        %1243 = vmatprep.subr.mxu0 0.0
        %1244 = vmatpush1.msra.mxu0 0.0
        %1245 = vmatprep.subr.mxu0 0.0
        %1246 = vmatpush1.msra.mxu0 0.0
        %1247 = vmatprep.subr.mxu0 0.0
        %1248 = vmatpush1.msra.mxu0 0.0
        %1249 = vmatprep.subr.mxu0 0.0
        %1250 = vmatpush1.msra.mxu0 0.0
        %1251 = vmatprep.subr.mxu0 0.0
        %1252 = vmatpush1.msra.mxu0 0.0
        %1253 = vmatprep.subr.mxu0 0.0
        %1254 = vmatpush1.msra.mxu0 0.0
        %1255 = vmatprep.subr.mxu0 0.0
        %1256 = vmatpush1.msra.mxu0 0.0
        %1257 = vmatprep.subr.mxu0 0.0
        %1258 = vmatpush1.msra.mxu0 0.0
        %1259 = vmatprep.subr.mxu0 0.0
        %1260 = vmatpush1.msra.mxu0 0.0
        %1261 = vmatprep.subr.mxu0 0.0
        %1262 = vmatpush1.msra.mxu0 0.0
        %1263 = vmatprep.subr.mxu0 0.0
        %1264 = vmatpush1.msra.mxu0 0.0
        %1265 = vmatprep.subr.mxu0 0.0
        %1266 = vmatpush1.msra.mxu0 0.0
        %1267 = vmatprep.subr.mxu0 0.0
        %1268 = vmatpush1.msra.mxu0 0.0
        %1269 = vmatprep.subr.mxu0 0.0
        %1270 = vmatpush1.msra.mxu0 0.0
        %1271 = vmatprep.subr.mxu0 0.0
        %1272 = vmatpush1.msra.mxu0 0.0
        %1273 = vmatprep.subr.mxu0 0.0
        %1274 = vmatpush1.msra.mxu0 0.0
        %1275 = vmatprep.subr.mxu0 0.0
        %1276 = vmatpush1.msra.mxu0 0.0
        %1277 = vmatprep.subr.mxu0 0.0
        %1278 = vmatpush1.msra.mxu0 0.0
        %1279 = vmatprep.subr.mxu0 0.0
        %1280 = vmatpush1.msra.mxu0 0.0
        %1281 = vmatprep.subr.mxu0 0.0
        %1282 = vmatpush1.msra.mxu0 0.0
        %1283 = vmatprep.subr.mxu0 0.0
        %1284 = vmatpush1.msra.mxu0 0.0
        %1285 = vmatprep.mubr.f32.mxu0 0.0
        %1286 = vmatmul.mubr.f32.gmra.mrb[0].mxu0 %v1213
        %v1287 = vpop.f32.mrb[0].mxu0
        %v1288 = vadd.f32 %v1054, %v1287
        %v1289 = vpop.f32.mrb[0].mxu0
        %1290 = vmatprep.mubr.f32.mxu0 0.0
        %1291 = vmatmul.mubr.f32.gmra.mrb[0].mxu0 %v1216
        %v1292 = vpop.f32.mrb[0].mxu0
        %v1293 = vadd.f32 %v1059, %v1292
        %v1294 = vpop.f32.mrb[0].mxu0
        %1295 = vmatprep.mubr.f32.mxu0 0.0
        %1296 = vmatmul.mubr.f32.gmra.mrb[0].mxu0 %v888
        %v1297 = vpop.f32.mrb[0].mxu0
        %v1298 = vadd.f32 %v1064, %v1297
        %v1299 = vpop.f32.mrb[0].mxu0
        %1300 = vmatprep.mubr.f32.mxu0 0.0
        %1301 = vmatmul.mubr.f32.gmra.mrb[0].mxu0 %v891
        %v1302 = vpop.f32.mrb[0].mxu0
        %v1303 = vadd.f32 %v1069, %v1302
        %v1304 = vpop.f32.mrb[0].mxu0
        %1305 = vmatprep.mubr.f32.mxu0 0.0
        %1306 = vmatmul.mubr.f32.gmra.mrb[0].mxu0 %v894
        %v1307 = vpop.f32.mrb[0].mxu0
        %v1308 = vadd.f32 %v1074, %v1307
        %v1309 = vpop.f32.mrb[0].mxu0
        %1310 = vmatprep.mubr.f32.mxu0 0.0
        %1311 = vmatmul.mubr.f32.gmra.mrb[0].mxu0 %v897
        %v1312 = vpop.f32.mrb[0].mxu0
        %v1313 = vadd.f32 %v1079, %v1312
        %v1314 = vpop.f32.mrb[0].mxu0
        %1315 = vmatprep.mubr.f32.mxu0 0.0
        %1316 = vmatmul.mubr.f32.gmra.mrb[0].mxu0 %v900
        %v1317 = vpop.f32.mrb[0].mxu0
        %v1318 = vadd.f32 %v1084, %v1317
        %v1319 = vpop.f32.mrb[0].mxu0
        %1320 = vmatprep.mubr.f32.mxu0 0.0
        %1321 = vmatmul.mubr.f32.gmra.mrb[0].mxu0 %v903
        %v1322 = vpop.f32.mrb[0].mxu0
        %v1323 = vadd.f32 %v1089, %v1322
        %v1324 = vpop.f32.mrb[0].mxu0
        %1325 = vmatprep.mubr.f32.mxu0 0.0
        %1326 = vmatmul.mubr.f32.gmra.mrb[0].mxu0 %v906
        %v1327 = vpop.f32.mrb[0].mxu0
        %v1328 = vadd.f32 %v1094, %v1327
        %v1329 = vpop.f32.mrb[0].mxu0
        %1330 = vmatprep.mubr.f32.mxu0 0.0
        %1331 = vmatmul.mubr.f32.gmra.mrb[0].mxu0 %v909
        %v1332 = vpop.f32.mrb[0].mxu0
        %v1333 = vadd.f32 %v1099, %v1332
        %v1334 = vpop.f32.mrb[0].mxu0
        %1335 = vmatprep.mubr.f32.mxu0 0.0
        %1336 = vmatmul.mubr.f32.gmra.mrb[0].mxu0 %v912
        %v1337 = vpop.f32.mrb[0].mxu0
        %v1338 = vadd.f32 %v1104, %v1337
        %v1339 = vpop.f32.mrb[0].mxu0
        %1340 = vmatprep.mubr.f32.mxu0 0.0
        %1341 = vmatmul.mubr.f32.gmra.mrb[0].mxu0 %v915
        %v1342 = vpop.f32.mrb[0].mxu0
        %v1343 = vadd.f32 %v1109, %v1342
        %v1344 = vpop.f32.mrb[0].mxu0
        %1345 = vmatprep.mubr.f32.mxu0 0.0
        %1346 = vmatmul.mubr.f32.gmra.mrb[0].mxu0 %v918
        %v1347 = vpop.f32.mrb[0].mxu0
        %v1348 = vadd.f32 %v1114, %v1347
        %v1349 = vpop.f32.mrb[0].mxu0
        %1350 = vmatprep.mubr.f32.mxu0 0.0
        %1351 = vmatmul.mubr.f32.gmra.mrb[0].mxu0 %v921
        %v1352 = vpop.f32.mrb[0].mxu0
        %v1353 = vadd.f32 %v1119, %v1352
        %v1354 = vpop.f32.mrb[0].mxu0
        %1355 = vmatprep.mubr.f32.mxu0 0.0
        %1356 = vmatmul.mubr.f32.gmra.mrb[0].mxu0 %v924
        %v1357 = vpop.f32.mrb[0].mxu0
        %v1358 = vadd.f32 %v1124, %v1357
        %v1359 = vpop.f32.mrb[0].mxu0
        %1360 = vmatprep.mubr.f32.mxu0 0.0
        %1361 = vmatmul.mubr.f32.gmra.mrb[0].mxu0 %v927
        %v1362 = vpop.f32.mrb[0].mxu0
        %v1363 = vadd.f32 %v1129, %v1362
        %v1364 = vpop.f32.mrb[0].mxu0
        %1365 = vmatprep.mubr.f32.mxu0 0.0
        %1366 = vmatmul.mubr.f32.gmra.mrb[0].mxu0 %v930
        %v1367 = vpop.f32.mrb[0].mxu0
        %v1368 = vadd.f32 %v1134, %v1367
        %v1369 = vpop.f32.mrb[0].mxu0
        %1370 = vmatprep.mubr.f32.mxu0 0.0
        %1371 = vmatmul.mubr.f32.gmra.mrb[0].mxu0 %v933
        %v1372 = vpop.f32.mrb[0].mxu0
        %v1373 = vadd.f32 %v1139, %v1372
        %v1374 = vpop.f32.mrb[0].mxu0
        %1375 = vmatprep.mubr.f32.mxu0 0.0
        %1376 = vmatmul.mubr.f32.gmra.mrb[0].mxu0 %v936
        %v1377 = vpop.f32.mrb[0].mxu0
        %v1378 = vadd.f32 %v1144, %v1377
        %v1379 = vpop.f32.mrb[0].mxu0
        %1380 = vmatprep.mubr.f32.mxu0 0.0
        %1381 = vmatmul.mubr.f32.gmra.mrb[0].mxu0 %v939
        %v1382 = vpop.f32.mrb[0].mxu0
        %v1383 = vadd.f32 %v1149, %v1382
        %v1384 = vpop.f32.mrb[0].mxu0
        %1385 = vmatprep.mubr.f32.mxu0 0.0
        %1386 = vmatmul.mubr.f32.gmra.mrb[0].mxu0 %v942
        %v1387 = vpop.f32.mrb[0].mxu0
        %v1388 = vadd.f32 %v1154, %v1387
        %v1389 = vpop.f32.mrb[0].mxu0
        %1390 = vmatprep.mubr.f32.mxu0 0.0
        %1391 = vmatmul.mubr.f32.gmra.mrb[0].mxu0 %v945
        %v1392 = vpop.f32.mrb[0].mxu0
        %v1393 = vadd.f32 %v1159, %v1392
        %v1394 = vpop.f32.mrb[0].mxu0
        %1395 = vmatprep.mubr.f32.mxu0 0.0
        %1396 = vmatmul.mubr.f32.gmra.mrb[0].mxu0 %v948
        %v1397 = vpop.f32.mrb[0].mxu0
        %v1398 = vadd.f32 %v1164, %v1397
        %v1399 = vpop.f32.mrb[0].mxu0
        %1400 = vmatprep.mubr.f32.mxu0 0.0
        %1401 = vmatmul.mubr.f32.gmra.mrb[0].mxu0 %v951
        %v1402 = vpop.f32.mrb[0].mxu0
        %v1403 = vadd.f32 %v1169, %v1402
        %v1404 = vpop.f32.mrb[0].mxu0
        %1405 = vmatprep.mubr.f32.mxu0 0.0
        %1406 = vmatmul.mubr.f32.gmra.mrb[0].mxu0 %v954
        %v1407 = vpop.f32.mrb[0].mxu0
        %v1408 = vadd.f32 %v1174, %v1407
        %v1409 = vpop.f32.mrb[0].mxu0
        %1410 = vmatprep.mubr.f32.mxu0 0.0
        %1411 = vmatmul.mubr.f32.gmra.mrb[0].mxu0 %v957
        %v1412 = vpop.f32.mrb[0].mxu0
        %v1413 = vadd.f32 %v1179, %v1412
        %v1414 = vpop.f32.mrb[0].mxu0
        %1415 = vmatprep.mubr.f32.mxu0 0.0
        %1416 = vmatmul.mubr.f32.gmra.mrb[0].mxu0 %v960
        %v1417 = vpop.f32.mrb[0].mxu0
        %v1418 = vadd.f32 %v1184, %v1417
        %v1419 = vpop.f32.mrb[0].mxu0
        %1420 = vmatprep.mubr.f32.mxu0 0.0
        %1421 = vmatmul.mubr.f32.gmra.mrb[0].mxu0 %v963
        %v1422 = vpop.f32.mrb[0].mxu0
        %v1423 = vadd.f32 %v1189, %v1422
        %v1424 = vpop.f32.mrb[0].mxu0
        %1425 = vmatprep.mubr.f32.mxu0 0.0
        %1426 = vmatmul.mubr.f32.gmra.mrb[0].mxu0 %v966
        %v1427 = vpop.f32.mrb[0].mxu0
        %v1428 = vadd.f32 %v1194, %v1427
        %v1429 = vpop.f32.mrb[0].mxu0
        %1430 = vmatprep.mubr.f32.mxu0 0.0
        %1431 = vmatmul.mubr.f32.gmra.mrb[0].mxu0 %v969
        %v1432 = vpop.f32.mrb[0].mxu0
        %v1433 = vadd.f32 %v1199, %v1432
        %v1434 = vpop.f32.mrb[0].mxu0
        %1435 = vmatprep.mubr.f32.mxu0 0.0
        %1436 = vmatmul.mubr.f32.gmra.mrb[0].mxu0 %v972
        %v1437 = vpop.f32.mrb[0].mxu0
        %v1438 = vadd.f32 %v1204, %v1437
        %v1439 = vpop.f32.mrb[0].mxu0
        %1440 = vmatprep.mubr.f32.mxu0 0.0
        %1441 = vmatmul.mubr.f32.gmra.mrb[0].mxu0 %v975
        %v1442 = vpop.f32.mrb[0].mxu0
        %v1443 = vadd.f32 %v1209, %v1442
        %v1444 = vpop.f32.mrb[0].mxu0
        %1445 = vdwg.mxu0
        %s1446 = scalar_lea.vmem %s292, 16
        %v1447 = vld [vmem:[%s1446] sm:$0xff]
        %v1448 = vld [vmem:[%s1446 + $0x8] sm:$0xf]
        %v1450 = vsel %vm983, %v1448, 0
        %1452 = vmatprep.subr.mxu0 0.0
        %1453 = vmatpush1.msra.mxu0 %v1447
        %1454 = vmatprep.subr.mxu0 0.0
        %1455 = vmatpush1.msra.mxu0 %v1450
        %1456 = vmatprep.subr.mxu0 0.0
        %1457 = vmatpush1.msra.mxu0 0.0
        %1458 = vmatprep.subr.mxu0 0.0
        %1459 = vmatpush1.msra.mxu0 0.0
        %1460 = vmatprep.subr.mxu0 0.0
        %1461 = vmatpush1.msra.mxu0 0.0
        %1462 = vmatprep.subr.mxu0 0.0
        %1463 = vmatpush1.msra.mxu0 0.0
        %1464 = vmatprep.subr.mxu0 0.0
        %1465 = vmatpush1.msra.mxu0 0.0
        %1466 = vmatprep.subr.mxu0 0.0
        %1467 = vmatpush1.msra.mxu0 0.0
        %1468 = vmatprep.subr.mxu0 0.0
        %1469 = vmatpush1.msra.mxu0 0.0
        %1470 = vmatprep.subr.mxu0 0.0
        %1471 = vmatpush1.msra.mxu0 0.0
        %1472 = vmatprep.subr.mxu0 0.0
        %1473 = vmatpush1.msra.mxu0 0.0
        %1474 = vmatprep.subr.mxu0 0.0
        %1475 = vmatpush1.msra.mxu0 0.0
        %1476 = vmatprep.subr.mxu0 0.0
        %1477 = vmatpush1.msra.mxu0 0.0
        %1478 = vmatprep.subr.mxu0 0.0
        %1479 = vmatpush1.msra.mxu0 0.0
        %1480 = vmatprep.subr.mxu0 0.0
        %1481 = vmatpush1.msra.mxu0 0.0
        %1482 = vmatprep.subr.mxu0 0.0
        %1483 = vmatpush1.msra.mxu0 0.0
        %1484 = vmatprep.subr.mxu0 0.0
        %1485 = vmatpush1.msra.mxu0 0.0
        %1486 = vmatprep.subr.mxu0 0.0
        %1487 = vmatpush1.msra.mxu0 0.0
        %1488 = vmatprep.subr.mxu0 0.0
        %1489 = vmatpush1.msra.mxu0 0.0
        %1490 = vmatprep.subr.mxu0 0.0
        %1491 = vmatpush1.msra.mxu0 0.0
        %1492 = vmatprep.subr.mxu0 0.0
        %1493 = vmatpush1.msra.mxu0 0.0
        %1494 = vmatprep.subr.mxu0 0.0
        %1495 = vmatpush1.msra.mxu0 0.0
        %1496 = vmatprep.subr.mxu0 0.0
        %1497 = vmatpush1.msra.mxu0 0.0
        %1498 = vmatprep.subr.mxu0 0.0
        %1499 = vmatpush1.msra.mxu0 0.0
        %1500 = vmatprep.subr.mxu0 0.0
        %1501 = vmatpush1.msra.mxu0 0.0
        %1502 = vmatprep.subr.mxu0 0.0
        %1503 = vmatpush1.msra.mxu0 0.0
        %1504 = vmatprep.subr.mxu0 0.0
        %1505 = vmatpush1.msra.mxu0 0.0
        %1506 = vmatprep.subr.mxu0 0.0
        %1507 = vmatpush1.msra.mxu0 0.0
        %1508 = vmatprep.subr.mxu0 0.0
        %1509 = vmatpush1.msra.mxu0 0.0
        %1510 = vmatprep.subr.mxu0 0.0
        %1511 = vmatpush1.msra.mxu0 0.0
        %1512 = vmatprep.subr.mxu0 0.0
        %1513 = vmatpush1.msra.mxu0 0.0
        %1514 = vmatprep.subr.mxu0 0.0
        %1515 = vmatpush1.msra.mxu0 0.0
        %1516 = vmatprep.mubr.f32.mxu0 0.0
        %1517 = vmatmul.mubr.f32.gmra.mrb[0].mxu0 %v888
        %v1518 = vpop.f32.mrb[0].mxu0
        %v1519 = vadd.f32 0.0, %v1518
        %v1520 = vpop.f32.mrb[0].mxu0
        %1521 = vmatprep.mubr.f32.mxu0 0.0
        %1522 = vmatmul.mubr.f32.gmra.mrb[0].mxu0 %v891
        %v1523 = vpop.f32.mrb[0].mxu0
        %v1524 = vadd.f32 0.0, %v1523
        %v1525 = vpop.f32.mrb[0].mxu0
        %1526 = vmatprep.mubr.f32.mxu0 0.0
        %1527 = vmatmul.mubr.f32.gmra.mrb[0].mxu0 %v894
        %v1528 = vpop.f32.mrb[0].mxu0
        %v1529 = vadd.f32 0.0, %v1528
        %v1530 = vpop.f32.mrb[0].mxu0
        %1531 = vmatprep.mubr.f32.mxu0 0.0
        %1532 = vmatmul.mubr.f32.gmra.mrb[0].mxu0 %v897
        %v1533 = vpop.f32.mrb[0].mxu0
        %v1534 = vadd.f32 0.0, %v1533
        %v1535 = vpop.f32.mrb[0].mxu0
        %1536 = vmatprep.mubr.f32.mxu0 0.0
        %1537 = vmatmul.mubr.f32.gmra.mrb[0].mxu0 %v900
        %v1538 = vpop.f32.mrb[0].mxu0
        %v1539 = vadd.f32 0.0, %v1538
        %v1540 = vpop.f32.mrb[0].mxu0
        %1541 = vmatprep.mubr.f32.mxu0 0.0
        %1542 = vmatmul.mubr.f32.gmra.mrb[0].mxu0 %v903
        %v1543 = vpop.f32.mrb[0].mxu0
        %v1544 = vadd.f32 0.0, %v1543
        %v1545 = vpop.f32.mrb[0].mxu0
        %1546 = vmatprep.mubr.f32.mxu0 0.0
        %1547 = vmatmul.mubr.f32.gmra.mrb[0].mxu0 %v906
        %v1548 = vpop.f32.mrb[0].mxu0
        %v1549 = vadd.f32 0.0, %v1548
        %v1550 = vpop.f32.mrb[0].mxu0
        %1551 = vmatprep.mubr.f32.mxu0 0.0
        %1552 = vmatmul.mubr.f32.gmra.mrb[0].mxu0 %v909
        %v1553 = vpop.f32.mrb[0].mxu0
        %v1554 = vadd.f32 0.0, %v1553
        %v1555 = vpop.f32.mrb[0].mxu0
        %1556 = vmatprep.mubr.f32.mxu0 0.0
        %1557 = vmatmul.mubr.f32.gmra.mrb[0].mxu0 %v912
        %v1558 = vpop.f32.mrb[0].mxu0
        %v1559 = vadd.f32 0.0, %v1558
        %v1560 = vpop.f32.mrb[0].mxu0
        %1561 = vmatprep.mubr.f32.mxu0 0.0
        %1562 = vmatmul.mubr.f32.gmra.mrb[0].mxu0 %v915
        %v1563 = vpop.f32.mrb[0].mxu0
        %v1564 = vadd.f32 0.0, %v1563
        %v1565 = vpop.f32.mrb[0].mxu0
        %1566 = vmatprep.mubr.f32.mxu0 0.0
        %1567 = vmatmul.mubr.f32.gmra.mrb[0].mxu0 %v918
        %v1568 = vpop.f32.mrb[0].mxu0
        %v1569 = vadd.f32 0.0, %v1568
        %v1570 = vpop.f32.mrb[0].mxu0
        %1571 = vmatprep.mubr.f32.mxu0 0.0
        %1572 = vmatmul.mubr.f32.gmra.mrb[0].mxu0 %v921
        %v1573 = vpop.f32.mrb[0].mxu0
        %v1574 = vadd.f32 0.0, %v1573
        %v1575 = vpop.f32.mrb[0].mxu0
        %1576 = vmatprep.mubr.f32.mxu0 0.0
        %1577 = vmatmul.mubr.f32.gmra.mrb[0].mxu0 %v924
        %v1578 = vpop.f32.mrb[0].mxu0
        %v1579 = vadd.f32 0.0, %v1578
        %v1580 = vpop.f32.mrb[0].mxu0
        %1581 = vmatprep.mubr.f32.mxu0 0.0
        %1582 = vmatmul.mubr.f32.gmra.mrb[0].mxu0 %v927
        %v1583 = vpop.f32.mrb[0].mxu0
        %v1584 = vadd.f32 0.0, %v1583
        %v1585 = vpop.f32.mrb[0].mxu0
        %1586 = vmatprep.mubr.f32.mxu0 0.0
        %1587 = vmatmul.mubr.f32.gmra.mrb[0].mxu0 %v930
        %v1588 = vpop.f32.mrb[0].mxu0
        %v1589 = vadd.f32 0.0, %v1588
        %v1590 = vpop.f32.mrb[0].mxu0
        %1591 = vmatprep.mubr.f32.mxu0 0.0
        %1592 = vmatmul.mubr.f32.gmra.mrb[0].mxu0 %v933
        %v1593 = vpop.f32.mrb[0].mxu0
        %v1594 = vadd.f32 0.0, %v1593
        %v1595 = vpop.f32.mrb[0].mxu0
        %1596 = vmatprep.mubr.f32.mxu0 0.0
        %1597 = vmatmul.mubr.f32.gmra.mrb[0].mxu0 %v936
        %v1598 = vpop.f32.mrb[0].mxu0
        %v1599 = vadd.f32 0.0, %v1598
        %v1600 = vpop.f32.mrb[0].mxu0
        %1601 = vmatprep.mubr.f32.mxu0 0.0
        %1602 = vmatmul.mubr.f32.gmra.mrb[0].mxu0 %v939
        %v1603 = vpop.f32.mrb[0].mxu0
        %v1604 = vadd.f32 0.0, %v1603
        %v1605 = vpop.f32.mrb[0].mxu0
        %1606 = vmatprep.mubr.f32.mxu0 0.0
        %1607 = vmatmul.mubr.f32.gmra.mrb[0].mxu0 %v942
        %v1608 = vpop.f32.mrb[0].mxu0
        %v1609 = vadd.f32 0.0, %v1608
        %v1610 = vpop.f32.mrb[0].mxu0
        %1611 = vmatprep.mubr.f32.mxu0 0.0
        %1612 = vmatmul.mubr.f32.gmra.mrb[0].mxu0 %v945
        %v1613 = vpop.f32.mrb[0].mxu0
        %v1614 = vadd.f32 0.0, %v1613
        %v1615 = vpop.f32.mrb[0].mxu0
        %1616 = vmatprep.mubr.f32.mxu0 0.0
        %1617 = vmatmul.mubr.f32.gmra.mrb[0].mxu0 %v948
        %v1618 = vpop.f32.mrb[0].mxu0
        %v1619 = vadd.f32 0.0, %v1618
        %v1620 = vpop.f32.mrb[0].mxu0
        %1621 = vmatprep.mubr.f32.mxu0 0.0
        %1622 = vmatmul.mubr.f32.gmra.mrb[0].mxu0 %v951
        %v1623 = vpop.f32.mrb[0].mxu0
        %v1624 = vadd.f32 0.0, %v1623
        %v1625 = vpop.f32.mrb[0].mxu0
        %1626 = vmatprep.mubr.f32.mxu0 0.0
        %1627 = vmatmul.mubr.f32.gmra.mrb[0].mxu0 %v954
        %v1628 = vpop.f32.mrb[0].mxu0
        %v1629 = vadd.f32 0.0, %v1628
        %v1630 = vpop.f32.mrb[0].mxu0
        %1631 = vmatprep.mubr.f32.mxu0 0.0
        %1632 = vmatmul.mubr.f32.gmra.mrb[0].mxu0 %v957
        %v1633 = vpop.f32.mrb[0].mxu0
        %v1634 = vadd.f32 0.0, %v1633
        %v1635 = vpop.f32.mrb[0].mxu0
        %1636 = vmatprep.mubr.f32.mxu0 0.0
        %1637 = vmatmul.mubr.f32.gmra.mrb[0].mxu0 %v960
        %v1638 = vpop.f32.mrb[0].mxu0
        %v1639 = vadd.f32 0.0, %v1638
        %v1640 = vpop.f32.mrb[0].mxu0
        %1641 = vmatprep.mubr.f32.mxu0 0.0
        %1642 = vmatmul.mubr.f32.gmra.mrb[0].mxu0 %v963
        %v1643 = vpop.f32.mrb[0].mxu0
        %v1644 = vadd.f32 0.0, %v1643
        %v1645 = vpop.f32.mrb[0].mxu0
        %1646 = vmatprep.mubr.f32.mxu0 0.0
        %1647 = vmatmul.mubr.f32.gmra.mrb[0].mxu0 %v966
        %v1648 = vpop.f32.mrb[0].mxu0
        %v1649 = vadd.f32 0.0, %v1648
        %v1650 = vpop.f32.mrb[0].mxu0
        %1651 = vmatprep.mubr.f32.mxu0 0.0
        %1652 = vmatmul.mubr.f32.gmra.mrb[0].mxu0 %v969
        %v1653 = vpop.f32.mrb[0].mxu0
        %v1654 = vadd.f32 0.0, %v1653
        %v1655 = vpop.f32.mrb[0].mxu0
        %1656 = vmatprep.mubr.f32.mxu0 0.0
        %1657 = vmatmul.mubr.f32.gmra.mrb[0].mxu0 %v972
        %v1658 = vpop.f32.mrb[0].mxu0
        %v1659 = vadd.f32 0.0, %v1658
        %v1660 = vpop.f32.mrb[0].mxu0
        %1661 = vmatprep.mubr.f32.mxu0 0.0
        %1662 = vmatmul.mubr.f32.gmra.mrb[0].mxu0 %v975
        %v1663 = vpop.f32.mrb[0].mxu0
        %v1664 = vadd.f32 0.0, %v1663
        %v1665 = vpop.f32.mrb[0].mxu0
        %1666 = vmatprep.mubr.f32.mxu0 0.0
        %1667 = vmatmul.mubr.f32.gmra.mrb[0].mxu0 %v978
        %v1668 = vpop.f32.mrb[0].mxu0
        %v1669 = vadd.f32 0.0, %v1668
        %v1670 = vpop.f32.mrb[0].mxu0
        %1671 = vmatprep.mubr.f32.mxu0 0.0
        %1672 = vmatmul.mubr.f32.gmra.mrb[0].mxu0 %v981
        %v1673 = vpop.f32.mrb[0].mxu0
        %v1674 = vadd.f32 0.0, %v1673
        %v1675 = vpop.f32.mrb[0].mxu0
        %1676 = vdwg.mxu0
        %v1678 = vsel %vm983, %v882, 0
        %1680 = vmatprep.subr.mxu0 0.0
        %1681 = vmatpush1.msra.mxu0 %v881
        %1682 = vmatprep.subr.mxu0 0.0
        %1683 = vmatpush1.msra.mxu0 %v1678
        %1684 = vmatprep.subr.mxu0 0.0
        %1685 = vmatpush1.msra.mxu0 0.0
        %1686 = vmatprep.subr.mxu0 0.0
        %1687 = vmatpush1.msra.mxu0 0.0
        %1688 = vmatprep.subr.mxu0 0.0
        %1689 = vmatpush1.msra.mxu0 0.0
        %1690 = vmatprep.subr.mxu0 0.0
        %1691 = vmatpush1.msra.mxu0 0.0
        %1692 = vmatprep.subr.mxu0 0.0
        %1693 = vmatpush1.msra.mxu0 0.0
        %1694 = vmatprep.subr.mxu0 0.0
        %1695 = vmatpush1.msra.mxu0 0.0
        %1696 = vmatprep.subr.mxu0 0.0
        %1697 = vmatpush1.msra.mxu0 0.0
        %1698 = vmatprep.subr.mxu0 0.0
        %1699 = vmatpush1.msra.mxu0 0.0
        %1700 = vmatprep.subr.mxu0 0.0
        %1701 = vmatpush1.msra.mxu0 0.0
        %1702 = vmatprep.subr.mxu0 0.0
        %1703 = vmatpush1.msra.mxu0 0.0
        %1704 = vmatprep.subr.mxu0 0.0
        %1705 = vmatpush1.msra.mxu0 0.0
        %1706 = vmatprep.subr.mxu0 0.0
        %1707 = vmatpush1.msra.mxu0 0.0
        %1708 = vmatprep.subr.mxu0 0.0
        %1709 = vmatpush1.msra.mxu0 0.0
        %1710 = vmatprep.subr.mxu0 0.0
        %1711 = vmatpush1.msra.mxu0 0.0
        %1712 = vmatprep.subr.mxu0 0.0
        %1713 = vmatpush1.msra.mxu0 0.0
        %1714 = vmatprep.subr.mxu0 0.0
        %1715 = vmatpush1.msra.mxu0 0.0
        %1716 = vmatprep.subr.mxu0 0.0
        %1717 = vmatpush1.msra.mxu0 0.0
        %1718 = vmatprep.subr.mxu0 0.0
        %1719 = vmatpush1.msra.mxu0 0.0
        %1720 = vmatprep.subr.mxu0 0.0
        %1721 = vmatpush1.msra.mxu0 0.0
        %1722 = vmatprep.subr.mxu0 0.0
        %1723 = vmatpush1.msra.mxu0 0.0
        %1724 = vmatprep.subr.mxu0 0.0
        %1725 = vmatpush1.msra.mxu0 0.0
        %1726 = vmatprep.subr.mxu0 0.0
        %1727 = vmatpush1.msra.mxu0 0.0
        %1728 = vmatprep.subr.mxu0 0.0
        %1729 = vmatpush1.msra.mxu0 0.0
        %1730 = vmatprep.subr.mxu0 0.0
        %1731 = vmatpush1.msra.mxu0 0.0
        %1732 = vmatprep.subr.mxu0 0.0
        %1733 = vmatpush1.msra.mxu0 0.0
        %1734 = vmatprep.subr.mxu0 0.0
        %1735 = vmatpush1.msra.mxu0 0.0
        %1736 = vmatprep.subr.mxu0 0.0
        %1737 = vmatpush1.msra.mxu0 0.0
        %1738 = vmatprep.subr.mxu0 0.0
        %1739 = vmatpush1.msra.mxu0 0.0
        %1740 = vmatprep.subr.mxu0 0.0
        %1741 = vmatpush1.msra.mxu0 0.0
        %1742 = vmatprep.subr.mxu0 0.0
        %1743 = vmatpush1.msra.mxu0 0.0
        %1744 = vmatprep.mubr.f32.mxu0 0.0
        %1745 = vmatmul.mubr.f32.gmra.mrb[0].mxu0 %v1213
        %v1746 = vpop.f32.mrb[0].mxu0
        %v1747 = vadd.f32 %v1519, %v1746
        %v1748 = vpop.f32.mrb[0].mxu0
        %1749 = vmatprep.mubr.f32.mxu0 0.0
        %1750 = vmatmul.mubr.f32.gmra.mrb[0].mxu0 %v1216
        %v1751 = vpop.f32.mrb[0].mxu0
        %v1752 = vadd.f32 %v1524, %v1751
        %v1753 = vpop.f32.mrb[0].mxu0
        %1754 = vmatprep.mubr.f32.mxu0 0.0
        %1755 = vmatmul.mubr.f32.gmra.mrb[0].mxu0 %v888
        %v1756 = vpop.f32.mrb[0].mxu0
        %v1757 = vadd.f32 %v1529, %v1756
        %v1758 = vpop.f32.mrb[0].mxu0
        %1759 = vmatprep.mubr.f32.mxu0 0.0
        %1760 = vmatmul.mubr.f32.gmra.mrb[0].mxu0 %v891
        %v1761 = vpop.f32.mrb[0].mxu0
        %v1762 = vadd.f32 %v1534, %v1761
        %v1763 = vpop.f32.mrb[0].mxu0
        %1764 = vmatprep.mubr.f32.mxu0 0.0
        %1765 = vmatmul.mubr.f32.gmra.mrb[0].mxu0 %v894
        %v1766 = vpop.f32.mrb[0].mxu0
        %v1767 = vadd.f32 %v1539, %v1766
        %v1768 = vpop.f32.mrb[0].mxu0
        %1769 = vmatprep.mubr.f32.mxu0 0.0
        %1770 = vmatmul.mubr.f32.gmra.mrb[0].mxu0 %v897
        %v1771 = vpop.f32.mrb[0].mxu0
        %v1772 = vadd.f32 %v1544, %v1771
        %v1773 = vpop.f32.mrb[0].mxu0
        %1774 = vmatprep.mubr.f32.mxu0 0.0
        %1775 = vmatmul.mubr.f32.gmra.mrb[0].mxu0 %v900
        %v1776 = vpop.f32.mrb[0].mxu0
        %v1777 = vadd.f32 %v1549, %v1776
        %v1778 = vpop.f32.mrb[0].mxu0
        %1779 = vmatprep.mubr.f32.mxu0 0.0
        %1780 = vmatmul.mubr.f32.gmra.mrb[0].mxu0 %v903
        %v1781 = vpop.f32.mrb[0].mxu0
        %v1782 = vadd.f32 %v1554, %v1781
        %v1783 = vpop.f32.mrb[0].mxu0
        %1784 = vmatprep.mubr.f32.mxu0 0.0
        %1785 = vmatmul.mubr.f32.gmra.mrb[0].mxu0 %v906
        %v1786 = vpop.f32.mrb[0].mxu0
        %v1787 = vadd.f32 %v1559, %v1786
        %v1788 = vpop.f32.mrb[0].mxu0
        %1789 = vmatprep.mubr.f32.mxu0 0.0
        %1790 = vmatmul.mubr.f32.gmra.mrb[0].mxu0 %v909
        %v1791 = vpop.f32.mrb[0].mxu0
        %v1792 = vadd.f32 %v1564, %v1791
        %v1793 = vpop.f32.mrb[0].mxu0
        %1794 = vmatprep.mubr.f32.mxu0 0.0
        %1795 = vmatmul.mubr.f32.gmra.mrb[0].mxu0 %v912
        %v1796 = vpop.f32.mrb[0].mxu0
        %v1797 = vadd.f32 %v1569, %v1796
        %v1798 = vpop.f32.mrb[0].mxu0
        %1799 = vmatprep.mubr.f32.mxu0 0.0
        %1800 = vmatmul.mubr.f32.gmra.mrb[0].mxu0 %v915
        %v1801 = vpop.f32.mrb[0].mxu0
        %v1802 = vadd.f32 %v1574, %v1801
        %v1803 = vpop.f32.mrb[0].mxu0
        %1804 = vmatprep.mubr.f32.mxu0 0.0
        %1805 = vmatmul.mubr.f32.gmra.mrb[0].mxu0 %v918
        %v1806 = vpop.f32.mrb[0].mxu0
        %v1807 = vadd.f32 %v1579, %v1806
        %v1808 = vpop.f32.mrb[0].mxu0
        %1809 = vmatprep.mubr.f32.mxu0 0.0
        %1810 = vmatmul.mubr.f32.gmra.mrb[0].mxu0 %v921
        %v1811 = vpop.f32.mrb[0].mxu0
        %v1812 = vadd.f32 %v1584, %v1811
        %v1813 = vpop.f32.mrb[0].mxu0
        %1814 = vmatprep.mubr.f32.mxu0 0.0
        %1815 = vmatmul.mubr.f32.gmra.mrb[0].mxu0 %v924
        %v1816 = vpop.f32.mrb[0].mxu0
        %v1817 = vadd.f32 %v1589, %v1816
        %v1818 = vpop.f32.mrb[0].mxu0
        %1819 = vmatprep.mubr.f32.mxu0 0.0
        %1820 = vmatmul.mubr.f32.gmra.mrb[0].mxu0 %v927
        %v1821 = vpop.f32.mrb[0].mxu0
        %v1822 = vadd.f32 %v1594, %v1821
        %v1823 = vpop.f32.mrb[0].mxu0
        %1824 = vmatprep.mubr.f32.mxu0 0.0
        %1825 = vmatmul.mubr.f32.gmra.mrb[0].mxu0 %v930
        %v1826 = vpop.f32.mrb[0].mxu0
        %v1827 = vadd.f32 %v1599, %v1826
        %v1828 = vpop.f32.mrb[0].mxu0
        %1829 = vmatprep.mubr.f32.mxu0 0.0
        %1830 = vmatmul.mubr.f32.gmra.mrb[0].mxu0 %v933
        %v1831 = vpop.f32.mrb[0].mxu0
        %v1832 = vadd.f32 %v1604, %v1831
        %v1833 = vpop.f32.mrb[0].mxu0
        %1834 = vmatprep.mubr.f32.mxu0 0.0
        %1835 = vmatmul.mubr.f32.gmra.mrb[0].mxu0 %v936
        %v1836 = vpop.f32.mrb[0].mxu0
        %v1837 = vadd.f32 %v1609, %v1836
        %v1838 = vpop.f32.mrb[0].mxu0
        %1839 = vmatprep.mubr.f32.mxu0 0.0
        %1840 = vmatmul.mubr.f32.gmra.mrb[0].mxu0 %v939
        %v1841 = vpop.f32.mrb[0].mxu0
        %v1842 = vadd.f32 %v1614, %v1841
        %v1843 = vpop.f32.mrb[0].mxu0
        %1844 = vmatprep.mubr.f32.mxu0 0.0
        %1845 = vmatmul.mubr.f32.gmra.mrb[0].mxu0 %v942
        %v1846 = vpop.f32.mrb[0].mxu0
        %v1847 = vadd.f32 %v1619, %v1846
        %v1848 = vpop.f32.mrb[0].mxu0
        %1849 = vmatprep.mubr.f32.mxu0 0.0
        %1850 = vmatmul.mubr.f32.gmra.mrb[0].mxu0 %v945
        %v1851 = vpop.f32.mrb[0].mxu0
        %v1852 = vadd.f32 %v1624, %v1851
        %v1853 = vpop.f32.mrb[0].mxu0
        %1854 = vmatprep.mubr.f32.mxu0 0.0
        %1855 = vmatmul.mubr.f32.gmra.mrb[0].mxu0 %v948
        %v1856 = vpop.f32.mrb[0].mxu0
        %v1857 = vadd.f32 %v1629, %v1856
        %v1858 = vpop.f32.mrb[0].mxu0
        %1859 = vmatprep.mubr.f32.mxu0 0.0
        %1860 = vmatmul.mubr.f32.gmra.mrb[0].mxu0 %v951
        %v1861 = vpop.f32.mrb[0].mxu0
        %v1862 = vadd.f32 %v1634, %v1861
        %v1863 = vpop.f32.mrb[0].mxu0
        %1864 = vmatprep.mubr.f32.mxu0 0.0
        %1865 = vmatmul.mubr.f32.gmra.mrb[0].mxu0 %v954
        %v1866 = vpop.f32.mrb[0].mxu0
        %v1867 = vadd.f32 %v1639, %v1866
        %v1868 = vpop.f32.mrb[0].mxu0
        %1869 = vmatprep.mubr.f32.mxu0 0.0
        %1870 = vmatmul.mubr.f32.gmra.mrb[0].mxu0 %v957
        %v1871 = vpop.f32.mrb[0].mxu0
        %v1872 = vadd.f32 %v1644, %v1871
        %v1873 = vpop.f32.mrb[0].mxu0
        %1874 = vmatprep.mubr.f32.mxu0 0.0
        %1875 = vmatmul.mubr.f32.gmra.mrb[0].mxu0 %v960
        %v1876 = vpop.f32.mrb[0].mxu0
        %v1877 = vadd.f32 %v1649, %v1876
        %v1878 = vpop.f32.mrb[0].mxu0
        %1879 = vmatprep.mubr.f32.mxu0 0.0
        %1880 = vmatmul.mubr.f32.gmra.mrb[0].mxu0 %v963
        %v1881 = vpop.f32.mrb[0].mxu0
        %v1882 = vadd.f32 %v1654, %v1881
        %v1883 = vpop.f32.mrb[0].mxu0
        %1884 = vmatprep.mubr.f32.mxu0 0.0
        %1885 = vmatmul.mubr.f32.gmra.mrb[0].mxu0 %v966
        %v1886 = vpop.f32.mrb[0].mxu0
        %v1887 = vadd.f32 %v1659, %v1886
        %v1888 = vpop.f32.mrb[0].mxu0
        %1889 = vmatprep.mubr.f32.mxu0 0.0
        %1890 = vmatmul.mubr.f32.gmra.mrb[0].mxu0 %v969
        %v1891 = vpop.f32.mrb[0].mxu0
        %v1892 = vadd.f32 %v1664, %v1891
        %v1893 = vpop.f32.mrb[0].mxu0
        %1894 = vmatprep.mubr.f32.mxu0 0.0
        %1895 = vmatmul.mubr.f32.gmra.mrb[0].mxu0 %v972
        %v1896 = vpop.f32.mrb[0].mxu0
        %v1897 = vadd.f32 %v1669, %v1896
        %v1898 = vpop.f32.mrb[0].mxu0
        %1899 = vmatprep.mubr.f32.mxu0 0.0
        %1900 = vmatmul.mubr.f32.gmra.mrb[0].mxu0 %v975
        %v1901 = vpop.f32.mrb[0].mxu0
        %v1902 = vadd.f32 %v1674, %v1901
        %v1903 = vpop.f32.mrb[0].mxu0
        %1904 = vdwg.mxu0
        %s1905 = scalar_lea.vmem %s288, 32
        %v1906 = vld [vmem:[%s1905] sm:$0xff]
        %v1907 = vld [vmem:[%s1905 + $0x8] sm:$0xf]
        %v1909 = vsel %vm886, %v877, 0
        %v1912 = vsel %vm886, %v878, 0
        %v1915 = vsel %vm983, %v1907, 0
        %1917 = vmatprep.subr.mxu0 0.0
        %1918 = vmatpush1.msra.mxu0 %v1906
        %1919 = vmatprep.subr.mxu0 0.0
        %1920 = vmatpush1.msra.mxu0 %v1915
        %1921 = vmatprep.subr.mxu0 0.0
        %1922 = vmatpush1.msra.mxu0 0.0
        %1923 = vmatprep.subr.mxu0 0.0
        %1924 = vmatpush1.msra.mxu0 0.0
        %1925 = vmatprep.subr.mxu0 0.0
        %1926 = vmatpush1.msra.mxu0 0.0
        %1927 = vmatprep.subr.mxu0 0.0
        %1928 = vmatpush1.msra.mxu0 0.0
        %1929 = vmatprep.subr.mxu0 0.0
        %1930 = vmatpush1.msra.mxu0 0.0
        %1931 = vmatprep.subr.mxu0 0.0
        %1932 = vmatpush1.msra.mxu0 0.0
        %1933 = vmatprep.subr.mxu0 0.0
        %1934 = vmatpush1.msra.mxu0 0.0
        %1935 = vmatprep.subr.mxu0 0.0
        %1936 = vmatpush1.msra.mxu0 0.0
        %1937 = vmatprep.subr.mxu0 0.0
        %1938 = vmatpush1.msra.mxu0 0.0
        %1939 = vmatprep.subr.mxu0 0.0
        %1940 = vmatpush1.msra.mxu0 0.0
        %1941 = vmatprep.subr.mxu0 0.0
        %1942 = vmatpush1.msra.mxu0 0.0
        %1943 = vmatprep.subr.mxu0 0.0
        %1944 = vmatpush1.msra.mxu0 0.0
        %1945 = vmatprep.subr.mxu0 0.0
        %1946 = vmatpush1.msra.mxu0 0.0
        %1947 = vmatprep.subr.mxu0 0.0
        %1948 = vmatpush1.msra.mxu0 0.0
        %1949 = vmatprep.subr.mxu0 0.0
        %1950 = vmatpush1.msra.mxu0 0.0
        %1951 = vmatprep.subr.mxu0 0.0
        %1952 = vmatpush1.msra.mxu0 0.0
        %1953 = vmatprep.subr.mxu0 0.0
        %1954 = vmatpush1.msra.mxu0 0.0
        %1955 = vmatprep.subr.mxu0 0.0
        %1956 = vmatpush1.msra.mxu0 0.0
        %1957 = vmatprep.subr.mxu0 0.0
        %1958 = vmatpush1.msra.mxu0 0.0
        %1959 = vmatprep.subr.mxu0 0.0
        %1960 = vmatpush1.msra.mxu0 0.0
        %1961 = vmatprep.subr.mxu0 0.0
        %1962 = vmatpush1.msra.mxu0 0.0
        %1963 = vmatprep.subr.mxu0 0.0
        %1964 = vmatpush1.msra.mxu0 0.0
        %1965 = vmatprep.subr.mxu0 0.0
        %1966 = vmatpush1.msra.mxu0 0.0
        %1967 = vmatprep.subr.mxu0 0.0
        %1968 = vmatpush1.msra.mxu0 0.0
        %1969 = vmatprep.subr.mxu0 0.0
        %1970 = vmatpush1.msra.mxu0 0.0
        %1971 = vmatprep.subr.mxu0 0.0
        %1972 = vmatpush1.msra.mxu0 0.0
        %1973 = vmatprep.subr.mxu0 0.0
        %1974 = vmatpush1.msra.mxu0 0.0
        %1975 = vmatprep.subr.mxu0 0.0
        %1976 = vmatpush1.msra.mxu0 0.0
        %1977 = vmatprep.subr.mxu0 0.0
        %1978 = vmatpush1.msra.mxu0 0.0
        %1979 = vmatprep.subr.mxu0 0.0
        %1980 = vmatpush1.msra.mxu0 0.0
        %1981 = vmatprep.mubr.f32.mxu0 0.0
        %1982 = vmatmul.mubr.f32.gmra.mrb[0].mxu0 %v894
        %v1983 = vpop.f32.mrb[0].mxu0
        %v1984 = vadd.f32 0.0, %v1983
        %v1985 = vpop.f32.mrb[0].mxu0
        %1986 = vmatprep.mubr.f32.mxu0 0.0
        %1987 = vmatmul.mubr.f32.gmra.mrb[0].mxu0 %v897
        %v1988 = vpop.f32.mrb[0].mxu0
        %v1989 = vadd.f32 0.0, %v1988
        %v1990 = vpop.f32.mrb[0].mxu0
        %1991 = vmatprep.mubr.f32.mxu0 0.0
        %1992 = vmatmul.mubr.f32.gmra.mrb[0].mxu0 %v900
        %v1993 = vpop.f32.mrb[0].mxu0
        %v1994 = vadd.f32 0.0, %v1993
        %v1995 = vpop.f32.mrb[0].mxu0
        %1996 = vmatprep.mubr.f32.mxu0 0.0
        %1997 = vmatmul.mubr.f32.gmra.mrb[0].mxu0 %v903
        %v1998 = vpop.f32.mrb[0].mxu0
        %v1999 = vadd.f32 0.0, %v1998
        %v2000 = vpop.f32.mrb[0].mxu0
        %2001 = vmatprep.mubr.f32.mxu0 0.0
        %2002 = vmatmul.mubr.f32.gmra.mrb[0].mxu0 %v906
        %v2003 = vpop.f32.mrb[0].mxu0
        %v2004 = vadd.f32 0.0, %v2003
        %v2005 = vpop.f32.mrb[0].mxu0
        %2006 = vmatprep.mubr.f32.mxu0 0.0
        %2007 = vmatmul.mubr.f32.gmra.mrb[0].mxu0 %v909
        %v2008 = vpop.f32.mrb[0].mxu0
        %v2009 = vadd.f32 0.0, %v2008
        %v2010 = vpop.f32.mrb[0].mxu0
        %2011 = vmatprep.mubr.f32.mxu0 0.0
        %2012 = vmatmul.mubr.f32.gmra.mrb[0].mxu0 %v912
        %v2013 = vpop.f32.mrb[0].mxu0
        %v2014 = vadd.f32 0.0, %v2013
        %v2015 = vpop.f32.mrb[0].mxu0
        %2016 = vmatprep.mubr.f32.mxu0 0.0
        %2017 = vmatmul.mubr.f32.gmra.mrb[0].mxu0 %v915
        %v2018 = vpop.f32.mrb[0].mxu0
        %v2019 = vadd.f32 0.0, %v2018
        %v2020 = vpop.f32.mrb[0].mxu0
        %2021 = vmatprep.mubr.f32.mxu0 0.0
        %2022 = vmatmul.mubr.f32.gmra.mrb[0].mxu0 %v918
        %v2023 = vpop.f32.mrb[0].mxu0
        %v2024 = vadd.f32 0.0, %v2023
        %v2025 = vpop.f32.mrb[0].mxu0
        %2026 = vmatprep.mubr.f32.mxu0 0.0
        %2027 = vmatmul.mubr.f32.gmra.mrb[0].mxu0 %v921
        %v2028 = vpop.f32.mrb[0].mxu0
        %v2029 = vadd.f32 0.0, %v2028
        %v2030 = vpop.f32.mrb[0].mxu0
        %2031 = vmatprep.mubr.f32.mxu0 0.0
        %2032 = vmatmul.mubr.f32.gmra.mrb[0].mxu0 %v924
        %v2033 = vpop.f32.mrb[0].mxu0
        %v2034 = vadd.f32 0.0, %v2033
        %v2035 = vpop.f32.mrb[0].mxu0
        %2036 = vmatprep.mubr.f32.mxu0 0.0
        %2037 = vmatmul.mubr.f32.gmra.mrb[0].mxu0 %v927
        %v2038 = vpop.f32.mrb[0].mxu0
        %v2039 = vadd.f32 0.0, %v2038
        %v2040 = vpop.f32.mrb[0].mxu0
        %2041 = vmatprep.mubr.f32.mxu0 0.0
        %2042 = vmatmul.mubr.f32.gmra.mrb[0].mxu0 %v930
        %v2043 = vpop.f32.mrb[0].mxu0
        %v2044 = vadd.f32 0.0, %v2043
        %v2045 = vpop.f32.mrb[0].mxu0
        %2046 = vmatprep.mubr.f32.mxu0 0.0
        %2047 = vmatmul.mubr.f32.gmra.mrb[0].mxu0 %v933
        %v2048 = vpop.f32.mrb[0].mxu0
        %v2049 = vadd.f32 0.0, %v2048
        %v2050 = vpop.f32.mrb[0].mxu0
        %2051 = vmatprep.mubr.f32.mxu0 0.0
        %2052 = vmatmul.mubr.f32.gmra.mrb[0].mxu0 %v936
        %v2053 = vpop.f32.mrb[0].mxu0
        %v2054 = vadd.f32 0.0, %v2053
        %v2055 = vpop.f32.mrb[0].mxu0
        %2056 = vmatprep.mubr.f32.mxu0 0.0
        %2057 = vmatmul.mubr.f32.gmra.mrb[0].mxu0 %v939
        %v2058 = vpop.f32.mrb[0].mxu0
        %v2059 = vadd.f32 0.0, %v2058
        %v2060 = vpop.f32.mrb[0].mxu0
        %2061 = vmatprep.mubr.f32.mxu0 0.0
        %2062 = vmatmul.mubr.f32.gmra.mrb[0].mxu0 %v942
        %v2063 = vpop.f32.mrb[0].mxu0
        %v2064 = vadd.f32 0.0, %v2063
        %v2065 = vpop.f32.mrb[0].mxu0
        %2066 = vmatprep.mubr.f32.mxu0 0.0
        %2067 = vmatmul.mubr.f32.gmra.mrb[0].mxu0 %v945
        %v2068 = vpop.f32.mrb[0].mxu0
        %v2069 = vadd.f32 0.0, %v2068
        %v2070 = vpop.f32.mrb[0].mxu0
        %2071 = vmatprep.mubr.f32.mxu0 0.0
        %2072 = vmatmul.mubr.f32.gmra.mrb[0].mxu0 %v948
        %v2073 = vpop.f32.mrb[0].mxu0
        %v2074 = vadd.f32 0.0, %v2073
        %v2075 = vpop.f32.mrb[0].mxu0
        %2076 = vmatprep.mubr.f32.mxu0 0.0
        %2077 = vmatmul.mubr.f32.gmra.mrb[0].mxu0 %v951
        %v2078 = vpop.f32.mrb[0].mxu0
        %v2079 = vadd.f32 0.0, %v2078
        %v2080 = vpop.f32.mrb[0].mxu0
        %2081 = vmatprep.mubr.f32.mxu0 0.0
        %2082 = vmatmul.mubr.f32.gmra.mrb[0].mxu0 %v954
        %v2083 = vpop.f32.mrb[0].mxu0
        %v2084 = vadd.f32 0.0, %v2083
        %v2085 = vpop.f32.mrb[0].mxu0
        %2086 = vmatprep.mubr.f32.mxu0 0.0
        %2087 = vmatmul.mubr.f32.gmra.mrb[0].mxu0 %v957
        %v2088 = vpop.f32.mrb[0].mxu0
        %v2089 = vadd.f32 0.0, %v2088
        %v2090 = vpop.f32.mrb[0].mxu0
        %2091 = vmatprep.mubr.f32.mxu0 0.0
        %2092 = vmatmul.mubr.f32.gmra.mrb[0].mxu0 %v960
        %v2093 = vpop.f32.mrb[0].mxu0
        %v2094 = vadd.f32 0.0, %v2093
        %v2095 = vpop.f32.mrb[0].mxu0
        %2096 = vmatprep.mubr.f32.mxu0 0.0
        %2097 = vmatmul.mubr.f32.gmra.mrb[0].mxu0 %v963
        %v2098 = vpop.f32.mrb[0].mxu0
        %v2099 = vadd.f32 0.0, %v2098
        %v2100 = vpop.f32.mrb[0].mxu0
        %2101 = vmatprep.mubr.f32.mxu0 0.0
        %2102 = vmatmul.mubr.f32.gmra.mrb[0].mxu0 %v966
        %v2103 = vpop.f32.mrb[0].mxu0
        %v2104 = vadd.f32 0.0, %v2103
        %v2105 = vpop.f32.mrb[0].mxu0
        %2106 = vmatprep.mubr.f32.mxu0 0.0
        %2107 = vmatmul.mubr.f32.gmra.mrb[0].mxu0 %v969
        %v2108 = vpop.f32.mrb[0].mxu0
        %v2109 = vadd.f32 0.0, %v2108
        %v2110 = vpop.f32.mrb[0].mxu0
        %2111 = vmatprep.mubr.f32.mxu0 0.0
        %2112 = vmatmul.mubr.f32.gmra.mrb[0].mxu0 %v972
        %v2113 = vpop.f32.mrb[0].mxu0
        %v2114 = vadd.f32 0.0, %v2113
        %v2115 = vpop.f32.mrb[0].mxu0
        %2116 = vmatprep.mubr.f32.mxu0 0.0
        %2117 = vmatmul.mubr.f32.gmra.mrb[0].mxu0 %v975
        %v2118 = vpop.f32.mrb[0].mxu0
        %v2119 = vadd.f32 0.0, %v2118
        %v2120 = vpop.f32.mrb[0].mxu0
        %2121 = vmatprep.mubr.f32.mxu0 0.0
        %2122 = vmatmul.mubr.f32.gmra.mrb[0].mxu0 %v978
        %v2123 = vpop.f32.mrb[0].mxu0
        %v2124 = vadd.f32 0.0, %v2123
        %v2125 = vpop.f32.mrb[0].mxu0
        %2126 = vmatprep.mubr.f32.mxu0 0.0
        %2127 = vmatmul.mubr.f32.gmra.mrb[0].mxu0 %v981
        %v2128 = vpop.f32.mrb[0].mxu0
        %v2129 = vadd.f32 0.0, %v2128
        %v2130 = vpop.f32.mrb[0].mxu0
        %2131 = vmatprep.mubr.f32.mxu0 0.0
        %2132 = vmatmul.mubr.f32.gmra.mrb[0].mxu0 %v1909
        %v2133 = vpop.f32.mrb[0].mxu0
        %v2134 = vadd.f32 0.0, %v2133
        %v2135 = vpop.f32.mrb[0].mxu0
        %2136 = vmatprep.mubr.f32.mxu0 0.0
        %2137 = vmatmul.mubr.f32.gmra.mrb[0].mxu0 %v1912
        %v2138 = vpop.f32.mrb[0].mxu0
        %v2139 = vadd.f32 0.0, %v2138
        %v2140 = vpop.f32.mrb[0].mxu0
        %2141 = vdwg.mxu0
        %v2142 = vadd.f32 %v1288, %v1984
        %v2143 = vadd.f32 %v1293, %v1989
        %v2144 = vadd.f32 %v1298, %v1994
        %v2145 = vadd.f32 %v1303, %v1999
        %v2146 = vadd.f32 %v1308, %v2004
        %v2147 = vadd.f32 %v1313, %v2009
        %v2148 = vadd.f32 %v1318, %v2014
        %v2149 = vadd.f32 %v1323, %v2019
        %v2150 = vadd.f32 %v1328, %v2024
        %v2151 = vadd.f32 %v1333, %v2029
        %v2152 = vadd.f32 %v1338, %v2034
        %v2153 = vadd.f32 %v1343, %v2039
        %v2154 = vadd.f32 %v1348, %v2044
        %v2155 = vadd.f32 %v1353, %v2049
        %v2156 = vadd.f32 %v1358, %v2054
        %v2157 = vadd.f32 %v1363, %v2059
        %v2158 = vadd.f32 %v1368, %v2064
        %v2159 = vadd.f32 %v1373, %v2069
        %v2160 = vadd.f32 %v1378, %v2074
        %v2161 = vadd.f32 %v1383, %v2079
        %v2162 = vadd.f32 %v1388, %v2084
        %v2163 = vadd.f32 %v1393, %v2089
        %v2164 = vadd.f32 %v1398, %v2094
        %v2165 = vadd.f32 %v1403, %v2099
        %v2166 = vadd.f32 %v1408, %v2104
        %v2167 = vadd.f32 %v1413, %v2109
        %v2168 = vadd.f32 %v1418, %v2114
        %v2169 = vadd.f32 %v1423, %v2119
        %v2170 = vadd.f32 %v1428, %v2124
        %v2171 = vadd.f32 %v1433, %v2129
        %v2172 = vadd.f32 %v1438, %v2134
        %v2173 = vadd.f32 %v1443, %v2139
        %s2174 = scalar_lea.vmem %s292, 32
        %v2175 = vld [vmem:[%s2174] sm:$0xff]
        %v2176 = vld [vmem:[%s2174 + $0x8] sm:$0xf]
        %v2178 = vsel %vm983, %v2176, 0
        %2180 = vmatprep.subr.mxu0 0.0
        %2181 = vmatpush1.msra.mxu0 %v2175
        %2182 = vmatprep.subr.mxu0 0.0
        %2183 = vmatpush1.msra.mxu0 %v2178
        %2184 = vmatprep.subr.mxu0 0.0
        %2185 = vmatpush1.msra.mxu0 0.0
        %2186 = vmatprep.subr.mxu0 0.0
        %2187 = vmatpush1.msra.mxu0 0.0
        %2188 = vmatprep.subr.mxu0 0.0
        %2189 = vmatpush1.msra.mxu0 0.0
        %2190 = vmatprep.subr.mxu0 0.0
        %2191 = vmatpush1.msra.mxu0 0.0
        %2192 = vmatprep.subr.mxu0 0.0
        %2193 = vmatpush1.msra.mxu0 0.0
        %2194 = vmatprep.subr.mxu0 0.0
        %2195 = vmatpush1.msra.mxu0 0.0
        %2196 = vmatprep.subr.mxu0 0.0
        %2197 = vmatpush1.msra.mxu0 0.0
        %2198 = vmatprep.subr.mxu0 0.0
        %2199 = vmatpush1.msra.mxu0 0.0
        %2200 = vmatprep.subr.mxu0 0.0
        %2201 = vmatpush1.msra.mxu0 0.0
        %2202 = vmatprep.subr.mxu0 0.0
        %2203 = vmatpush1.msra.mxu0 0.0
        %2204 = vmatprep.subr.mxu0 0.0
        %2205 = vmatpush1.msra.mxu0 0.0
        %2206 = vmatprep.subr.mxu0 0.0
        %2207 = vmatpush1.msra.mxu0 0.0
        %2208 = vmatprep.subr.mxu0 0.0
        %2209 = vmatpush1.msra.mxu0 0.0
        %2210 = vmatprep.subr.mxu0 0.0
        %2211 = vmatpush1.msra.mxu0 0.0
        %2212 = vmatprep.subr.mxu0 0.0
        %2213 = vmatpush1.msra.mxu0 0.0
        %2214 = vmatprep.subr.mxu0 0.0
        %2215 = vmatpush1.msra.mxu0 0.0
        %2216 = vmatprep.subr.mxu0 0.0
        %2217 = vmatpush1.msra.mxu0 0.0
        %2218 = vmatprep.subr.mxu0 0.0
        %2219 = vmatpush1.msra.mxu0 0.0
        %2220 = vmatprep.subr.mxu0 0.0
        %2221 = vmatpush1.msra.mxu0 0.0
        %2222 = vmatprep.subr.mxu0 0.0
        %2223 = vmatpush1.msra.mxu0 0.0
        %2224 = vmatprep.subr.mxu0 0.0
        %2225 = vmatpush1.msra.mxu0 0.0
        %2226 = vmatprep.subr.mxu0 0.0
        %2227 = vmatpush1.msra.mxu0 0.0
        %2228 = vmatprep.subr.mxu0 0.0
        %2229 = vmatpush1.msra.mxu0 0.0
        %2230 = vmatprep.subr.mxu0 0.0
        %2231 = vmatpush1.msra.mxu0 0.0
        %2232 = vmatprep.subr.mxu0 0.0
        %2233 = vmatpush1.msra.mxu0 0.0
        %2234 = vmatprep.subr.mxu0 0.0
        %2235 = vmatpush1.msra.mxu0 0.0
        %2236 = vmatprep.subr.mxu0 0.0
        %2237 = vmatpush1.msra.mxu0 0.0
        %2238 = vmatprep.subr.mxu0 0.0
        %2239 = vmatpush1.msra.mxu0 0.0
        %2240 = vmatprep.subr.mxu0 0.0
        %2241 = vmatpush1.msra.mxu0 0.0
        %2242 = vmatprep.subr.mxu0 0.0
        %2243 = vmatpush1.msra.mxu0 0.0
        %2244 = vmatprep.mubr.f32.mxu0 0.0
        %2245 = vmatmul.mubr.f32.gmra.mrb[0].mxu0 %v894
        %v2246 = vpop.f32.mrb[0].mxu0
        %v2247 = vadd.f32 0.0, %v2246
        %v2248 = vpop.f32.mrb[0].mxu0
        %2249 = vmatprep.mubr.f32.mxu0 0.0
        %2250 = vmatmul.mubr.f32.gmra.mrb[0].mxu0 %v897
        %v2251 = vpop.f32.mrb[0].mxu0
        %v2252 = vadd.f32 0.0, %v2251
        %v2253 = vpop.f32.mrb[0].mxu0
        %2254 = vmatprep.mubr.f32.mxu0 0.0
        %2255 = vmatmul.mubr.f32.gmra.mrb[0].mxu0 %v900
        %v2256 = vpop.f32.mrb[0].mxu0
        %v2257 = vadd.f32 0.0, %v2256
        %v2258 = vpop.f32.mrb[0].mxu0
        %2259 = vmatprep.mubr.f32.mxu0 0.0
        %2260 = vmatmul.mubr.f32.gmra.mrb[0].mxu0 %v903
        %v2261 = vpop.f32.mrb[0].mxu0
        %v2262 = vadd.f32 0.0, %v2261
        %v2263 = vpop.f32.mrb[0].mxu0
        %2264 = vmatprep.mubr.f32.mxu0 0.0
        %2265 = vmatmul.mubr.f32.gmra.mrb[0].mxu0 %v906
        %v2266 = vpop.f32.mrb[0].mxu0
        %v2267 = vadd.f32 0.0, %v2266
        %v2268 = vpop.f32.mrb[0].mxu0
        %2269 = vmatprep.mubr.f32.mxu0 0.0
        %2270 = vmatmul.mubr.f32.gmra.mrb[0].mxu0 %v909
        %v2271 = vpop.f32.mrb[0].mxu0
        %v2272 = vadd.f32 0.0, %v2271
        %v2273 = vpop.f32.mrb[0].mxu0
        %2274 = vmatprep.mubr.f32.mxu0 0.0
        %2275 = vmatmul.mubr.f32.gmra.mrb[0].mxu0 %v912
        %v2276 = vpop.f32.mrb[0].mxu0
        %v2277 = vadd.f32 0.0, %v2276
        %v2278 = vpop.f32.mrb[0].mxu0
        %2279 = vmatprep.mubr.f32.mxu0 0.0
        %2280 = vmatmul.mubr.f32.gmra.mrb[0].mxu0 %v915
        %v2281 = vpop.f32.mrb[0].mxu0
        %v2282 = vadd.f32 0.0, %v2281
        %v2283 = vpop.f32.mrb[0].mxu0
        %2284 = vmatprep.mubr.f32.mxu0 0.0
        %2285 = vmatmul.mubr.f32.gmra.mrb[0].mxu0 %v918
        %v2286 = vpop.f32.mrb[0].mxu0
        %v2287 = vadd.f32 0.0, %v2286
        %v2288 = vpop.f32.mrb[0].mxu0
        %2289 = vmatprep.mubr.f32.mxu0 0.0
        %2290 = vmatmul.mubr.f32.gmra.mrb[0].mxu0 %v921
        %v2291 = vpop.f32.mrb[0].mxu0
        %v2292 = vadd.f32 0.0, %v2291
        %v2293 = vpop.f32.mrb[0].mxu0
        %2294 = vmatprep.mubr.f32.mxu0 0.0
        %2295 = vmatmul.mubr.f32.gmra.mrb[0].mxu0 %v924
        %v2296 = vpop.f32.mrb[0].mxu0
        %v2297 = vadd.f32 0.0, %v2296
        %v2298 = vpop.f32.mrb[0].mxu0
        %2299 = vmatprep.mubr.f32.mxu0 0.0
        %2300 = vmatmul.mubr.f32.gmra.mrb[0].mxu0 %v927
        %v2301 = vpop.f32.mrb[0].mxu0
        %v2302 = vadd.f32 0.0, %v2301
        %v2303 = vpop.f32.mrb[0].mxu0
        %2304 = vmatprep.mubr.f32.mxu0 0.0
        %2305 = vmatmul.mubr.f32.gmra.mrb[0].mxu0 %v930
        %v2306 = vpop.f32.mrb[0].mxu0
        %v2307 = vadd.f32 0.0, %v2306
        %v2308 = vpop.f32.mrb[0].mxu0
        %2309 = vmatprep.mubr.f32.mxu0 0.0
        %2310 = vmatmul.mubr.f32.gmra.mrb[0].mxu0 %v933
        %v2311 = vpop.f32.mrb[0].mxu0
        %v2312 = vadd.f32 0.0, %v2311
        %v2313 = vpop.f32.mrb[0].mxu0
        %2314 = vmatprep.mubr.f32.mxu0 0.0
        %2315 = vmatmul.mubr.f32.gmra.mrb[0].mxu0 %v936
        %v2316 = vpop.f32.mrb[0].mxu0
        %v2317 = vadd.f32 0.0, %v2316
        %v2318 = vpop.f32.mrb[0].mxu0
        %2319 = vmatprep.mubr.f32.mxu0 0.0
        %2320 = vmatmul.mubr.f32.gmra.mrb[0].mxu0 %v939
        %v2321 = vpop.f32.mrb[0].mxu0
        %v2322 = vadd.f32 0.0, %v2321
        %v2323 = vpop.f32.mrb[0].mxu0
        %2324 = vmatprep.mubr.f32.mxu0 0.0
        %2325 = vmatmul.mubr.f32.gmra.mrb[0].mxu0 %v942
        %v2326 = vpop.f32.mrb[0].mxu0
        %v2327 = vadd.f32 0.0, %v2326
        %v2328 = vpop.f32.mrb[0].mxu0
        %2329 = vmatprep.mubr.f32.mxu0 0.0
        %2330 = vmatmul.mubr.f32.gmra.mrb[0].mxu0 %v945
        %v2331 = vpop.f32.mrb[0].mxu0
        %v2332 = vadd.f32 0.0, %v2331
        %v2333 = vpop.f32.mrb[0].mxu0
        %2334 = vmatprep.mubr.f32.mxu0 0.0
        %2335 = vmatmul.mubr.f32.gmra.mrb[0].mxu0 %v948
        %v2336 = vpop.f32.mrb[0].mxu0
        %v2337 = vadd.f32 0.0, %v2336
        %v2338 = vpop.f32.mrb[0].mxu0
        %2339 = vmatprep.mubr.f32.mxu0 0.0
        %2340 = vmatmul.mubr.f32.gmra.mrb[0].mxu0 %v951
        %v2341 = vpop.f32.mrb[0].mxu0
        %v2342 = vadd.f32 0.0, %v2341
        %v2343 = vpop.f32.mrb[0].mxu0
        %2344 = vmatprep.mubr.f32.mxu0 0.0
        %2345 = vmatmul.mubr.f32.gmra.mrb[0].mxu0 %v954
        %v2346 = vpop.f32.mrb[0].mxu0
        %v2347 = vadd.f32 0.0, %v2346
        %v2348 = vpop.f32.mrb[0].mxu0
        %2349 = vmatprep.mubr.f32.mxu0 0.0
        %2350 = vmatmul.mubr.f32.gmra.mrb[0].mxu0 %v957
        %v2351 = vpop.f32.mrb[0].mxu0
        %v2352 = vadd.f32 0.0, %v2351
        %v2353 = vpop.f32.mrb[0].mxu0
        %2354 = vmatprep.mubr.f32.mxu0 0.0
        %2355 = vmatmul.mubr.f32.gmra.mrb[0].mxu0 %v960
        %v2356 = vpop.f32.mrb[0].mxu0
        %v2357 = vadd.f32 0.0, %v2356
        %v2358 = vpop.f32.mrb[0].mxu0
        %2359 = vmatprep.mubr.f32.mxu0 0.0
        %2360 = vmatmul.mubr.f32.gmra.mrb[0].mxu0 %v963
        %v2361 = vpop.f32.mrb[0].mxu0
        %v2362 = vadd.f32 0.0, %v2361
        %v2363 = vpop.f32.mrb[0].mxu0
        %2364 = vmatprep.mubr.f32.mxu0 0.0
        %2365 = vmatmul.mubr.f32.gmra.mrb[0].mxu0 %v966
        %v2366 = vpop.f32.mrb[0].mxu0
        %v2367 = vadd.f32 0.0, %v2366
        %v2368 = vpop.f32.mrb[0].mxu0
        %2369 = vmatprep.mubr.f32.mxu0 0.0
        %2370 = vmatmul.mubr.f32.gmra.mrb[0].mxu0 %v969
        %v2371 = vpop.f32.mrb[0].mxu0
        %v2372 = vadd.f32 0.0, %v2371
        %v2373 = vpop.f32.mrb[0].mxu0
        %2374 = vmatprep.mubr.f32.mxu0 0.0
        %2375 = vmatmul.mubr.f32.gmra.mrb[0].mxu0 %v972
        %v2376 = vpop.f32.mrb[0].mxu0
        %v2377 = vadd.f32 0.0, %v2376
        %v2378 = vpop.f32.mrb[0].mxu0
        %2379 = vmatprep.mubr.f32.mxu0 0.0
        %2380 = vmatmul.mubr.f32.gmra.mrb[0].mxu0 %v975
        %v2381 = vpop.f32.mrb[0].mxu0
        %v2382 = vadd.f32 0.0, %v2381
        %v2383 = vpop.f32.mrb[0].mxu0
        %2384 = vmatprep.mubr.f32.mxu0 0.0
        %2385 = vmatmul.mubr.f32.gmra.mrb[0].mxu0 %v978
        %v2386 = vpop.f32.mrb[0].mxu0
        %v2387 = vadd.f32 0.0, %v2386
        %v2388 = vpop.f32.mrb[0].mxu0
        %2389 = vmatprep.mubr.f32.mxu0 0.0
        %2390 = vmatmul.mubr.f32.gmra.mrb[0].mxu0 %v981
        %v2391 = vpop.f32.mrb[0].mxu0
        %v2392 = vadd.f32 0.0, %v2391
        %v2393 = vpop.f32.mrb[0].mxu0
        %2394 = vmatprep.mubr.f32.mxu0 0.0
        %2395 = vmatmul.mubr.f32.gmra.mrb[0].mxu0 %v1909
        %v2396 = vpop.f32.mrb[0].mxu0
        %v2397 = vadd.f32 0.0, %v2396
        %v2398 = vpop.f32.mrb[0].mxu0
        %2399 = vmatprep.mubr.f32.mxu0 0.0
        %2400 = vmatmul.mubr.f32.gmra.mrb[0].mxu0 %v1912
        %v2401 = vpop.f32.mrb[0].mxu0
        %v2402 = vadd.f32 0.0, %v2401
        %v2403 = vpop.f32.mrb[0].mxu0
        %2404 = vdwg.mxu0
        %v2405 = vadd.f32 %v1747, %v2247
        %v2406 = vadd.f32 %v1752, %v2252
        %v2407 = vadd.f32 %v1757, %v2257
        %v2408 = vadd.f32 %v1762, %v2262
        %v2409 = vadd.f32 %v1767, %v2267
        %v2410 = vadd.f32 %v1772, %v2272
        %v2411 = vadd.f32 %v1777, %v2277
        %v2412 = vadd.f32 %v1782, %v2282
        %v2413 = vadd.f32 %v1787, %v2287
        %v2414 = vadd.f32 %v1792, %v2292
        %v2415 = vadd.f32 %v1797, %v2297
        %v2416 = vadd.f32 %v1802, %v2302
        %v2417 = vadd.f32 %v1807, %v2307
        %v2418 = vadd.f32 %v1812, %v2312
        %v2419 = vadd.f32 %v1817, %v2317
        %v2420 = vadd.f32 %v1822, %v2322
        %v2421 = vadd.f32 %v1827, %v2327
        %v2422 = vadd.f32 %v1832, %v2332
        %v2423 = vadd.f32 %v1837, %v2337
        %v2424 = vadd.f32 %v1842, %v2342
        %v2425 = vadd.f32 %v1847, %v2347
        %v2426 = vadd.f32 %v1852, %v2352
        %v2427 = vadd.f32 %v1857, %v2357
        %v2428 = vadd.f32 %v1862, %v2362
        %v2429 = vadd.f32 %v1867, %v2367
        %v2430 = vadd.f32 %v1872, %v2372
        %v2431 = vadd.f32 %v1877, %v2377
        %v2432 = vadd.f32 %v1882, %v2382
        %v2433 = vadd.f32 %v1887, %v2387
        %v2434 = vadd.f32 %v1892, %v2392
        %v2435 = vadd.f32 %v1897, %v2397
        %v2436 = vadd.f32 %v1902, %v2402
        %v2437 = vld [vmem:[%s295] sm:$0x1]
        %v2439 = vlaneseq
        %v2440 = vshrl.u32 %v2439, 7
        %v2441 = vsub.s32 0, %v2440
        %v2442 = vrot.slane %v2437, %v2441
        %v2444 = vadd.f32 %v2142, %v2442
        %v2445 = vadd.f32 %v2143, %v2442
        %v2446 = vadd.f32 %v2144, %v2442
        %v2447 = vadd.f32 %v2145, %v2442
        %v2448 = vadd.f32 %v2146, %v2442
        %v2449 = vadd.f32 %v2147, %v2442
        %v2450 = vadd.f32 %v2148, %v2442
        %v2451 = vadd.f32 %v2149, %v2442
        %v2452 = vadd.f32 %v2150, %v2442
        %v2453 = vadd.f32 %v2151, %v2442
        %v2454 = vadd.f32 %v2152, %v2442
        %v2455 = vadd.f32 %v2153, %v2442
        %v2456 = vadd.f32 %v2154, %v2442
        %v2457 = vadd.f32 %v2155, %v2442
        %v2458 = vadd.f32 %v2156, %v2442
        %v2459 = vadd.f32 %v2157, %v2442
        %v2460 = vadd.f32 %v2158, %v2442
        %v2461 = vadd.f32 %v2159, %v2442
        %v2462 = vadd.f32 %v2160, %v2442
        %v2463 = vadd.f32 %v2161, %v2442
        %v2464 = vadd.f32 %v2162, %v2442
        %v2465 = vadd.f32 %v2163, %v2442
        %v2466 = vadd.f32 %v2164, %v2442
        %v2467 = vadd.f32 %v2165, %v2442
        %v2468 = vadd.f32 %v2166, %v2442
        %v2469 = vadd.f32 %v2167, %v2442
        %v2470 = vadd.f32 %v2168, %v2442
        %v2471 = vadd.f32 %v2169, %v2442
        %v2472 = vadd.f32 %v2170, %v2442
        %v2473 = vadd.f32 %v2171, %v2442
        %v2474 = vadd.f32 %v2172, %v2442
        %v2475 = vadd.f32 %v2173, %v2442
        %v2476 = vld [vmem:[%s298] sm:$0x1]
        %v2478 = vlaneseq
        %v2479 = vshrl.u32 %v2478, 7
        %v2480 = vsub.s32 0, %v2479
        %v2481 = vrot.slane %v2476, %v2480
        %v2483 = vadd.f32 %v2405, %v2481
        %v2484 = vadd.f32 %v2406, %v2481
        %v2485 = vadd.f32 %v2407, %v2481
        %v2486 = vadd.f32 %v2408, %v2481
        %v2487 = vadd.f32 %v2409, %v2481
        %v2488 = vadd.f32 %v2410, %v2481
        %v2489 = vadd.f32 %v2411, %v2481
        %v2490 = vadd.f32 %v2412, %v2481
        %v2491 = vadd.f32 %v2413, %v2481
        %v2492 = vadd.f32 %v2414, %v2481
        %v2493 = vadd.f32 %v2415, %v2481
        %v2494 = vadd.f32 %v2416, %v2481
        %v2495 = vadd.f32 %v2417, %v2481
        %v2496 = vadd.f32 %v2418, %v2481
        %v2497 = vadd.f32 %v2419, %v2481
        %v2498 = vadd.f32 %v2420, %v2481
        %v2499 = vadd.f32 %v2421, %v2481
        %v2500 = vadd.f32 %v2422, %v2481
        %v2501 = vadd.f32 %v2423, %v2481
        %v2502 = vadd.f32 %v2424, %v2481
        %v2503 = vadd.f32 %v2425, %v2481
        %v2504 = vadd.f32 %v2426, %v2481
        %v2505 = vadd.f32 %v2427, %v2481
        %v2506 = vadd.f32 %v2428, %v2481
        %v2507 = vadd.f32 %v2429, %v2481
        %v2508 = vadd.f32 %v2430, %v2481
        %v2509 = vadd.f32 %v2431, %v2481
        %v2510 = vadd.f32 %v2432, %v2481
        %v2511 = vadd.f32 %v2433, %v2481
        %v2512 = vadd.f32 %v2434, %v2481
        %v2513 = vadd.f32 %v2435, %v2481
        %v2514 = vadd.f32 %v2436, %v2481
        %vm2515 = vcmask 261120
        %v2516 = vsel %vm2515, %v2444, 0.0
        %v2517 = vsel %vm2515, %v2445, 0.0
        %v2518 = vadd.f32 %v2516, %v2517
        %v2519 = vsel %vm2515, %v2446, 0.0
        %v2520 = vadd.f32 %v2518, %v2519
        %v2521 = vsel %vm2515, %v2447, 0.0
        %v2522 = vadd.f32 %v2520, %v2521
        %v2523 = vsel %vm2515, %v2448, 0.0
        %v2524 = vadd.f32 %v2522, %v2523
        %v2525 = vsel %vm2515, %v2449, 0.0
        %v2526 = vadd.f32 %v2524, %v2525
        %v2527 = vsel %vm2515, %v2450, 0.0
        %v2528 = vadd.f32 %v2526, %v2527
        %v2529 = vsel %vm2515, %v2451, 0.0
        %v2530 = vadd.f32 %v2528, %v2529
        %v2531 = vsel %vm2515, %v2452, 0.0
        %v2532 = vadd.f32 %v2530, %v2531
        %v2533 = vsel %vm2515, %v2453, 0.0
        %v2534 = vadd.f32 %v2532, %v2533
        %v2535 = vsel %vm2515, %v2454, 0.0
        %v2536 = vadd.f32 %v2534, %v2535
        %v2537 = vsel %vm2515, %v2455, 0.0
        %v2538 = vadd.f32 %v2536, %v2537
        %v2539 = vsel %vm2515, %v2456, 0.0
        %v2540 = vadd.f32 %v2538, %v2539
        %v2541 = vsel %vm2515, %v2457, 0.0
        %v2542 = vadd.f32 %v2540, %v2541
        %v2543 = vsel %vm2515, %v2458, 0.0
        %v2544 = vadd.f32 %v2542, %v2543
        %v2545 = vsel %vm2515, %v2459, 0.0
        %v2546 = vadd.f32 %v2544, %v2545
        %v2547 = vsel %vm2515, %v2460, 0.0
        %v2548 = vadd.f32 %v2546, %v2547
        %v2549 = vsel %vm2515, %v2461, 0.0
        %v2550 = vadd.f32 %v2548, %v2549
        %v2551 = vsel %vm2515, %v2462, 0.0
        %v2552 = vadd.f32 %v2550, %v2551
        %v2553 = vsel %vm2515, %v2463, 0.0
        %v2554 = vadd.f32 %v2552, %v2553
        %v2555 = vsel %vm2515, %v2464, 0.0
        %v2556 = vadd.f32 %v2554, %v2555
        %v2557 = vsel %vm2515, %v2465, 0.0
        %v2558 = vadd.f32 %v2556, %v2557
        %v2559 = vsel %vm2515, %v2466, 0.0
        %v2560 = vadd.f32 %v2558, %v2559
        %v2561 = vsel %vm2515, %v2467, 0.0
        %v2562 = vadd.f32 %v2560, %v2561
        %v2563 = vsel %vm2515, %v2468, 0.0
        %v2564 = vadd.f32 %v2562, %v2563
        %v2565 = vsel %vm2515, %v2469, 0.0
        %v2566 = vadd.f32 %v2564, %v2565
        %v2567 = vsel %vm2515, %v2470, 0.0
        %v2568 = vadd.f32 %v2566, %v2567
        %v2569 = vsel %vm2515, %v2471, 0.0
        %v2570 = vadd.f32 %v2568, %v2569
        %v2571 = vsel %vm2515, %v2472, 0.0
        %v2572 = vadd.f32 %v2570, %v2571
        %v2573 = vsel %vm2515, %v2473, 0.0
        %v2574 = vadd.f32 %v2572, %v2573
        %v2575 = vsel %vm2515, %v2474, 0.0
        %v2576 = vadd.f32 %v2574, %v2575
        %v2577 = vsel %vm2515, %v2475, 0.0
        %v2578 = vadd.f32 %v2576, %v2577
        %v2579 = vrot.slane %v2578, 4
        %v2580 = vadd.f32 %v2578, %v2579
        %v2581 = vrot.slane %v2580, 2
        %v2582 = vadd.f32 %v2580, %v2581
        %v2583 = vrot.slane %v2582, 1
        %v2584 = vadd.f32 %v2582, %v2583
        %v2585 = vrcp.pop 256.0
        %v2586 = vmul.f32 %v2584, %v2585
        %v2587 = vsub.f32 %v2444, %v2586
        %v2588 = vsub.f32 %v2445, %v2586
        %v2589 = vsub.f32 %v2446, %v2586
        %v2590 = vsub.f32 %v2447, %v2586
        %v2591 = vsub.f32 %v2448, %v2586
        %v2592 = vsub.f32 %v2449, %v2586
        %v2593 = vsub.f32 %v2450, %v2586
        %v2594 = vsub.f32 %v2451, %v2586
        %v2595 = vsub.f32 %v2452, %v2586
        %v2596 = vsub.f32 %v2453, %v2586
        %v2597 = vsub.f32 %v2454, %v2586
        %v2598 = vsub.f32 %v2455, %v2586
        %v2599 = vsub.f32 %v2456, %v2586
        %v2600 = vsub.f32 %v2457, %v2586
        %v2601 = vsub.f32 %v2458, %v2586
        %v2602 = vsub.f32 %v2459, %v2586
        %v2603 = vsub.f32 %v2460, %v2586
        %v2604 = vsub.f32 %v2461, %v2586
        %v2605 = vsub.f32 %v2462, %v2586
        %v2606 = vsub.f32 %v2463, %v2586
        %v2607 = vsub.f32 %v2464, %v2586
        %v2608 = vsub.f32 %v2465, %v2586
        %v2609 = vsub.f32 %v2466, %v2586
        %v2610 = vsub.f32 %v2467, %v2586
        %v2611 = vsub.f32 %v2468, %v2586
        %v2612 = vsub.f32 %v2469, %v2586
        %v2613 = vsub.f32 %v2470, %v2586
        %v2614 = vsub.f32 %v2471, %v2586
        %v2615 = vsub.f32 %v2472, %v2586
        %v2616 = vsub.f32 %v2473, %v2586
        %v2617 = vsub.f32 %v2474, %v2586
        %v2618 = vsub.f32 %v2475, %v2586
        %v2619 = vmul.f32 %v2587, %v2587
        %v2620 = vmul.f32 %v2588, %v2588
        %v2621 = vmul.f32 %v2589, %v2589
        %v2622 = vmul.f32 %v2590, %v2590
        %v2623 = vmul.f32 %v2591, %v2591
        %v2624 = vmul.f32 %v2592, %v2592
        %v2625 = vmul.f32 %v2593, %v2593
        %v2626 = vmul.f32 %v2594, %v2594
        %v2627 = vmul.f32 %v2595, %v2595
        %v2628 = vmul.f32 %v2596, %v2596
        %v2629 = vmul.f32 %v2597, %v2597
        %v2630 = vmul.f32 %v2598, %v2598
        %v2631 = vmul.f32 %v2599, %v2599
        %v2632 = vmul.f32 %v2600, %v2600
        %v2633 = vmul.f32 %v2601, %v2601
        %v2634 = vmul.f32 %v2602, %v2602
        %v2635 = vmul.f32 %v2603, %v2603
        %v2636 = vmul.f32 %v2604, %v2604
        %v2637 = vmul.f32 %v2605, %v2605
        %v2638 = vmul.f32 %v2606, %v2606
        %v2639 = vmul.f32 %v2607, %v2607
        %v2640 = vmul.f32 %v2608, %v2608
        %v2641 = vmul.f32 %v2609, %v2609
        %v2642 = vmul.f32 %v2610, %v2610
        %v2643 = vmul.f32 %v2611, %v2611
        %v2644 = vmul.f32 %v2612, %v2612
        %v2645 = vmul.f32 %v2613, %v2613
        %v2646 = vmul.f32 %v2614, %v2614
        %v2647 = vmul.f32 %v2615, %v2615
        %v2648 = vmul.f32 %v2616, %v2616
        %v2649 = vmul.f32 %v2617, %v2617
        %v2650 = vmul.f32 %v2618, %v2618
        %v2651 = vsel %vm2515, %v2619, 0.0
        %v2652 = vsel %vm2515, %v2620, 0.0
        %v2653 = vadd.f32 %v2651, %v2652
        %v2654 = vsel %vm2515, %v2621, 0.0
        %v2655 = vadd.f32 %v2653, %v2654
        %v2656 = vsel %vm2515, %v2622, 0.0
        %v2657 = vadd.f32 %v2655, %v2656
        %v2658 = vsel %vm2515, %v2623, 0.0
        %v2659 = vadd.f32 %v2657, %v2658
        %v2660 = vsel %vm2515, %v2624, 0.0
        %v2661 = vadd.f32 %v2659, %v2660
        %v2662 = vsel %vm2515, %v2625, 0.0
        %v2663 = vadd.f32 %v2661, %v2662
        %v2664 = vsel %vm2515, %v2626, 0.0
        %v2665 = vadd.f32 %v2663, %v2664
        %v2666 = vsel %vm2515, %v2627, 0.0
        %v2667 = vadd.f32 %v2665, %v2666
        %v2668 = vsel %vm2515, %v2628, 0.0
        %v2669 = vadd.f32 %v2667, %v2668
        %v2670 = vsel %vm2515, %v2629, 0.0
        %v2671 = vadd.f32 %v2669, %v2670
        %v2672 = vsel %vm2515, %v2630, 0.0
        %v2673 = vadd.f32 %v2671, %v2672
        %v2674 = vsel %vm2515, %v2631, 0.0
        %v2675 = vadd.f32 %v2673, %v2674
        %v2676 = vsel %vm2515, %v2632, 0.0
        %v2677 = vadd.f32 %v2675, %v2676
        %v2678 = vsel %vm2515, %v2633, 0.0
        %v2679 = vadd.f32 %v2677, %v2678
        %v2680 = vsel %vm2515, %v2634, 0.0
        %v2681 = vadd.f32 %v2679, %v2680
        %v2682 = vsel %vm2515, %v2635, 0.0
        %v2683 = vadd.f32 %v2681, %v2682
        %v2684 = vsel %vm2515, %v2636, 0.0
        %v2685 = vadd.f32 %v2683, %v2684
        %v2686 = vsel %vm2515, %v2637, 0.0
        %v2687 = vadd.f32 %v2685, %v2686
        %v2688 = vsel %vm2515, %v2638, 0.0
        %v2689 = vadd.f32 %v2687, %v2688
        %v2690 = vsel %vm2515, %v2639, 0.0
        %v2691 = vadd.f32 %v2689, %v2690
        %v2692 = vsel %vm2515, %v2640, 0.0
        %v2693 = vadd.f32 %v2691, %v2692
        %v2694 = vsel %vm2515, %v2641, 0.0
        %v2695 = vadd.f32 %v2693, %v2694
        %v2696 = vsel %vm2515, %v2642, 0.0
        %v2697 = vadd.f32 %v2695, %v2696
        %v2698 = vsel %vm2515, %v2643, 0.0
        %v2699 = vadd.f32 %v2697, %v2698
        %v2700 = vsel %vm2515, %v2644, 0.0
        %v2701 = vadd.f32 %v2699, %v2700
        %v2702 = vsel %vm2515, %v2645, 0.0
        %v2703 = vadd.f32 %v2701, %v2702
        %v2704 = vsel %vm2515, %v2646, 0.0
        %v2705 = vadd.f32 %v2703, %v2704
        %v2706 = vsel %vm2515, %v2647, 0.0
        %v2707 = vadd.f32 %v2705, %v2706
        %v2708 = vsel %vm2515, %v2648, 0.0
        %v2709 = vadd.f32 %v2707, %v2708
        %v2710 = vsel %vm2515, %v2649, 0.0
        %v2711 = vadd.f32 %v2709, %v2710
        %v2712 = vsel %vm2515, %v2650, 0.0
        %v2713 = vadd.f32 %v2711, %v2712
        %v2714 = vrot.slane %v2713, 4
        %v2715 = vadd.f32 %v2713, %v2714
        %v2716 = vrot.slane %v2715, 2
        %v2717 = vadd.f32 %v2715, %v2716
        %v2718 = vrot.slane %v2717, 1
        %v2719 = vadd.f32 %v2717, %v2718
        %v2720 = vmul.f32 %v2719, %v2585
        %v2721 = vadd.f32 %v2720, 1e-05
        %v2722 = vrsqrt.pop %v2721
        %v2723 = vmul.f32 %v2587, %v2722
        %v2724 = vmul.f32 %v2588, %v2722
        %v2725 = vmul.f32 %v2589, %v2722
        %v2726 = vmul.f32 %v2590, %v2722
        %v2727 = vmul.f32 %v2591, %v2722
        %v2728 = vmul.f32 %v2592, %v2722
        %v2729 = vmul.f32 %v2593, %v2722
        %v2730 = vmul.f32 %v2594, %v2722
        %v2731 = vmul.f32 %v2595, %v2722
        %v2732 = vmul.f32 %v2596, %v2722
        %v2733 = vmul.f32 %v2597, %v2722
        %v2734 = vmul.f32 %v2598, %v2722
        %v2735 = vmul.f32 %v2599, %v2722
        %v2736 = vmul.f32 %v2600, %v2722
        %v2737 = vmul.f32 %v2601, %v2722
        %v2738 = vmul.f32 %v2602, %v2722
        %v2739 = vmul.f32 %v2603, %v2722
        %v2740 = vmul.f32 %v2604, %v2722
        %v2741 = vmul.f32 %v2605, %v2722
        %v2742 = vmul.f32 %v2606, %v2722
        %v2743 = vmul.f32 %v2607, %v2722
        %v2744 = vmul.f32 %v2608, %v2722
        %v2745 = vmul.f32 %v2609, %v2722
        %v2746 = vmul.f32 %v2610, %v2722
        %v2747 = vmul.f32 %v2611, %v2722
        %v2748 = vmul.f32 %v2612, %v2722
        %v2749 = vmul.f32 %v2613, %v2722
        %v2750 = vmul.f32 %v2614, %v2722
        %v2751 = vmul.f32 %v2615, %v2722
        %v2752 = vmul.f32 %v2616, %v2722
        %v2753 = vmul.f32 %v2617, %v2722
        %v2754 = vmul.f32 %v2618, %v2722
        %v2755 = vmul.f32 %v2723, 0.2
        %v2756 = vmul.f32 %v2724, 0.2
        %v2757 = vmul.f32 %v2725, 0.2
        %v2758 = vmul.f32 %v2726, 0.2
        %v2759 = vmul.f32 %v2727, 0.2
        %v2760 = vmul.f32 %v2728, 0.2
        %v2761 = vmul.f32 %v2729, 0.2
        %v2762 = vmul.f32 %v2730, 0.2
        %v2763 = vmul.f32 %v2731, 0.2
        %v2764 = vmul.f32 %v2732, 0.2
        %v2765 = vmul.f32 %v2733, 0.2
        %v2766 = vmul.f32 %v2734, 0.2
        %v2767 = vmul.f32 %v2735, 0.2
        %v2768 = vmul.f32 %v2736, 0.2
        %v2769 = vmul.f32 %v2737, 0.2
        %v2770 = vmul.f32 %v2738, 0.2
        %v2771 = vmul.f32 %v2739, 0.2
        %v2772 = vmul.f32 %v2740, 0.2
        %v2773 = vmul.f32 %v2741, 0.2
        %v2774 = vmul.f32 %v2742, 0.2
        %v2775 = vmul.f32 %v2743, 0.2
        %v2776 = vmul.f32 %v2744, 0.2
        %v2777 = vmul.f32 %v2745, 0.2
        %v2778 = vmul.f32 %v2746, 0.2
        %v2779 = vmul.f32 %v2747, 0.2
        %v2780 = vmul.f32 %v2748, 0.2
        %v2781 = vmul.f32 %v2749, 0.2
        %v2782 = vmul.f32 %v2750, 0.2
        %v2783 = vmul.f32 %v2751, 0.2
        %v2784 = vmul.f32 %v2752, 0.2
        %v2785 = vmul.f32 %v2753, 0.2
        %v2786 = vmul.f32 %v2754, 0.2
        %v2787 = vmax.f32 %v2723, %v2755
        %v2788 = vmax.f32 %v2724, %v2756
        %v2789 = vmax.f32 %v2725, %v2757
        %v2790 = vmax.f32 %v2726, %v2758
        %v2791 = vmax.f32 %v2727, %v2759
        %v2792 = vmax.f32 %v2728, %v2760
        %v2793 = vmax.f32 %v2729, %v2761
        %v2794 = vmax.f32 %v2730, %v2762
        %v2795 = vmax.f32 %v2731, %v2763
        %v2796 = vmax.f32 %v2732, %v2764
        %v2797 = vmax.f32 %v2733, %v2765
        %v2798 = vmax.f32 %v2734, %v2766
        %v2799 = vmax.f32 %v2735, %v2767
        %v2800 = vmax.f32 %v2736, %v2768
        %v2801 = vmax.f32 %v2737, %v2769
        %v2802 = vmax.f32 %v2738, %v2770
        %v2803 = vmax.f32 %v2739, %v2771
        %v2804 = vmax.f32 %v2740, %v2772
        %v2805 = vmax.f32 %v2741, %v2773
        %v2806 = vmax.f32 %v2742, %v2774
        %v2807 = vmax.f32 %v2743, %v2775
        %v2808 = vmax.f32 %v2744, %v2776
        %v2809 = vmax.f32 %v2745, %v2777
        %v2810 = vmax.f32 %v2746, %v2778
        %v2811 = vmax.f32 %v2747, %v2779
        %v2812 = vmax.f32 %v2748, %v2780
        %v2813 = vmax.f32 %v2749, %v2781
        %v2814 = vmax.f32 %v2750, %v2782
        %v2815 = vmax.f32 %v2751, %v2783
        %v2816 = vmax.f32 %v2752, %v2784
        %v2817 = vmax.f32 %v2753, %v2785
        %v2818 = vmax.f32 %v2754, %v2786
        %v2819 = vxor.u32 %v2483, 2147483648
        %v2820 = vxor.u32 %v2484, 2147483648
        %v2821 = vxor.u32 %v2485, 2147483648
        %v2822 = vxor.u32 %v2486, 2147483648
        %v2823 = vxor.u32 %v2487, 2147483648
        %v2824 = vxor.u32 %v2488, 2147483648
        %v2825 = vxor.u32 %v2489, 2147483648
        %v2826 = vxor.u32 %v2490, 2147483648
        %v2827 = vxor.u32 %v2491, 2147483648
        %v2828 = vxor.u32 %v2492, 2147483648
        %v2829 = vxor.u32 %v2493, 2147483648
        %v2830 = vxor.u32 %v2494, 2147483648
        %v2831 = vxor.u32 %v2495, 2147483648
        %v2832 = vxor.u32 %v2496, 2147483648
        %v2833 = vxor.u32 %v2497, 2147483648
        %v2834 = vxor.u32 %v2498, 2147483648
        %v2835 = vxor.u32 %v2499, 2147483648
        %v2836 = vxor.u32 %v2500, 2147483648
        %v2837 = vxor.u32 %v2501, 2147483648
        %v2838 = vxor.u32 %v2502, 2147483648
        %v2839 = vxor.u32 %v2503, 2147483648
        %v2840 = vxor.u32 %v2504, 2147483648
        %v2841 = vxor.u32 %v2505, 2147483648
        %v2842 = vxor.u32 %v2506, 2147483648
        %v2843 = vxor.u32 %v2507, 2147483648
        %v2844 = vxor.u32 %v2508, 2147483648
        %v2845 = vxor.u32 %v2509, 2147483648
        %v2846 = vxor.u32 %v2510, 2147483648
        %v2847 = vxor.u32 %v2511, 2147483648
        %v2848 = vxor.u32 %v2512, 2147483648
        %v2849 = vxor.u32 %v2513, 2147483648
        %v2850 = vxor.u32 %v2514, 2147483648
        %v2851 = vmul.f32 %v2819, 1.442695
        %v2852 = vpow.pop %v2851
        %v2853 = vmul.f32 %v2820, 1.442695
        %v2854 = vpow.pop %v2853
        %v2855 = vmul.f32 %v2821, 1.442695
        %v2856 = vpow.pop %v2855
        %v2857 = vmul.f32 %v2822, 1.442695
        %v2858 = vpow.pop %v2857
        %v2859 = vmul.f32 %v2823, 1.442695
        %v2860 = vpow.pop %v2859
        %v2861 = vmul.f32 %v2824, 1.442695
        %v2862 = vpow.pop %v2861
        %v2863 = vmul.f32 %v2825, 1.442695
        %v2864 = vpow.pop %v2863
        %v2865 = vmul.f32 %v2826, 1.442695
        %v2866 = vpow.pop %v2865
        %v2867 = vmul.f32 %v2827, 1.442695
        %v2868 = vpow.pop %v2867
        %v2869 = vmul.f32 %v2828, 1.442695
        %v2870 = vpow.pop %v2869
        %v2871 = vmul.f32 %v2829, 1.442695
        %v2872 = vpow.pop %v2871
        %v2873 = vmul.f32 %v2830, 1.442695
        %v2874 = vpow.pop %v2873
        %v2875 = vmul.f32 %v2831, 1.442695
        %v2876 = vpow.pop %v2875
        %v2877 = vmul.f32 %v2832, 1.442695
        %v2878 = vpow.pop %v2877
        %v2879 = vmul.f32 %v2833, 1.442695
        %v2880 = vpow.pop %v2879
        %v2881 = vmul.f32 %v2834, 1.442695
        %v2882 = vpow.pop %v2881
        %v2883 = vmul.f32 %v2835, 1.442695
        %v2884 = vpow.pop %v2883
        %v2885 = vmul.f32 %v2836, 1.442695
        %v2886 = vpow.pop %v2885
        %v2887 = vmul.f32 %v2837, 1.442695
        %v2888 = vpow.pop %v2887
        %v2889 = vmul.f32 %v2838, 1.442695
        %v2890 = vpow.pop %v2889
        %v2891 = vmul.f32 %v2839, 1.442695
        %v2892 = vpow.pop %v2891
        %v2893 = vmul.f32 %v2840, 1.442695
        %v2894 = vpow.pop %v2893
        %v2895 = vmul.f32 %v2841, 1.442695
        %v2896 = vpow.pop %v2895
        %v2897 = vmul.f32 %v2842, 1.442695
        %v2898 = vpow.pop %v2897
        %v2899 = vmul.f32 %v2843, 1.442695
        %v2900 = vpow.pop %v2899
        %v2901 = vmul.f32 %v2844, 1.442695
        %v2902 = vpow.pop %v2901
        %v2903 = vmul.f32 %v2845, 1.442695
        %v2904 = vpow.pop %v2903
        %v2905 = vmul.f32 %v2846, 1.442695
        %v2906 = vpow.pop %v2905
        %v2907 = vmul.f32 %v2847, 1.442695
        %v2908 = vpow.pop %v2907
        %v2909 = vmul.f32 %v2848, 1.442695
        %v2910 = vpow.pop %v2909
        %v2911 = vmul.f32 %v2849, 1.442695
        %v2912 = vpow.pop %v2911
        %v2913 = vmul.f32 %v2850, 1.442695
        %v2914 = vpow.pop %v2913
        %v2915 = vadd.f32 %v2852, 1.0
        %v2916 = vadd.f32 %v2854, 1.0
        %v2917 = vadd.f32 %v2856, 1.0
        %v2918 = vadd.f32 %v2858, 1.0
        %v2919 = vadd.f32 %v2860, 1.0
        %v2920 = vadd.f32 %v2862, 1.0
        %v2921 = vadd.f32 %v2864, 1.0
        %v2922 = vadd.f32 %v2866, 1.0
        %v2923 = vadd.f32 %v2868, 1.0
        %v2924 = vadd.f32 %v2870, 1.0
        %v2925 = vadd.f32 %v2872, 1.0
        %v2926 = vadd.f32 %v2874, 1.0
        %v2927 = vadd.f32 %v2876, 1.0
        %v2928 = vadd.f32 %v2878, 1.0
        %v2929 = vadd.f32 %v2880, 1.0
        %v2930 = vadd.f32 %v2882, 1.0
        %v2931 = vadd.f32 %v2884, 1.0
        %v2932 = vadd.f32 %v2886, 1.0
        %v2933 = vadd.f32 %v2888, 1.0
        %v2934 = vadd.f32 %v2890, 1.0
        %v2935 = vadd.f32 %v2892, 1.0
        %v2936 = vadd.f32 %v2894, 1.0
        %v2937 = vadd.f32 %v2896, 1.0
        %v2938 = vadd.f32 %v2898, 1.0
        %v2939 = vadd.f32 %v2900, 1.0
        %v2940 = vadd.f32 %v2902, 1.0
        %v2941 = vadd.f32 %v2904, 1.0
        %v2942 = vadd.f32 %v2906, 1.0
        %v2943 = vadd.f32 %v2908, 1.0
        %v2944 = vadd.f32 %v2910, 1.0
        %v2945 = vadd.f32 %v2912, 1.0
        %v2946 = vadd.f32 %v2914, 1.0
        %v2947 = vrcp.pop %v2915
        %v2948 = vmul.f32 1.0, %v2947
        %v2949 = vrcp.pop %v2916
        %v2950 = vmul.f32 1.0, %v2949
        %v2951 = vrcp.pop %v2917
        %v2952 = vmul.f32 1.0, %v2951
        %v2953 = vrcp.pop %v2918
        %v2954 = vmul.f32 1.0, %v2953
        %v2955 = vrcp.pop %v2919
        %v2956 = vmul.f32 1.0, %v2955
        %v2957 = vrcp.pop %v2920
        %v2958 = vmul.f32 1.0, %v2957
        %v2959 = vrcp.pop %v2921
        %v2960 = vmul.f32 1.0, %v2959
        %v2961 = vrcp.pop %v2922
        %v2962 = vmul.f32 1.0, %v2961
        %v2963 = vrcp.pop %v2923
        %v2964 = vmul.f32 1.0, %v2963
        %v2965 = vrcp.pop %v2924
        %v2966 = vmul.f32 1.0, %v2965
        %v2967 = vrcp.pop %v2925
        %v2968 = vmul.f32 1.0, %v2967
        %v2969 = vrcp.pop %v2926
        %v2970 = vmul.f32 1.0, %v2969
        %v2971 = vrcp.pop %v2927
        %v2972 = vmul.f32 1.0, %v2971
        %v2973 = vrcp.pop %v2928
        %v2974 = vmul.f32 1.0, %v2973
        %v2975 = vrcp.pop %v2929
        %v2976 = vmul.f32 1.0, %v2975
        %v2977 = vrcp.pop %v2930
        %v2978 = vmul.f32 1.0, %v2977
        %v2979 = vrcp.pop %v2931
        %v2980 = vmul.f32 1.0, %v2979
        %v2981 = vrcp.pop %v2932
        %v2982 = vmul.f32 1.0, %v2981
        %v2983 = vrcp.pop %v2933
        %v2984 = vmul.f32 1.0, %v2983
        %v2985 = vrcp.pop %v2934
        %v2986 = vmul.f32 1.0, %v2985
        %v2987 = vrcp.pop %v2935
        %v2988 = vmul.f32 1.0, %v2987
        %v2989 = vrcp.pop %v2936
        %v2990 = vmul.f32 1.0, %v2989
        %v2991 = vrcp.pop %v2937
        %v2992 = vmul.f32 1.0, %v2991
        %v2993 = vrcp.pop %v2938
        %v2994 = vmul.f32 1.0, %v2993
        %v2995 = vrcp.pop %v2939
        %v2996 = vmul.f32 1.0, %v2995
        %v2997 = vrcp.pop %v2940
        %v2998 = vmul.f32 1.0, %v2997
        %v2999 = vrcp.pop %v2941
        %v3000 = vmul.f32 1.0, %v2999
        %v3001 = vrcp.pop %v2942
        %v3002 = vmul.f32 1.0, %v3001
        %v3003 = vrcp.pop %v2943
        %v3004 = vmul.f32 1.0, %v3003
        %v3005 = vrcp.pop %v2944
        %v3006 = vmul.f32 1.0, %v3005
        %v3007 = vrcp.pop %v2945
        %v3008 = vmul.f32 1.0, %v3007
        %v3009 = vrcp.pop %v2946
        %v3010 = vmul.f32 1.0, %v3009
        %v3011 = vmul.f32 %v2787, %v2948
        %v3012 = vmul.f32 %v2788, %v2950
        %v3013 = vmul.f32 %v2789, %v2952
        %v3014 = vmul.f32 %v2790, %v2954
        %v3015 = vmul.f32 %v2791, %v2956
        %v3016 = vmul.f32 %v2792, %v2958
        %v3017 = vmul.f32 %v2793, %v2960
        %v3018 = vmul.f32 %v2794, %v2962
        %v3019 = vmul.f32 %v2795, %v2964
        %v3020 = vmul.f32 %v2796, %v2966
        %v3021 = vmul.f32 %v2797, %v2968
        %v3022 = vmul.f32 %v2798, %v2970
        %v3023 = vmul.f32 %v2799, %v2972
        %v3024 = vmul.f32 %v2800, %v2974
        %v3025 = vmul.f32 %v2801, %v2976
        %v3026 = vmul.f32 %v2802, %v2978
        %v3027 = vmul.f32 %v2803, %v2980
        %v3028 = vmul.f32 %v2804, %v2982
        %v3029 = vmul.f32 %v2805, %v2984
        %v3030 = vmul.f32 %v2806, %v2986
        %v3031 = vmul.f32 %v2807, %v2988
        %v3032 = vmul.f32 %v2808, %v2990
        %v3033 = vmul.f32 %v2809, %v2992
        %v3034 = vmul.f32 %v2810, %v2994
        %v3035 = vmul.f32 %v2811, %v2996
        %v3036 = vmul.f32 %v2812, %v2998
        %v3037 = vmul.f32 %v2813, %v3000
        %v3038 = vmul.f32 %v2814, %v3002
        %v3039 = vmul.f32 %v2815, %v3004
        %v3040 = vmul.f32 %v2816, %v3006
        %v3041 = vmul.f32 %v2817, %v3008
        %v3042 = vmul.f32 %v2818, %v3010
        %3043 = vst.msk [vmem:[%s279] sm:$0xff] %vm2515, %v3011
        %3044 = vst.msk [vmem:[%s279 + $0x8] sm:$0xff] %vm2515, %v3012
        %3045 = vst.msk [vmem:[%s279 + $0x10] sm:$0xff] %vm2515, %v3013
        %3046 = vst.msk [vmem:[%s279 + $0x18] sm:$0xff] %vm2515, %v3014
        %3047 = vst.msk [vmem:[%s279 + $0x20] sm:$0xff] %vm2515, %v3015
        %3048 = vst.msk [vmem:[%s279 + $0x28] sm:$0xff] %vm2515, %v3016
        %3049 = vst.msk [vmem:[%s279 + $0x30] sm:$0xff] %vm2515, %v3017
        %3050 = vst.msk [vmem:[%s279 + $0x38] sm:$0xff] %vm2515, %v3018
        %3051 = vst.msk [vmem:[%s279 + $0x40] sm:$0xff] %vm2515, %v3019
        %3052 = vst.msk [vmem:[%s279 + $0x48] sm:$0xff] %vm2515, %v3020
        %3053 = vst.msk [vmem:[%s279 + $0x50] sm:$0xff] %vm2515, %v3021
        %3054 = vst.msk [vmem:[%s279 + $0x58] sm:$0xff] %vm2515, %v3022
        %3055 = vst.msk [vmem:[%s279 + $0x60] sm:$0xff] %vm2515, %v3023
        %3056 = vst.msk [vmem:[%s279 + $0x68] sm:$0xff] %vm2515, %v3024
        %3057 = vst.msk [vmem:[%s279 + $0x70] sm:$0xff] %vm2515, %v3025
        %3058 = vst.msk [vmem:[%s279 + $0x78] sm:$0xff] %vm2515, %v3026
        %3059 = vst.msk [vmem:[%s279 + $0x80] sm:$0xff] %vm2515, %v3027
        %3060 = vst.msk [vmem:[%s279 + $0x88] sm:$0xff] %vm2515, %v3028
        %3061 = vst.msk [vmem:[%s279 + $0x90] sm:$0xff] %vm2515, %v3029
        %3062 = vst.msk [vmem:[%s279 + $0x98] sm:$0xff] %vm2515, %v3030
        %3063 = vst.msk [vmem:[%s279 + $0xa0] sm:$0xff] %vm2515, %v3031
        %3064 = vst.msk [vmem:[%s279 + $0xa8] sm:$0xff] %vm2515, %v3032
        %3065 = vst.msk [vmem:[%s279 + $0xb0] sm:$0xff] %vm2515, %v3033
        %3066 = vst.msk [vmem:[%s279 + $0xb8] sm:$0xff] %vm2515, %v3034
        %3067 = vst.msk [vmem:[%s279 + $0xc0] sm:$0xff] %vm2515, %v3035
        %3068 = vst.msk [vmem:[%s279 + $0xc8] sm:$0xff] %vm2515, %v3036
        %3069 = vst.msk [vmem:[%s279 + $0xd0] sm:$0xff] %vm2515, %v3037
        %3070 = vst.msk [vmem:[%s279 + $0xd8] sm:$0xff] %vm2515, %v3038
        %3071 = vst.msk [vmem:[%s279 + $0xe0] sm:$0xff] %vm2515, %v3039
        %3072 = vst.msk [vmem:[%s279 + $0xe8] sm:$0xff] %vm2515, %v3040
        %3073 = vst.msk [vmem:[%s279 + $0xf0] sm:$0xff] %vm2515, %v3041
        %3074 = vst.msk [vmem:[%s279 + $0xf8] sm:$0xff] %vm2515, %v3042
        %s3075 = sand.u32 %s171, 1
        %s3076 = scalar_lea.sflag [#allocation3], %s3075
        %s3077 = sand.u32 %s171, 1
        %s3078 = smul.addr %s3077, 256
        %s3079 = scalar_lea.vmem [#allocation2], %s3078
        // Predicated region
        $region41: #{gated_conv2d.1} parent=39 // pred_check
          %p3080 = pneg %p181
        $region42: #{gated_conv2d.1} parent=39 // pred_check_branch
          %3082 = sbr.rel (%p3080) target = $region44
        $region43: #{gated_conv2d.1} parent=39 // pred_region
          %s3084 = ssub.s32 4096, 4096
          %3085 = vsyncadd %s3076, %s3084
          %s3086 = smul.addr %s23, 32
          %s3087 = sadd.s32 %s24, %s3086
          %s3088 = smul.addr %s3087, 128
          %s3089 = scalar_lea.hbm %s5, %s3088
          %s3090 = sshll.u32 %s3079, 4
          %s3091 = int_to_ptr.vmem [resolvable:$true] %s3090
          %3096 = dma.vmem_to_hbm [thread:$0]  %s3091, 4096, %s3089, %s3076, 128, 128, 8
        $region44: #{gated_conv2d.1} parent=39 // pred_fallthru
          _
      $region40: #{gated_conv2d.1} parent=5 // pred_fallthru
        _
      %p3097 = scmp.le.s32.totalorder 2, %s14
      // Predicated region
      $region45: #{gated_conv2d.1} parent=5 // pred_check
        %p3098 = pneg %p3097
      $region46: #{gated_conv2d.1} parent=5 // pred_check_branch
        %3100 = sbr.rel (%p3098) target = $region48
      $region47: #{gated_conv2d.1} parent=5 // pred_region
        %s3101 = ssub.s32 %s14, 2
        // Predicated region
        $region49: #{gated_conv2d.1} parent=47 // pred_check
          %p3102 = pneg %p187
        $region50: #{gated_conv2d.1} parent=47 // pred_check_branch
          %3104 = sbr.rel (%p3102) target = $region52
        $region51: #{gated_conv2d.1} parent=47 // pred_region
          %s3105 = sand.u32 %s172, 1
          %s3106 = scalar_lea.sflag [#allocation3], %s3105
          %s3107 = sand.u32 %s172, 1
          %s3108 = smul.addr %s3107, 256
          %s3109 = scalar_lea.vmem [#allocation2], %s3108
          %3110 = dma.done %s3106, 4096
        $region52: #{gated_conv2d.1} parent=47 // pred_fallthru
          _
      $region48: #{gated_conv2d.1} parent=5 // pred_fallthru
        _
    $region6: #{gated_conv2d.1} parent=1 // loop_footer
      %s18 = sadd.s32 1, %s14
    $region7: #{gated_conv2d.1} parent=1 // loop_footer_branch
      %13 = sbr.rel target = $region3
    $region8: #{gated_conv2d.1} parent=1 // loop_exit
      _
    %3111 = vsyncpa [#allocation3], 1
    %s3112 = scalar_lea.sflag [#allocation3], 1
    %3113 = vsyncpa %s3112, 1

</llo_original>
